<compile_context>
chip_gen: v6e
topology: v6e:2x2x1
jax: 0.10.0
libtpu: 0.0.40
codegen_flags: <defaults>
</compile_context>

<pallas_src>
import functools

import jax
import jax.numpy as jnp
from jax.experimental import pallas as pl
from jax.experimental.pallas import tpu as pltpu

_INV_SQRT2 = 0.7071067811865476


def nonlocal_head_kernel(x_ref, wqkv_ref, bqkv_ref, gamma_ref,
                         wp_ref, wr_ref, bpr_ref, pooled_ref):
    Bt, N, C = x_ref.shape
    Clp = (wqkv_ref.shape[1] - C) // 2          # lane-padded q/k latent width

    x3 = x_ref[...]                              # (Bt, N, C) bf16
    x2 = x3.reshape(Bt * N, C)                   # stacked pixels: M = Bt*N

    # ---- Self_Attn_FM: fused q|k|v 1x1 conv as ONE bf16 MXU matmul (f32 acc) ----
    qkv = jnp.dot(x2, wqkv_ref[...],
                  preferred_element_type=jnp.float32) + bqkv_ref[...]
    # 128-aligned lane slices -> free views.
    q = qkv[:, :Clp].reshape(Bt, N, Clp).astype(jnp.bfloat16)
    k = qkv[:, Clp:2 * Clp].reshape(Bt, N, Clp).astype(jnp.bfloat16)
    v = qkv[:, 2 * Clp:].reshape(Bt, N, C).astype(jnp.bfloat16)

    # energy[b, i, j] = <q_i, k_j>  (== torch.bmm(Q^T, K) per image);
    # zero-padded latent channels contribute 0, so results are unchanged.
    energy = jnp.einsum("bic,bjc->bij", q, k, preferred_element_type=jnp.float32)
    m = jnp.max(energy, axis=-1, keepdims=True)
    p = jnp.exp(energy - m)                      # softmax(dim=-1) in f32
    att = p * pl.reciprocal(jnp.sum(p, axis=-1, keepdims=True), approx=True)

    # out[b, i, c] = sum_j att[b, i, j] * v[b, j, c]  (== torch.bmm(V, att^T))
    attn_out = jnp.einsum("bij,bjc->bic", att.astype(jnp.bfloat16), v,
                          preferred_element_type=jnp.float32).reshape(Bt * N, C)

    feat = gamma_ref[...] * attn_out + x2.astype(jnp.float32)   # gamma*out + res
    a = jnp.maximum(feat, 0.0).astype(jnp.bfloat16)             # F.relu

    # ---- proj_block(relu) + resc_block(res) -> relu ----
    # (2^-0.5 scale, eval-BN and the classifier are folded in the wrapper.)
    proj = jnp.dot(a, wp_ref[...], preferred_element_type=jnp.float32)
    resc = jnp.dot(x2, wr_ref[...], preferred_element_type=jnp.float32)
    y = jnp.maximum(proj + resc + bpr_ref[...], 0.0)             # (Bt*N, Cp)

    # ---- AdaptiveAvgPool2d((1,1)): per-image mean over the N pixels ----
    pooled = jnp.sum(y.reshape(Bt, N, -1), axis=1) * (1.0 / N)   # (Bt, Cp)
    pooled_ref[...] = pooled.astype(pooled_ref.dtype)


def _is_v7x():
    """Chip heuristic: only v7x has 2 TensorCores sharing the parallel grid."""
    try:
        kind = (jax.devices()[0].device_kind or "").lower()
    except Exception:
        return False
    return "v7" in kind


@functools.lru_cache(maxsize=None)
def _single_buffer_weights_supported():
    """One-time static probe: does this build accept pipeline_mode=pl.Buffered(1)?

    Probes a tiny throwaway kernel at lowering/compile time; the real kernel is
    never wrapped in try/except and no block_until_ready sits in the hot path.
    """
    if not hasattr(pl, "Buffered"):
        return False
    try:
        def k(a_ref, w_ref, o_ref):
            o_ref[...] = a_ref[...] + w_ref[...]

        fn = pl.pallas_call(
            k,
            out_shape=jax.ShapeDtypeStruct((8, 128), jnp.float32),
            grid=(1,),
            in_specs=[pl.BlockSpec((8, 128), lambda i: (0, 0)),
                      pl.BlockSpec((8, 128), lambda i: (0, 0),
                                   pipeline_mode=pl.Buffered(1))],
            out_specs=pl.BlockSpec((8, 128), lambda i: (0, 0)),
        )
        aval = jax.ShapeDtypeStruct((8, 128), jnp.float32)
        jax.jit(fn).lower(aval, aval).compile()
        return True
    except Exception:
        return False


def nonlocal_head(x_nchw, params, *, block_b=8):
    """NonLocalModel.forward from the backbone feature map `res` onward."""
    B, C, H, W = x_nchw.shape
    N = H * W

    # bf16 BEFORE the transpose/pad: halves wrapper-side HBM traffic; values
    # are unchanged by transpose/pad. bf16 is the MXU operand dtype anyway.
    x = x_nchw.astype(jnp.bfloat16)
    x = jnp.transpose(x.reshape(B, C, N), (0, 2, 1))        # (B, N, C)

    # Batch tiling. Only pad the tile count to even on v7x (2 TCs share the
    # "parallel" axis); on single-TC v5e/v6e an extra tile is pure serial waste.
    num_tiles = -(-B // block_b)
    if _is_v7x() and num_tiles > 1 and num_tiles % 2:
        num_tiles += 1
    B_pad = num_tiles * block_b
    if B_pad != B:
        x = jnp.concatenate([x, jnp.zeros((B_pad - B, N, C), x.dtype)], axis=0)

    # ---- Fuse q|k|v weights into one lane-dense bf16 operand ----
    # Zero-pad the query/key latent channels to a multiple of 128 lanes; zero
    # columns contribute 0 to `energy`, so results are unchanged.
    Cl = params["wq_t"].shape[1]
    Clp = -(-Cl // 128) * 128

    def pad_lanes(w, b):
        if Clp != Cl:
            w = jnp.pad(w, ((0, 0), (0, Clp - Cl)))
            b = jnp.pad(b, (0, Clp - Cl))
        return w, b

    wq, bq = pad_lanes(params["wq_t"], params["bq"])
    wk, bk = pad_lanes(params["wk_t"], params["bk"])
    w_qkv = jnp.concatenate([wq, wk, params["wv_t"]], axis=1).astype(jnp.bfloat16)
    b_qkv = jnp.concatenate([bq, bk, params["bv"]])[None, :].astype(jnp.float32)

    wp = params["wp_t"].astype(jnp.bfloat16)
    wr = params["wr_t"].astype(jnp.bfloat16)
    bpr = (params["bp"] + params["br"])[None, :].astype(jnp.float32)
    gamma = params["gamma"].reshape(1, 1).astype(jnp.float32)
    Cp = wp.shape[1]

    weights = [w_qkv, b_qkv, gamma, wp, wr, bpr]

    # Grid-invariant weights: single-buffer when supported (halves their VMEM
    # footprint; matters at real densenet sizes on v5e's 16 MiB scoped default
    # and v7x's 64 MiB physical VMEM). Otherwise fall back to the default
    # double-buffered pipeline (semantics identical).
    if _single_buffer_weights_supported():
        def wspec(a):
            return pl.BlockSpec(a.shape, lambda t: (0,) * a.ndim,
                                pipeline_mode=pl.Buffered(1))
    else:
        def wspec(a):
            return pl.BlockSpec(a.shape, lambda t: (0,) * a.ndim)

    in_specs = ([pl.BlockSpec((block_b, N, C), lambda t: (t, 0, 0))]
                + [wspec(w) for w in weights])
    # (block_b, Cp) output tile is (8, 128)-aligned -> dense, unmasked stores.
    out_specs = pl.BlockSpec((block_b, Cp), lambda t: (t, 0))

    # Advisory cost estimate so XLA schedules surrounding wrapper ops around
    # the custom call.
    flops_per_tile = (2 * block_b * N * C * (2 * Clp + C)    # fused qkv matmul
                      + 2 * block_b * N * N * Clp            # energy
                      + 2 * block_b * N * N * C              # att @ v
                      + 2 * 2 * block_b * N * C * Cp)        # proj + resc
    weight_bytes = int((w_qkv.size + wp.size + wr.size) * 2
                       + (b_qkv.size + bpr.size + gamma.size) * 4)
    cost = pl.CostEstimate(
        flops=int(num_tiles * flops_per_tile),
        transcendentals=int(num_tiles * block_b * N * N),
        bytes_accessed=int(num_tiles * (block_b * N * C * 2 + block_b * Cp * 4)
                           + weight_bytes),
    )

    pooled = pl.pallas_call(
        nonlocal_head_kernel,
        out_shape=jax.ShapeDtypeStruct((B_pad, Cp), jnp.float32),
        grid_spec=pltpu.PrefetchScalarGridSpec(
            num_scalar_prefetch=0,
            grid=(num_tiles,),
            in_specs=in_specs,
            out_specs=out_specs,
        ),
        compiler_params=pltpu.CompilerParams(
            dimension_semantics=("parallel",),
            vmem_limit_bytes=32 * 1024 * 1024,   # v5e default is only 16 MiB
        ),
        cost_estimate=cost,
    )(x, *weights)

    pooled = pooled[:B]                                      # drop batch padding

    # ---- Fold 2^-0.5, eval-BN and the classifier into one (B, Cp) matmul ----
    # relu((p+r)*c) = c*relu(p+r) for c>0, and the per-channel BN affine
    # commutes with the mean pool, so this is exact algebra:
    #   logits = pooled_raw @ (diag(c*bn_scale) @ wc) + bn_shift @ wc + bc
    eps = 1e-5
    bn_scale = params["bn_w"] / jnp.sqrt(params["bn_var"] + eps)
    bn_shift = params["bn_b"] - params["bn_mean"] * bn_scale
    scale = _INV_SQRT2 * bn_scale                            # (Cp,)
    wc_fold = scale[:, None] * params["wc_t"]                # (Cp, NC)
    bc_fold = bn_shift @ params["wc_t"] + params["bc"]       # (NC,)
    return jnp.dot(pooled, wc_fold) + bc_fold[None, :]


def init_params(key, C, latent_dim, num_classes):
    Cl = C // latent_dim   # query/key latent channels
    Cp = C // 2            # proj/resc output channels (1024 -> 512 in original)
    ks = jax.random.split(key, 14)
    s = 0.05
    return {
        # conv weights stored pre-transposed to (in, out) so the kernel does x @ W
        "wq_t": s * jax.random.normal(ks[0], (C, Cl), jnp.float32),
        "bq":   s * jax.random.normal(ks[1], (Cl,), jnp.float32),
        "wk_t": s * jax.random.normal(ks[2], (C, Cl), jnp.float32),
        "bk":   s * jax.random.normal(ks[3], (Cl,), jnp.float32),
        "wv_t": s * jax.random.normal(ks[4], (C, C), jnp.float32),
        "bv":   s * jax.random.normal(ks[5], (C,), jnp.float32),
        # nn.Parameter(torch.zeros(1)) in __init__; nonzero here to exercise the path
        "gamma": jnp.array([0.5], jnp.float32),
        "wp_t": s * jax.random.normal(ks[6], (C, Cp), jnp.float32),
        "bp":   s * jax.random.normal(ks[7], (Cp,), jnp.float32),
        "wr_t": s * jax.random.normal(ks[8], (C, Cp), jnp.float32),
        "br":   s * jax.random.normal(ks[9], (Cp,), jnp.float32),
        "bn_w":    1.0 + 0.1 * jax.random.normal(ks[10], (Cp,), jnp.float32),
        "bn_b":    0.1 * jax.random.normal(ks[11], (Cp,), jnp.float32),
        "bn_mean": 0.1 * jax.random.normal(ks[12], (Cp,), jnp.float32),
        "bn_var":  jnp.full((Cp,), 1.0, jnp.float32),
        "wc_t": s * jax.random.normal(ks[13], (Cp, num_classes), jnp.float32),
        "bc":   jnp.zeros((num_classes,), jnp.float32),
    }


if __name__ == "__main__":
    # Small shapes consistent with the module: backbone feature map (B, C, H, W),
    # latent_dim=8 (Cl=C//8, lane-padded to 128), proj/resc halve channels,
    # classifier -> NUM_CLASSES. block_b=8 stacks 8 images per grid step
    # (M = Bt*N = 512 for the 1x1 convs, and an (8, 128)-aligned output tile);
    # B=16 exercises a 2-step grid.
    B, C, H, W = 16, 256, 8, 8
    NUM_CLASSES = 10
    LATENT_DIM = 8

    key = jax.random.PRNGKey(0)
    k_x, k_p = jax.random.split(key)
    x = jax.random.normal(k_x, (B, C, H, W), jnp.float32)
    params = init_params(k_p, C, LATENT_DIM, NUM_CLASSES)

    logits = nonlocal_head(x, params, block_b=8)
    logits = jax.block_until_ready(logits)
    assert logits.shape == (B, NUM_CLASSES)
    assert bool(jnp.all(jnp.isfinite(logits)))
    print("KERNEL_OK")
</pallas_src>

<mosaic_0001>
module attributes {stable_mosaic.version = 11 : i64} {
  func.func @nonlocal_head_kernel(%arg0: i32, %arg1: memref<8x64x256xbf16, #tpu.memory_space<vmem>>, %arg2: memref<256x512xbf16, #tpu.memory_space<vmem>>, %arg3: memref<1x512xf32, #tpu.memory_space<vmem>>, %arg4: memref<1x1xf32, #tpu.memory_space<vmem>>, %arg5: memref<256x128xbf16, #tpu.memory_space<vmem>>, %arg6: memref<256x128xbf16, #tpu.memory_space<vmem>>, %arg7: memref<1x128xf32, #tpu.memory_space<vmem>>, %arg8: memref<8x128xf32, #tpu.memory_space<vmem>>) attributes {dimension_semantics = [#tpu.dimension_semantics<parallel>], iteration_bounds = array<i64: 2>, scalar_prefetch = 0 : i64, scratch_operands = 0 : i64, tpu.core_type = #tpu.core_type<tc>, window_params = [{transform_indices = @transform_0, window_bounds = array<i64: 8, 64, 256>}, {pipeline_mode = #tpu.pipeline_mode<synchronous>, transform_indices = @transform_1, window_bounds = array<i64: 256, 512>}, {pipeline_mode = #tpu.pipeline_mode<synchronous>, transform_indices = @transform_2, window_bounds = array<i64: 1, 512>}, {pipeline_mode = #tpu.pipeline_mode<synchronous>, transform_indices = @transform_3, window_bounds = array<i64: 1, 1>}, {pipeline_mode = #tpu.pipeline_mode<synchronous>, transform_indices = @transform_4, window_bounds = array<i64: 256, 128>}, {pipeline_mode = #tpu.pipeline_mode<synchronous>, transform_indices = @transform_5, window_bounds = array<i64: 256, 128>}, {pipeline_mode = #tpu.pipeline_mode<synchronous>, transform_indices = @transform_6, window_bounds = array<i64: 1, 128>}, {transform_indices = @transform_7, window_bounds = array<i64: 8, 128>}]} {
    %c0 = arith.constant 0 : index
    %c0_0 = arith.constant 0 : index
    %c0_1 = arith.constant 0 : index
    %0 = vector.load %arg1[%c0, %c0_0, %c0_1] : memref<8x64x256xbf16, #tpu.memory_space<vmem>>, vector<8x64x256xbf16>
    %1 = vector.shape_cast %0 : vector<8x64x256xbf16> to vector<512x256xbf16>
    %c0_2 = arith.constant 0 : index
    %c0_3 = arith.constant 0 : index
    %2 = vector.load %arg2[%c0_2, %c0_3] : memref<256x512xbf16, #tpu.memory_space<vmem>>, vector<256x512xbf16>
    %cst = arith.constant dense<0.000000e+00> : vector<512x512xf32>
    %3 = tpu.matmul %1, %2, %cst {dimension_numbers = #tpu.dot_dimension_numbers<[1], [0], [0], [1], [0, 0, 1, 1], [], []>} : vector<512x256xbf16>, vector<256x512xbf16>, vector<512x512xf32> -> vector<512x512xf32>
    %c0_4 = arith.constant 0 : index
    %c0_5 = arith.constant 0 : index
    %4 = vector.load %arg3[%c0_4, %c0_5] : memref<1x512xf32, #tpu.memory_space<vmem>>, vector<1x512xf32>
    %5 = vector.broadcast %4 : vector<1x512xf32> to vector<512x512xf32>
    %6 = arith.addf %3, %5 : vector<512x512xf32>
    %7 = vector.extract_strided_slice %6 {offsets = [0, 0], sizes = [512, 128], strides = [1, 1]} : vector<512x512xf32> to vector<512x128xf32>
    %8 = vector.shape_cast %7 : vector<512x128xf32> to vector<8x64x128xf32>
    %9 = arith.truncf %8 : vector<8x64x128xf32> to vector<8x64x128xbf16>
    %10 = vector.extract_strided_slice %6 {offsets = [0, 128], sizes = [512, 128], strides = [1, 1]} : vector<512x512xf32> to vector<512x128xf32>
    %11 = vector.shape_cast %10 : vector<512x128xf32> to vector<8x64x128xf32>
    %12 = arith.truncf %11 : vector<8x64x128xf32> to vector<8x64x128xbf16>
    %13 = vector.extract_strided_slice %6 {offsets = [0, 256], sizes = [512, 256], strides = [1, 1]} : vector<512x512xf32> to vector<512x256xf32>
    %14 = vector.shape_cast %13 : vector<512x256xf32> to vector<8x64x256xf32>
    %15 = arith.truncf %14 : vector<8x64x256xf32> to vector<8x64x256xbf16>
    "tpu.trace_start"() <{level = 10 : i32, message = "bic,bjc->bij"}> : () -> ()
    %cst_6 = arith.constant dense<0.000000e+00> : vector<8x64x64xf32>
    %16 = tpu.matmul %9, %12, %cst_6 {dimension_numbers = #tpu.dot_dimension_numbers<[2], [2], [1], [1], [0, 0, 0, 1, 1, 1], [0], [0]>} : vector<8x64x128xbf16>, vector<8x64x128xbf16>, vector<8x64x64xf32> -> vector<8x64x64xf32>
    "tpu.trace_stop"() : () -> ()
    %cst_7 = arith.constant dense<0xFF800000> : vector<8x64xf32>
    %17 = vector.multi_reduction <maximumf>, %16, %cst_7 [2] : vector<8x64x64xf32> to vector<8x64xf32>
    %18 = vector.shape_cast %17 : vector<8x64xf32> to vector<8x64x1xf32>
    %19 = vector.broadcast %18 : vector<8x64x1xf32> to vector<8x64x64xf32>
    %20 = arith.subf %16, %19 : vector<8x64x64xf32>
    %21 = math.exp %20 : vector<8x64x64xf32>
    %cst_8 = arith.constant dense<0.000000e+00> : vector<8x64xf32>
    %22 = vector.multi_reduction <add>, %21, %cst_8 [2] : vector<8x64x64xf32> to vector<8x64xf32>
    %23 = vector.shape_cast %22 : vector<8x64xf32> to vector<8x64x1xf32>
    %24 = tpu.reciprocal %23 {approx = true} : vector<8x64x1xf32> -> vector<8x64x1xf32>
    %25 = vector.broadcast %24 : vector<8x64x1xf32> to vector<8x64x64xf32>
    %26 = arith.mulf %21, %25 : vector<8x64x64xf32>
    %27 = arith.truncf %26 : vector<8x64x64xf32> to vector<8x64x64xbf16>
    "tpu.trace_start"() <{level = 10 : i32, message = "bij,bjc->bic"}> : () -> ()
    %cst_9 = arith.constant dense<0.000000e+00> : vector<8x64x256xf32>
    %28 = tpu.matmul %27, %15, %cst_9 {dimension_numbers = #tpu.dot_dimension_numbers<[2], [1], [1], [2], [0, 0, 0, 1, 1, 2], [0], [0]>} : vector<8x64x64xbf16>, vector<8x64x256xbf16>, vector<8x64x256xf32> -> vector<8x64x256xf32>
    "tpu.trace_stop"() : () -> ()
    %29 = vector.shape_cast %28 : vector<8x64x256xf32> to vector<512x256xf32>
    %c0_10 = arith.constant 0 : index
    %c0_11 = arith.constant 0 : index
    %30 = vector.load %arg4[%c0_10, %c0_11] : memref<1x1xf32, #tpu.memory_space<vmem>>, vector<1x1xf32>
    %31 = vector.broadcast %30 : vector<1x1xf32> to vector<512x256xf32>
    %32 = arith.mulf %31, %29 : vector<512x256xf32>
    %33 = arith.extf %1 : vector<512x256xbf16> to vector<512x256xf32>
    %34 = arith.addf %32, %33 : vector<512x256xf32>
    %cst_12 = arith.constant 0.000000e+00 : f32
    %35 = vector.broadcast %cst_12 : f32 to vector<512x256xf32>
    %36 = arith.maximumf %34, %35 : vector<512x256xf32>
    %37 = arith.truncf %36 : vector<512x256xf32> to vector<512x256xbf16>
    %c0_13 = arith.constant 0 : index
    %c0_14 = arith.constant 0 : index
    %38 = vector.load %arg5[%c0_13, %c0_14] : memref<256x128xbf16, #tpu.memory_space<vmem>>, vector<256x128xbf16>
    %cst_15 = arith.constant dense<0.000000e+00> : vector<512x128xf32>
    %39 = tpu.matmul %37, %38, %cst_15 {dimension_numbers = #tpu.dot_dimension_numbers<[1], [0], [0], [1], [0, 0, 1, 1], [], []>} : vector<512x256xbf16>, vector<256x128xbf16>, vector<512x128xf32> -> vector<512x128xf32>
    %c0_16 = arith.constant 0 : index
    %c0_17 = arith.constant 0 : index
    %40 = vector.load %arg6[%c0_16, %c0_17] : memref<256x128xbf16, #tpu.memory_space<vmem>>, vector<256x128xbf16>
    %cst_18 = arith.constant dense<0.000000e+00> : vector<512x128xf32>
    %41 = tpu.matmul %1, %40, %cst_18 {dimension_numbers = #tpu.dot_dimension_numbers<[1], [0], [0], [1], [0, 0, 1, 1], [], []>} : vector<512x256xbf16>, vector<256x128xbf16>, vector<512x128xf32> -> vector<512x128xf32>
    %42 = arith.addf %39, %41 : vector<512x128xf32>
    %c0_19 = arith.constant 0 : index
    %c0_20 = arith.constant 0 : index
    %43 = vector.load %arg7[%c0_19, %c0_20] : memref<1x128xf32, #tpu.memory_space<vmem>>, vector<1x128xf32>
    %44 = vector.broadcast %43 : vector<1x128xf32> to vector<512x128xf32>
    %45 = arith.addf %42, %44 : vector<512x128xf32>
    %cst_21 = arith.constant 0.000000e+00 : f32
    %46 = vector.broadcast %cst_21 : f32 to vector<512x128xf32>
    %47 = arith.maximumf %45, %46 : vector<512x128xf32>
    %48 = vector.shape_cast %47 : vector<512x128xf32> to vector<8x64x128xf32>
    %cst_22 = arith.constant dense<0.000000e+00> : vector<8x128xf32>
    %49 = vector.multi_reduction <add>, %48, %cst_22 [1] : vector<8x64x128xf32> to vector<8x128xf32>
    %cst_23 = arith.constant 1.562500e-02 : f32
    %50 = vector.broadcast %cst_23 : f32 to vector<8x128xf32>
    %51 = arith.mulf %49, %50 : vector<8x128xf32>
    %c0_24 = arith.constant 0 : index
    %c0_25 = arith.constant 0 : index
    %52 = vector.load %arg8[%c0_24, %c0_25] : memref<8x128xf32, #tpu.memory_space<vmem>>, vector<8x128xf32>
    tpu.vector_store %arg8[%c0_24, %c0_25], %51 {strides = array<i32>} : memref<8x128xf32, #tpu.memory_space<vmem>>, vector<8x128xf32>,
    return
  }
  func.func @transform_0(%arg0: i32) -> (i32, i32, i32) {
    %c0_i32 = arith.constant 0 : i32
    %c0_i32_0 = arith.constant 0 : i32
    %c0_i32_1 = arith.constant 0 : i32
    return %arg0, %c0_i32, %c0_i32_0 : i32, i32, i32
  }
  func.func @transform_1(%arg0: i32) -> (i32, i32) {
    %c0_i32 = arith.constant 0 : i32
    %c0_i32_0 = arith.constant 0 : i32
    %c0_i32_1 = arith.constant 0 : i32
    return %c0_i32, %c0_i32_0 : i32, i32
  }
  func.func @transform_2(%arg0: i32) -> (i32, i32) {
    %c0_i32 = arith.constant 0 : i32
    %c0_i32_0 = arith.constant 0 : i32
    %c0_i32_1 = arith.constant 0 : i32
    return %c0_i32, %c0_i32_0 : i32, i32
  }
  func.func @transform_3(%arg0: i32) -> (i32, i32) {
    %c0_i32 = arith.constant 0 : i32
    %c0_i32_0 = arith.constant 0 : i32
    %c0_i32_1 = arith.constant 0 : i32
    return %c0_i32, %c0_i32_0 : i32, i32
  }
  func.func @transform_4(%arg0: i32) -> (i32, i32) {
    %c0_i32 = arith.constant 0 : i32
    %c0_i32_0 = arith.constant 0 : i32
    %c0_i32_1 = arith.constant 0 : i32
    return %c0_i32, %c0_i32_0 : i32, i32
  }
  func.func @transform_5(%arg0: i32) -> (i32, i32) {
    %c0_i32 = arith.constant 0 : i32
    %c0_i32_0 = arith.constant 0 : i32
    %c0_i32_1 = arith.constant 0 : i32
    return %c0_i32, %c0_i32_0 : i32, i32
  }
  func.func @transform_6(%arg0: i32) -> (i32, i32) {
    %c0_i32 = arith.constant 0 : i32
    %c0_i32_0 = arith.constant 0 : i32
    %c0_i32_1 = arith.constant 0 : i32
    return %c0_i32, %c0_i32_0 : i32, i32
  }
  func.func @transform_7(%arg0: i32) -> (i32, i32) {
    %c0_i32 = arith.constant 0 : i32
    %c0_i32_0 = arith.constant 0 : i32
    return %arg0, %c0_i32 : i32, i32
  }
}

</mosaic_0001>

<llo_original>
// kernel: tpu_custom_call.1
$region0: #{tpu_custom_call.1}
  #allocation0 [shape = 'u32[]', space=smem, size = 0x4, offset = 0x4, fixed_abs, tag = 'smem constant byte address 0x4 - core index']
  #allocation1 [shape = 'u32[144,128]{1,0:T(1,128)}', space=vmem, size = 0x12000, scoped, tag = 'internal scratch']
  #allocation2 [shape = 'f32[1,1]{1,0:T(1,128)S(1)}', space=vmem, size = 0x200, scoped, tag = 'scoped memory for tpu_custom_call.1']
  %s0 = inlined_call_operand.hbm [shape: bf16[16,64,256], index: 0, kind: input, shape index: {}]
  %s1 = inlined_call_operand.hbm [shape: bf16[256,512], index: 1, kind: input, shape index: {}]
  %s2 = inlined_call_operand.vmem [shape: f32[1,512], index: 2, kind: input, shape index: {}]
  %s3 = inlined_call_operand.<no memory space> [shape: f32[1,1], index: 3, kind: input, shape index: {}]
  %s4 = inlined_call_operand.hbm [shape: bf16[256,128], index: 4, kind: input, shape index: {}]
  %s5 = inlined_call_operand.hbm [shape: bf16[256,128], index: 5, kind: input, shape index: {}]
  %s6 = inlined_call_operand.vmem [shape: f32[1,128], index: 6, kind: input, shape index: {}]
  %s7 = inlined_call_operand.hbm [shape: f32[16,128], index: 7, kind: output, shape index: {}]
  %s8 = sld [smem:[#allocation0]]
  $region77: #{tpu_custom_call.1} parent=0
    _
  %s10 = ssub.s32 1, %s8
  %s11 = scalar_select 0, %s10, %s8
  %v12 = vstv %s3
  %13 = vst [vmem:[#allocation2] sm:$0x1] %v12
  $region1: #{tpu_custom_call.1} parent=0
    #allocation3 [shape = 'u8[524288]{0}', space=vmem, size = 0x80000, scoped, tag = 'input window, operand 0']
    #allocation4 [shape = 's32[2]{0}', space=sflag, size = 0x8, scoped, tag = 'scoped memory for tpu_custom_call.1']
    #allocation5 [shape = 's32[2]{0}', space=sflag, size = 0x8, scoped, tag = 'scoped memory for tpu_custom_call.1']
    #allocation6 [shape = 'u8[262144]{0}', space=vmem, size = 0x40000, scoped, tag = 'input window, operand 1, single buffered']
    #allocation7 [shape = 's32[1]{0}', space=sflag, size = 0x4, scoped, tag = 'scoped memory for tpu_custom_call.1']
    #allocation8 [shape = 'u8[65536]{0}', space=vmem, size = 0x10000, scoped, tag = 'input window, operand 4, single buffered']
    #allocation9 [shape = 'u8[65536]{0}', space=vmem, size = 0x10000, scoped, tag = 'input window, operand 5, single buffered']
    #allocation10 [shape = 's32[1]{0}', space=sflag, size = 0x4, scoped, tag = 'scoped memory for tpu_custom_call.1']
    #allocation11 [shape = 'u8[8192]{0}', space=vmem, size = 0x2000, scoped, tag = 'output window, operand 0']
    %14 = vsyncpa [#allocation4], 0
    %s15 = scalar_lea.sflag [#allocation4], 1
    %16 = vsyncpa %s15, 0
    %17 = vsyncpa [#allocation7], 0
    %18 = vsyncpa [#allocation10], 0
    %19 = vsyncpa [#allocation5], 0
    %s20 = scalar_lea.sflag [#allocation5], 1
    %21 = vsyncpa %s20, 0
    loop: start=0, step=1, limit=4
    $region2: #{tpu_custom_call.1} parent=1 // loop_pre_header
      _
    $region3: #{tpu_custom_call.1} parent=1 // loop_header
      %s23 = sphi 0, %s27
      %p24 = scmp.ge.s32.totalorder %s23, 4
      %s33 = sphi 0, %s35
      %s36 = sphi 0, %s33
      %s37 = sphi 0, %s36
      %s53 = sphi 0, %s37
      %s57 = sphi 0, %s57
      %s59 = sphi 0, %s57
      %s60 = sphi 0, %s59
      %s74 = sphi 0, %s60
      %s78 = sphi 0, %s78
      %s80 = sphi 0, %s78
      %s81 = sphi 0, %s80
      %s95 = sphi 0, %s81
      %s99 = sphi 0, %s99
      %s101 = sphi 0, %s99
      %s102 = sphi 0, %s101
      %s116 = sphi 0, %s102
      %s120 = sphi 0, %s120
      %s122 = sphi 0, %s120
      %s123 = sphi 0, %s122
      %s137 = sphi 0, %s123
      %s141 = sphi 0, %s141
      %s143 = sphi 0, %s141
      %s144 = sphi 0, %s143
      %s158 = sphi 0, %s144
      %s162 = sphi 0, %s162
      %s164 = sphi 0, %s162
      %s165 = sphi 0, %s164
      %s179 = sphi 0, %s165
      %s185 = sphi 0, %s187
      %s188 = sphi 0, %s185
      %s189 = sphi 0, %s188
      %s205 = sphi 0, %s189
    $region4: #{tpu_custom_call.1} parent=1 // loop_header_branch
      %26 = sbr.rel (%p24) target = $region8
    $region5: #{tpu_custom_call.1} parent=1 // loop_body
      %s28 = ssub.s32 %s23, 1
      %s29 = ssub.s32 %s23, 2
      %s30 = sadd.s32 %s23, 1
      %s31 = ssub.s32 %s23, %s30
      %p32 = scmp.eq.s32.totalorder %s31, 0
      %s34 = sadd.s32 %s33, 1
      %s35 = scalar_select %p32, %s33, %s34
      %p38 = pneg %p32
      %p39 = scmp.eq.s32.totalorder %s23, 1
      %p40 = por %p38, %p39
      %p41 = scmp.ne.s32.totalorder %s33, %s36
      %p42 = scmp.eq.s32.totalorder %s23, 0
      %p43 = por %p41, %p42
      %p44 = scmp.ne.s32.totalorder %s33, %s36
      %p45 = scmp.eq.s32.totalorder %s28, 1
      %p46 = por %p44, %p45
      %p47 = scmp.ne.s32.totalorder %s36, %s37
      %p48 = scmp.eq.s32.totalorder %s28, 0
      %p49 = por %p47, %p48
      %p50 = scmp.ne.s32.totalorder %s36, %s37
      %p51 = scmp.eq.s32.totalorder %s29, 1
      %p52 = por %p50, %p51
      %p54 = scmp.ne.s32.totalorder %s37, %s53
      %p55 = scmp.eq.s32.totalorder %s29, 0
      %p56 = por %p54, %p55
      %s58 = sadd.s32 %s57, 1
      %p61 = scmp.eq.s32.totalorder %s23, 1
      %p62 = scmp.ne.s32.totalorder %s57, %s59
      %p63 = scmp.eq.s32.totalorder %s23, 0
      %p64 = por %p62, %p63
      %p65 = scmp.ne.s32.totalorder %s57, %s59
      %p66 = scmp.eq.s32.totalorder %s28, 1
      %p67 = por %p65, %p66
      %p68 = scmp.ne.s32.totalorder %s59, %s60
      %p69 = scmp.eq.s32.totalorder %s28, 0
      %p70 = por %p68, %p69
      %p71 = scmp.ne.s32.totalorder %s59, %s60
      %p72 = scmp.eq.s32.totalorder %s29, 1
      %p73 = por %p71, %p72
      %p75 = scmp.ne.s32.totalorder %s60, %s74
      %p76 = scmp.eq.s32.totalorder %s29, 0
      %p77 = por %p75, %p76
      %s79 = sadd.s32 %s78, 1
      %p82 = scmp.eq.s32.totalorder %s23, 1
      %p83 = scmp.ne.s32.totalorder %s78, %s80
      %p84 = scmp.eq.s32.totalorder %s23, 0
      %p85 = por %p83, %p84
      %p86 = scmp.ne.s32.totalorder %s78, %s80
      %p87 = scmp.eq.s32.totalorder %s28, 1
      %p88 = por %p86, %p87
      %p89 = scmp.ne.s32.totalorder %s80, %s81
      %p90 = scmp.eq.s32.totalorder %s28, 0
      %p91 = por %p89, %p90
      %p92 = scmp.ne.s32.totalorder %s80, %s81
      %p93 = scmp.eq.s32.totalorder %s29, 1
      %p94 = por %p92, %p93
      %p96 = scmp.ne.s32.totalorder %s81, %s95
      %p97 = scmp.eq.s32.totalorder %s29, 0
      %p98 = por %p96, %p97
      %s100 = sadd.s32 %s99, 1
      %p103 = scmp.eq.s32.totalorder %s23, 1
      %p104 = scmp.ne.s32.totalorder %s99, %s101
      %p105 = scmp.eq.s32.totalorder %s23, 0
      %p106 = por %p104, %p105
      %p107 = scmp.ne.s32.totalorder %s99, %s101
      %p108 = scmp.eq.s32.totalorder %s28, 1
      %p109 = por %p107, %p108
      %p110 = scmp.ne.s32.totalorder %s101, %s102
      %p111 = scmp.eq.s32.totalorder %s28, 0
      %p112 = por %p110, %p111
      %p113 = scmp.ne.s32.totalorder %s101, %s102
      %p114 = scmp.eq.s32.totalorder %s29, 1
      %p115 = por %p113, %p114
      %p117 = scmp.ne.s32.totalorder %s102, %s116
      %p118 = scmp.eq.s32.totalorder %s29, 0
      %p119 = por %p117, %p118
      %s121 = sadd.s32 %s120, 1
      %p124 = scmp.eq.s32.totalorder %s23, 1
      %p125 = scmp.ne.s32.totalorder %s120, %s122
      %p126 = scmp.eq.s32.totalorder %s23, 0
      %p127 = por %p125, %p126
      %p128 = scmp.ne.s32.totalorder %s120, %s122
      %p129 = scmp.eq.s32.totalorder %s28, 1
      %p130 = por %p128, %p129
      %p131 = scmp.ne.s32.totalorder %s122, %s123
      %p132 = scmp.eq.s32.totalorder %s28, 0
      %p133 = por %p131, %p132
      %p134 = scmp.ne.s32.totalorder %s122, %s123
      %p135 = scmp.eq.s32.totalorder %s29, 1
      %p136 = por %p134, %p135
      %p138 = scmp.ne.s32.totalorder %s123, %s137
      %p139 = scmp.eq.s32.totalorder %s29, 0
      %p140 = por %p138, %p139
      %s142 = sadd.s32 %s141, 1
      %p145 = scmp.eq.s32.totalorder %s23, 1
      %p146 = scmp.ne.s32.totalorder %s141, %s143
      %p147 = scmp.eq.s32.totalorder %s23, 0
      %p148 = por %p146, %p147
      %p149 = scmp.ne.s32.totalorder %s141, %s143
      %p150 = scmp.eq.s32.totalorder %s28, 1
      %p151 = por %p149, %p150
      %p152 = scmp.ne.s32.totalorder %s143, %s144
      %p153 = scmp.eq.s32.totalorder %s28, 0
      %p154 = por %p152, %p153
      %p155 = scmp.ne.s32.totalorder %s143, %s144
      %p156 = scmp.eq.s32.totalorder %s29, 1
      %p157 = por %p155, %p156
      %p159 = scmp.ne.s32.totalorder %s144, %s158
      %p160 = scmp.eq.s32.totalorder %s29, 0
      %p161 = por %p159, %p160
      %s163 = sadd.s32 %s162, 1
      %p166 = scmp.eq.s32.totalorder %s23, 1
      %p167 = scmp.ne.s32.totalorder %s162, %s164
      %p168 = scmp.eq.s32.totalorder %s23, 0
      %p169 = por %p167, %p168
      %p170 = scmp.ne.s32.totalorder %s162, %s164
      %p171 = scmp.eq.s32.totalorder %s28, 1
      %p172 = por %p170, %p171
      %p173 = scmp.ne.s32.totalorder %s164, %s165
      %p174 = scmp.eq.s32.totalorder %s28, 0
      %p175 = por %p173, %p174
      %p176 = scmp.ne.s32.totalorder %s164, %s165
      %p177 = scmp.eq.s32.totalorder %s29, 1
      %p178 = por %p176, %p177
      %p180 = scmp.ne.s32.totalorder %s165, %s179
      %p181 = scmp.eq.s32.totalorder %s29, 0
      %p182 = por %p180, %p181
      %s183 = ssub.s32 %s23, %s30
      %p184 = scmp.eq.s32.totalorder %s183, 0
      %s186 = sadd.s32 %s185, 1
      %s187 = scalar_select %p184, %s185, %s186
      %p190 = pneg %p184
      %p191 = scmp.eq.s32.totalorder %s23, 1
      %p192 = por %p190, %p191
      %p193 = scmp.ne.s32.totalorder %s185, %s188
      %p194 = scmp.eq.s32.totalorder %s23, 0
      %p195 = por %p193, %p194
      %p196 = scmp.ne.s32.totalorder %s185, %s188
      %p197 = scmp.eq.s32.totalorder %s28, 1
      %p198 = por %p196, %p197
      %p199 = scmp.ne.s32.totalorder %s188, %s189
      %p200 = scmp.eq.s32.totalorder %s28, 0
      %p201 = por %p199, %p200
      %p202 = scmp.ne.s32.totalorder %s188, %s189
      %p203 = scmp.eq.s32.totalorder %s29, 1
      %p204 = por %p202, %p203
      %p206 = scmp.ne.s32.totalorder %s189, %s205
      %p207 = scmp.eq.s32.totalorder %s29, 0
      %p208 = por %p206, %p207
      %p209 = scmp.le.s32.totalorder 1, %s23
      %p210 = scmp.lt.s32.totalorder %s23, 3
      %p211 = pnand %p209, %p210
      %p212 = pneg %p211
      // Predicated region
      $region9: #{tpu_custom_call.1} parent=5 // pred_check
        _
      $region10: #{tpu_custom_call.1} parent=5 // pred_check_branch
        %214 = sbr.rel (%p211) target = $region12
      $region11: #{tpu_custom_call.1} parent=5 // pred_region
        %s215 = ssub.s32 %s23, 1
        // Predicated region
        $region13: #{tpu_custom_call.1} parent=11 // pred_check
          %p216 = pneg %p70
        $region14: #{tpu_custom_call.1} parent=11 // pred_check_branch
          %218 = sbr.rel (%p216) target = $region16
        $region15: #{tpu_custom_call.1} parent=11 // pred_region
          %s220 = ssub.s32 8192, 8192
          %221 = vsyncadd [#allocation7], %s220
          %s222 = sshll.u32 [#allocation6], 4
          %s223 = int_to_ptr.vmem [resolvable:$true] %s222
          %228 = dma.hbm_to_vmem [thread:$0]  %s1, 8192, %s223, [#allocation7], 256, 256, 16
        $region16: #{tpu_custom_call.1} parent=11 // pred_fallthru
          _
        // Predicated region
        $region17: #{tpu_custom_call.1} parent=11 // pred_check
          %p229 = pneg %p91
        $region18: #{tpu_custom_call.1} parent=11 // pred_check_branch
          %231 = sbr.rel (%p229) target = $region20
        $region19: #{tpu_custom_call.1} parent=11 // pred_region
          _
        $region20: #{tpu_custom_call.1} parent=11 // pred_fallthru
          _
        // Predicated region
        $region21: #{tpu_custom_call.1} parent=11 // pred_check
          %p232 = pneg %p112
        $region22: #{tpu_custom_call.1} parent=11 // pred_check_branch
          %234 = sbr.rel (%p232) target = $region24
        $region23: #{tpu_custom_call.1} parent=11 // pred_region
          _
        $region24: #{tpu_custom_call.1} parent=11 // pred_fallthru
          _
        // Predicated region
        $region25: #{tpu_custom_call.1} parent=11 // pred_check
          %p235 = pneg %p133
        $region26: #{tpu_custom_call.1} parent=11 // pred_check_branch
          %237 = sbr.rel (%p235) target = $region28
        $region27: #{tpu_custom_call.1} parent=11 // pred_region
          %s239 = ssub.s32 2048, 2048
          %240 = vsyncadd [#allocation7], %s239
          %s241 = sshll.u32 [#allocation8], 4
          %s242 = int_to_ptr.vmem [resolvable:$true] %s241
          %247 = dma.hbm_to_vmem [thread:$0]  %s4, 2048, %s242, [#allocation7], 64, 64, 4
        $region28: #{tpu_custom_call.1} parent=11 // pred_fallthru
          _
        // Predicated region
        $region29: #{tpu_custom_call.1} parent=11 // pred_check
          %p248 = pneg %p154
        $region30: #{tpu_custom_call.1} parent=11 // pred_check_branch
          %250 = sbr.rel (%p248) target = $region32
        $region31: #{tpu_custom_call.1} parent=11 // pred_region
          %s252 = ssub.s32 2048, 2048
          %253 = vsyncadd [#allocation10], %s252
          %s254 = sshll.u32 [#allocation9], 4
          %s255 = int_to_ptr.vmem [resolvable:$true] %s254
          %260 = dma.hbm_to_vmem [thread:$0]  %s5, 2048, %s255, [#allocation10], 64, 64, 4
        $region32: #{tpu_custom_call.1} parent=11 // pred_fallthru
          _
        // Predicated region
        $region33: #{tpu_custom_call.1} parent=11 // pred_check
          %p261 = pneg %p175
        $region34: #{tpu_custom_call.1} parent=11 // pred_check_branch
          %263 = sbr.rel (%p261) target = $region36
        $region35: #{tpu_custom_call.1} parent=11 // pred_region
          _
        $region36: #{tpu_custom_call.1} parent=11 // pred_fallthru
          _
      $region12: #{tpu_custom_call.1} parent=5 // pred_fallthru
        _
      %p264 = scmp.lt.s32.totalorder %s23, 2
      // Predicated region
      $region37: #{tpu_custom_call.1} parent=5 // pred_check
        %p265 = pneg %p264
      $region38: #{tpu_custom_call.1} parent=5 // pred_check_branch
        %267 = sbr.rel (%p265) target = $region40
      $region39: #{tpu_custom_call.1} parent=5 // pred_region
        // Predicated region
        $region41: #{tpu_custom_call.1} parent=39 // pred_check
          %p268 = pneg %p43
        $region42: #{tpu_custom_call.1} parent=39 // pred_check_branch
          %270 = sbr.rel (%p268) target = $region44
        $region43: #{tpu_custom_call.1} parent=39 // pred_region
          %s271 = sand.u32 %s33, 1
          %s272 = scalar_lea.sflag [#allocation4], %s271
          %s273 = sand.u32 %s33, 1
          %s274 = smul.addr %s273, 512
          %s275 = scalar_lea.vmem [#allocation3], %s274
          %s276 = smul.u32 8, %s23
          %s278 = ssub.s32 8192, 8192
          %279 = vsyncadd %s272, %s278
          %s280 = smul.addr %s276, 16
          %s281 = smul.addr %s280, 64
          %s282 = scalar_lea.hbm %s0, %s281
          %s283 = sshll.u32 %s275, 4
          %s284 = int_to_ptr.vmem [resolvable:$true] %s283
          %289 = dma.hbm_to_vmem [thread:$0]  %s282, 8192, %s284, %s272, 128, 128, 8
        $region44: #{tpu_custom_call.1} parent=39 // pred_fallthru
          _
      $region40: #{tpu_custom_call.1} parent=5 // pred_fallthru
        _
      %p290 = scmp.le.s32.totalorder 1, %s23
      %p291 = scmp.lt.s32.totalorder %s23, 3
      %p292 = pnand %p290, %p291
      %p293 = pneg %p292
      // Predicated region
      $region45: #{tpu_custom_call.1} parent=5 // pred_check
        _
      $region46: #{tpu_custom_call.1} parent=5 // pred_check_branch
        %295 = sbr.rel (%p292) target = $region48
      $region47: #{tpu_custom_call.1} parent=5 // pred_region
        %s296 = ssub.s32 %s23, 1
        %s297 = sand.u32 %s36, 1
        %s298 = scalar_lea.sflag [#allocation4], %s297
        %s299 = sand.u32 %s36, 1
        %s300 = smul.addr %s299, 512
        %s301 = scalar_lea.vmem [#allocation3], %s300
        // Predicated region
        $region49: #{tpu_custom_call.1} parent=47 // pred_check
          %p302 = pneg %p49
        $region50: #{tpu_custom_call.1} parent=47 // pred_check_branch
          %304 = sbr.rel (%p302) target = $region52
        $region51: #{tpu_custom_call.1} parent=47 // pred_region
          %305 = dma.done %s298, 8192
        $region52: #{tpu_custom_call.1} parent=47 // pred_fallthru
          _
        // Predicated region
        $region53: #{tpu_custom_call.1} parent=47 // pred_check
          %p306 = pneg %p70
        $region54: #{tpu_custom_call.1} parent=47 // pred_check_branch
          %308 = sbr.rel (%p306) target = $region56
        $region55: #{tpu_custom_call.1} parent=47 // pred_region
          %309 = dma.done [#allocation7], 8192
        $region56: #{tpu_custom_call.1} parent=47 // pred_fallthru
          _
        // Predicated region
        $region57: #{tpu_custom_call.1} parent=47 // pred_check
          %p310 = pneg %p133
        $region58: #{tpu_custom_call.1} parent=47 // pred_check_branch
          %312 = sbr.rel (%p310) target = $region60
        $region59: #{tpu_custom_call.1} parent=47 // pred_region
          %313 = dma.done [#allocation7], 2048
        $region60: #{tpu_custom_call.1} parent=47 // pred_fallthru
          _
        // Predicated region
        $region61: #{tpu_custom_call.1} parent=47 // pred_check
          %p314 = pneg %p154
        $region62: #{tpu_custom_call.1} parent=47 // pred_check_branch
          %316 = sbr.rel (%p314) target = $region64
        $region63: #{tpu_custom_call.1} parent=47 // pred_region
          %317 = dma.done [#allocation10], 2048
        $region64: #{tpu_custom_call.1} parent=47 // pred_fallthru
          _
        %s318 = sand.u32 %s36, 1
        %s319 = scalar_lea.sflag [#allocation4], %s318
        %s320 = sand.u32 %s36, 1
        %s321 = smul.addr %s320, 512
        %s322 = scalar_lea.vmem [#allocation3], %s321
        %p323 = pneg %p49
        %p324 = pneg %p46
        %p325 = pneg %p70
        %p326 = pneg %p67
        %p327 = pneg %p91
        %p328 = pneg %p88
        %p329 = pneg %p112
        %p330 = pneg %p109
        %p331 = pneg %p133
        %p332 = pneg %p130
        %p333 = pneg %p154
        %p334 = pneg %p151
        %p335 = pneg %p175
        %p336 = pneg %p172
        %p337 = pneg %p201
        %p338 = pneg %p198
        %s339 = sand.u32 %s188, 1
        %s340 = scalar_lea.sflag [#allocation5], %s339
        %s341 = sand.u32 %s188, 1
        %s342 = smul.addr %s341, 8
        %s343 = scalar_lea.vmem [#allocation11], %s342
        %s344 = smul.u32 8, %s28
        %v346 = vld [vmem:[%s301] sm:$0xff]
        %v347 = vld [vmem:[%s301 + $0x8] sm:$0xff]
        %v348 = vld [vmem:[%s301 + $0x10] sm:$0xff]
        %v349 = vld [vmem:[%s301 + $0x18] sm:$0xff]
        %v350 = vld [vmem:[%s301 + $0x20] sm:$0xff]
        %v351 = vld [vmem:[%s301 + $0x28] sm:$0xff]
        %v352 = vld [vmem:[%s301 + $0x30] sm:$0xff]
        %v353 = vld [vmem:[%s301 + $0x38] sm:$0xff]
        %v354 = vld [vmem:[%s301 + $0x40] sm:$0xff]
        %v355 = vld [vmem:[%s301 + $0x48] sm:$0xff]
        %v356 = vld [vmem:[%s301 + $0x50] sm:$0xff]
        %v357 = vld [vmem:[%s301 + $0x58] sm:$0xff]
        %v358 = vld [vmem:[%s301 + $0x60] sm:$0xff]
        %v359 = vld [vmem:[%s301 + $0x68] sm:$0xff]
        %v360 = vld [vmem:[%s301 + $0x70] sm:$0xff]
        %v361 = vld [vmem:[%s301 + $0x78] sm:$0xff]
        %v362 = vld [vmem:[%s301 + $0x80] sm:$0xff]
        %v363 = vld [vmem:[%s301 + $0x88] sm:$0xff]
        %v364 = vld [vmem:[%s301 + $0x90] sm:$0xff]
        %v365 = vld [vmem:[%s301 + $0x98] sm:$0xff]
        %v366 = vld [vmem:[%s301 + $0xa0] sm:$0xff]
        %v367 = vld [vmem:[%s301 + $0xa8] sm:$0xff]
        %v368 = vld [vmem:[%s301 + $0xb0] sm:$0xff]
        %v369 = vld [vmem:[%s301 + $0xb8] sm:$0xff]
        %v370 = vld [vmem:[%s301 + $0xc0] sm:$0xff]
        %v371 = vld [vmem:[%s301 + $0xc8] sm:$0xff]
        %v372 = vld [vmem:[%s301 + $0xd0] sm:$0xff]
        %v373 = vld [vmem:[%s301 + $0xd8] sm:$0xff]
        %v374 = vld [vmem:[%s301 + $0xe0] sm:$0xff]
        %v375 = vld [vmem:[%s301 + $0xe8] sm:$0xff]
        %v376 = vld [vmem:[%s301 + $0xf0] sm:$0xff]
        %v377 = vld [vmem:[%s301 + $0xf8] sm:$0xff]
        %v378 = vld [vmem:[%s301 + $0x100] sm:$0xff]
        %v379 = vld [vmem:[%s301 + $0x108] sm:$0xff]
        %v380 = vld [vmem:[%s301 + $0x110] sm:$0xff]
        %v381 = vld [vmem:[%s301 + $0x118] sm:$0xff]
        %v382 = vld [vmem:[%s301 + $0x120] sm:$0xff]
        %v383 = vld [vmem:[%s301 + $0x128] sm:$0xff]
        %v384 = vld [vmem:[%s301 + $0x130] sm:$0xff]
        %v385 = vld [vmem:[%s301 + $0x138] sm:$0xff]
        %v386 = vld [vmem:[%s301 + $0x140] sm:$0xff]
        %v387 = vld [vmem:[%s301 + $0x148] sm:$0xff]
        %v388 = vld [vmem:[%s301 + $0x150] sm:$0xff]
        %v389 = vld [vmem:[%s301 + $0x158] sm:$0xff]
        %v390 = vld [vmem:[%s301 + $0x160] sm:$0xff]
        %v391 = vld [vmem:[%s301 + $0x168] sm:$0xff]
        %v392 = vld [vmem:[%s301 + $0x170] sm:$0xff]
        %v393 = vld [vmem:[%s301 + $0x178] sm:$0xff]
        %v394 = vld [vmem:[%s301 + $0x180] sm:$0xff]
        %v395 = vld [vmem:[%s301 + $0x188] sm:$0xff]
        %v396 = vld [vmem:[%s301 + $0x190] sm:$0xff]
        %v397 = vld [vmem:[%s301 + $0x198] sm:$0xff]
        %v398 = vld [vmem:[%s301 + $0x1a0] sm:$0xff]
        %v399 = vld [vmem:[%s301 + $0x1a8] sm:$0xff]
        %v400 = vld [vmem:[%s301 + $0x1b0] sm:$0xff]
        %v401 = vld [vmem:[%s301 + $0x1b8] sm:$0xff]
        %v402 = vld [vmem:[%s301 + $0x1c0] sm:$0xff]
        %v403 = vld [vmem:[%s301 + $0x1c8] sm:$0xff]
        %v404 = vld [vmem:[%s301 + $0x1d0] sm:$0xff]
        %v405 = vld [vmem:[%s301 + $0x1d8] sm:$0xff]
        %v406 = vld [vmem:[%s301 + $0x1e0] sm:$0xff]
        %v407 = vld [vmem:[%s301 + $0x1e8] sm:$0xff]
        %v408 = vld [vmem:[%s301 + $0x1f0] sm:$0xff]
        %v409 = vld [vmem:[%s301 + $0x1f8] sm:$0xff]
        %v410 = vld [vmem:[#allocation6] sm:$0xff]
        %v411 = vld [vmem:[#allocation6 + $0x8] sm:$0xff]
        %v412 = vld [vmem:[#allocation6 + $0x10] sm:$0xff]
        %v413 = vld [vmem:[#allocation6 + $0x18] sm:$0xff]
        %v414 = vld [vmem:[#allocation6 + $0x20] sm:$0xff]
        %v415 = vld [vmem:[#allocation6 + $0x28] sm:$0xff]
        %v416 = vld [vmem:[#allocation6 + $0x30] sm:$0xff]
        %v417 = vld [vmem:[#allocation6 + $0x38] sm:$0xff]
        %v418 = vld [vmem:[#allocation6 + $0x40] sm:$0xff]
        %v419 = vld [vmem:[#allocation6 + $0x48] sm:$0xff]
        %v420 = vld [vmem:[#allocation6 + $0x50] sm:$0xff]
        %v421 = vld [vmem:[#allocation6 + $0x58] sm:$0xff]
        %v422 = vld [vmem:[#allocation6 + $0x60] sm:$0xff]
        %v423 = vld [vmem:[#allocation6 + $0x68] sm:$0xff]
        %v424 = vld [vmem:[#allocation6 + $0x70] sm:$0xff]
        %v425 = vld [vmem:[#allocation6 + $0x78] sm:$0xff]
        %v426 = vld [vmem:[#allocation6 + $0x80] sm:$0xff]
        %v427 = vld [vmem:[#allocation6 + $0x88] sm:$0xff]
        %v428 = vld [vmem:[#allocation6 + $0x90] sm:$0xff]
        %v429 = vld [vmem:[#allocation6 + $0x98] sm:$0xff]
        %v430 = vld [vmem:[#allocation6 + $0xa0] sm:$0xff]
        %v431 = vld [vmem:[#allocation6 + $0xa8] sm:$0xff]
        %v432 = vld [vmem:[#allocation6 + $0xb0] sm:$0xff]
        %v433 = vld [vmem:[#allocation6 + $0xb8] sm:$0xff]
        %v434 = vld [vmem:[#allocation6 + $0xc0] sm:$0xff]
        %v435 = vld [vmem:[#allocation6 + $0xc8] sm:$0xff]
        %v436 = vld [vmem:[#allocation6 + $0xd0] sm:$0xff]
        %v437 = vld [vmem:[#allocation6 + $0xd8] sm:$0xff]
        %v438 = vld [vmem:[#allocation6 + $0xe0] sm:$0xff]
        %v439 = vld [vmem:[#allocation6 + $0xe8] sm:$0xff]
        %v440 = vld [vmem:[#allocation6 + $0xf0] sm:$0xff]
        %v441 = vld [vmem:[#allocation6 + $0xf8] sm:$0xff]
        %v442 = vld [vmem:[#allocation6 + $0x100] sm:$0xff]
        %v443 = vld [vmem:[#allocation6 + $0x108] sm:$0xff]
        %v444 = vld [vmem:[#allocation6 + $0x110] sm:$0xff]
        %v445 = vld [vmem:[#allocation6 + $0x118] sm:$0xff]
        %v446 = vld [vmem:[#allocation6 + $0x120] sm:$0xff]
        %v447 = vld [vmem:[#allocation6 + $0x128] sm:$0xff]
        %v448 = vld [vmem:[#allocation6 + $0x130] sm:$0xff]
        %v449 = vld [vmem:[#allocation6 + $0x138] sm:$0xff]
        %v450 = vld [vmem:[#allocation6 + $0x140] sm:$0xff]
        %v451 = vld [vmem:[#allocation6 + $0x148] sm:$0xff]
        %v452 = vld [vmem:[#allocation6 + $0x150] sm:$0xff]
        %v453 = vld [vmem:[#allocation6 + $0x158] sm:$0xff]
        %v454 = vld [vmem:[#allocation6 + $0x160] sm:$0xff]
        %v455 = vld [vmem:[#allocation6 + $0x168] sm:$0xff]
        %v456 = vld [vmem:[#allocation6 + $0x170] sm:$0xff]
        %v457 = vld [vmem:[#allocation6 + $0x178] sm:$0xff]
        %v458 = vld [vmem:[#allocation6 + $0x180] sm:$0xff]
        %v459 = vld [vmem:[#allocation6 + $0x188] sm:$0xff]
        %v460 = vld [vmem:[#allocation6 + $0x190] sm:$0xff]
        %v461 = vld [vmem:[#allocation6 + $0x198] sm:$0xff]
        %v462 = vld [vmem:[#allocation6 + $0x1a0] sm:$0xff]
        %v463 = vld [vmem:[#allocation6 + $0x1a8] sm:$0xff]
        %v464 = vld [vmem:[#allocation6 + $0x1b0] sm:$0xff]
        %v465 = vld [vmem:[#allocation6 + $0x1b8] sm:$0xff]
        %v466 = vld [vmem:[#allocation6 + $0x1c0] sm:$0xff]
        %v467 = vld [vmem:[#allocation6 + $0x1c8] sm:$0xff]
        %v468 = vld [vmem:[#allocation6 + $0x1d0] sm:$0xff]
        %v469 = vld [vmem:[#allocation6 + $0x1d8] sm:$0xff]
        %v470 = vld [vmem:[#allocation6 + $0x1e0] sm:$0xff]
        %v471 = vld [vmem:[#allocation6 + $0x1e8] sm:$0xff]
        %v472 = vld [vmem:[#allocation6 + $0x1f0] sm:$0xff]
        %v473 = vld [vmem:[#allocation6 + $0x1f8] sm:$0xff]
        %v474 = vld [vmem:[%s2] sm:$0xf]
        %v476 = vlaneseq
        %v477 = vshrl.u32 %v476, 7
        %v478 = vsub.s32 0, %v477
        %v479 = vrot.slane %v474, %v478
        %v480 = vlaneseq
        %v481 = vshrl.u32 %v480, 7
        %v482 = vsub.s32 1, %v481
        %v483 = vrot.slane %v474, %v482
        %v484 = vlaneseq
        %v485 = vshrl.u32 %v484, 7
        %v486 = vsub.s32 2, %v485
        %v487 = vrot.slane %v474, %v486
        %v488 = vlaneseq
        %v489 = vshrl.u32 %v488, 7
        %v490 = vsub.s32 3, %v489
        %v491 = vrot.slane %v474, %v490
        %v560 = vunpack.c.l.b16 %v346
        %v561 = vunpack.c.h.b16 %v346
        %v562 = vunpack.c.l.b16 %v347
        %v563 = vunpack.c.h.b16 %v347
        %v564 = vunpack.c.l.b16 %v348
        %v565 = vunpack.c.h.b16 %v348
        %v566 = vunpack.c.l.b16 %v349
        %v567 = vunpack.c.h.b16 %v349
        %v568 = vunpack.c.l.b16 %v350
        %v569 = vunpack.c.h.b16 %v350
        %v570 = vunpack.c.l.b16 %v351
        %v571 = vunpack.c.h.b16 %v351
        %v572 = vunpack.c.l.b16 %v352
        %v573 = vunpack.c.h.b16 %v352
        %v574 = vunpack.c.l.b16 %v353
        %v575 = vunpack.c.h.b16 %v353
        %v576 = vunpack.c.l.b16 %v354
        %v577 = vunpack.c.h.b16 %v354
        %v578 = vunpack.c.l.b16 %v355
        %v579 = vunpack.c.h.b16 %v355
        %v580 = vunpack.c.l.b16 %v356
        %v581 = vunpack.c.h.b16 %v356
        %v582 = vunpack.c.l.b16 %v357
        %v583 = vunpack.c.h.b16 %v357
        %v584 = vunpack.c.l.b16 %v358
        %v585 = vunpack.c.h.b16 %v358
        %v586 = vunpack.c.l.b16 %v359
        %v587 = vunpack.c.h.b16 %v359
        %v588 = vunpack.c.l.b16 %v360
        %v589 = vunpack.c.h.b16 %v360
        %v590 = vunpack.c.l.b16 %v361
        %v591 = vunpack.c.h.b16 %v361
        %v592 = vunpack.c.l.b16 %v362
        %v593 = vunpack.c.h.b16 %v362
        %v594 = vunpack.c.l.b16 %v363
        %v595 = vunpack.c.h.b16 %v363
        %v596 = vunpack.c.l.b16 %v364
        %v597 = vunpack.c.h.b16 %v364
        %v598 = vunpack.c.l.b16 %v365
        %v599 = vunpack.c.h.b16 %v365
        %v600 = vunpack.c.l.b16 %v366
        %v601 = vunpack.c.h.b16 %v366
        %v602 = vunpack.c.l.b16 %v367
        %v603 = vunpack.c.h.b16 %v367
        %v604 = vunpack.c.l.b16 %v368
        %v605 = vunpack.c.h.b16 %v368
        %v606 = vunpack.c.l.b16 %v369
        %v607 = vunpack.c.h.b16 %v369
        %v608 = vunpack.c.l.b16 %v370
        %v609 = vunpack.c.h.b16 %v370
        %v610 = vunpack.c.l.b16 %v371
        %v611 = vunpack.c.h.b16 %v371
        %v612 = vunpack.c.l.b16 %v372
        %v613 = vunpack.c.h.b16 %v372
        %v614 = vunpack.c.l.b16 %v373
        %v615 = vunpack.c.h.b16 %v373
        %v616 = vunpack.c.l.b16 %v374
        %v617 = vunpack.c.h.b16 %v374
        %v618 = vunpack.c.l.b16 %v375
        %v619 = vunpack.c.h.b16 %v375
        %v620 = vunpack.c.l.b16 %v376
        %v621 = vunpack.c.h.b16 %v376
        %v622 = vunpack.c.l.b16 %v377
        %v623 = vunpack.c.h.b16 %v377
        %v624 = vunpack.c.l.b16 %v378
        %v625 = vunpack.c.h.b16 %v378
        %v626 = vunpack.c.l.b16 %v379
        %v627 = vunpack.c.h.b16 %v379
        %v628 = vunpack.c.l.b16 %v380
        %v629 = vunpack.c.h.b16 %v380
        %v630 = vunpack.c.l.b16 %v381
        %v631 = vunpack.c.h.b16 %v381
        %v632 = vunpack.c.l.b16 %v382
        %v633 = vunpack.c.h.b16 %v382
        %v634 = vunpack.c.l.b16 %v383
        %v635 = vunpack.c.h.b16 %v383
        %v636 = vunpack.c.l.b16 %v384
        %v637 = vunpack.c.h.b16 %v384
        %v638 = vunpack.c.l.b16 %v385
        %v639 = vunpack.c.h.b16 %v385
        %v640 = vunpack.c.l.b16 %v386
        %v641 = vunpack.c.h.b16 %v386
        %v642 = vunpack.c.l.b16 %v387
        %v643 = vunpack.c.h.b16 %v387
        %v644 = vunpack.c.l.b16 %v388
        %v645 = vunpack.c.h.b16 %v388
        %v646 = vunpack.c.l.b16 %v389
        %v647 = vunpack.c.h.b16 %v389
        %v648 = vunpack.c.l.b16 %v390
        %v649 = vunpack.c.h.b16 %v390
        %v650 = vunpack.c.l.b16 %v391
        %v651 = vunpack.c.h.b16 %v391
        %v652 = vunpack.c.l.b16 %v392
        %v653 = vunpack.c.h.b16 %v392
        %v654 = vunpack.c.l.b16 %v393
        %v655 = vunpack.c.h.b16 %v393
        %v656 = vunpack.c.l.b16 %v394
        %v657 = vunpack.c.h.b16 %v394
        %v658 = vunpack.c.l.b16 %v395
        %v659 = vunpack.c.h.b16 %v395
        %v660 = vunpack.c.l.b16 %v396
        %v661 = vunpack.c.h.b16 %v396
        %v662 = vunpack.c.l.b16 %v397
        %v663 = vunpack.c.h.b16 %v397
        %v664 = vunpack.c.l.b16 %v398
        %v665 = vunpack.c.h.b16 %v398
        %v666 = vunpack.c.l.b16 %v399
        %v667 = vunpack.c.h.b16 %v399
        %v668 = vunpack.c.l.b16 %v400
        %v669 = vunpack.c.h.b16 %v400
        %v670 = vunpack.c.l.b16 %v401
        %v671 = vunpack.c.h.b16 %v401
        %v672 = vunpack.c.l.b16 %v402
        %v673 = vunpack.c.h.b16 %v402
        %v674 = vunpack.c.l.b16 %v403
        %v675 = vunpack.c.h.b16 %v403
        %v676 = vunpack.c.l.b16 %v404
        %v677 = vunpack.c.h.b16 %v404
        %v678 = vunpack.c.l.b16 %v405
        %v679 = vunpack.c.h.b16 %v405
        %v680 = vunpack.c.l.b16 %v406
        %v681 = vunpack.c.h.b16 %v406
        %v682 = vunpack.c.l.b16 %v407
        %v683 = vunpack.c.h.b16 %v407
        %v684 = vunpack.c.l.b16 %v408
        %v685 = vunpack.c.h.b16 %v408
        %v686 = vunpack.c.l.b16 %v409
        %v687 = vunpack.c.h.b16 %v409
        %v688 = vpack.c.b16 %v562, %v560
        %v689 = vpack.c.b16 %v563, %v561
        %v690 = vpack.c.b16 %v566, %v564
        %v691 = vpack.c.b16 %v567, %v565
        %v692 = vpack.c.b16 %v570, %v568
        %v693 = vpack.c.b16 %v571, %v569
        %v694 = vpack.c.b16 %v574, %v572
        %v695 = vpack.c.b16 %v575, %v573
        %v696 = vpack.c.b16 %v578, %v576
        %v697 = vpack.c.b16 %v579, %v577
        %v698 = vpack.c.b16 %v582, %v580
        %v699 = vpack.c.b16 %v583, %v581
        %v700 = vpack.c.b16 %v586, %v584
        %v701 = vpack.c.b16 %v587, %v585
        %v702 = vpack.c.b16 %v590, %v588
        %v703 = vpack.c.b16 %v591, %v589
        %v704 = vpack.c.b16 %v594, %v592
        %v705 = vpack.c.b16 %v595, %v593
        %v706 = vpack.c.b16 %v598, %v596
        %v707 = vpack.c.b16 %v599, %v597
        %v708 = vpack.c.b16 %v602, %v600
        %v709 = vpack.c.b16 %v603, %v601
        %v710 = vpack.c.b16 %v606, %v604
        %v711 = vpack.c.b16 %v607, %v605
        %v712 = vpack.c.b16 %v610, %v608
        %v713 = vpack.c.b16 %v611, %v609
        %v714 = vpack.c.b16 %v614, %v612
        %v715 = vpack.c.b16 %v615, %v613
        %v716 = vpack.c.b16 %v618, %v616
        %v717 = vpack.c.b16 %v619, %v617
        %v718 = vpack.c.b16 %v622, %v620
        %v719 = vpack.c.b16 %v623, %v621
        %v720 = vpack.c.b16 %v626, %v624
        %v721 = vpack.c.b16 %v627, %v625
        %v722 = vpack.c.b16 %v630, %v628
        %v723 = vpack.c.b16 %v631, %v629
        %v724 = vpack.c.b16 %v634, %v632
        %v725 = vpack.c.b16 %v635, %v633
        %v726 = vpack.c.b16 %v638, %v636
        %v727 = vpack.c.b16 %v639, %v637
        %v728 = vpack.c.b16 %v642, %v640
        %v729 = vpack.c.b16 %v643, %v641
        %v730 = vpack.c.b16 %v646, %v644
        %v731 = vpack.c.b16 %v647, %v645
        %v732 = vpack.c.b16 %v650, %v648
        %v733 = vpack.c.b16 %v651, %v649
        %v734 = vpack.c.b16 %v654, %v652
        %v735 = vpack.c.b16 %v655, %v653
        %v736 = vpack.c.b16 %v658, %v656
        %v737 = vpack.c.b16 %v659, %v657
        %v738 = vpack.c.b16 %v662, %v660
        %v739 = vpack.c.b16 %v663, %v661
        %v740 = vpack.c.b16 %v666, %v664
        %v741 = vpack.c.b16 %v667, %v665
        %v742 = vpack.c.b16 %v670, %v668
        %v743 = vpack.c.b16 %v671, %v669
        %v744 = vpack.c.b16 %v674, %v672
        %v745 = vpack.c.b16 %v675, %v673
        %v746 = vpack.c.b16 %v678, %v676
        %v747 = vpack.c.b16 %v679, %v677
        %v748 = vpack.c.b16 %v682, %v680
        %v749 = vpack.c.b16 %v683, %v681
        %v750 = vpack.c.b16 %v686, %v684
        %v751 = vpack.c.b16 %v687, %v685
        %v880 = vunpack.c.l.b16 %v410
        %v881 = vunpack.c.h.b16 %v410
        %v882 = vunpack.c.l.b16 %v411
        %v883 = vunpack.c.h.b16 %v411
        %v884 = vunpack.c.l.b16 %v412
        %v885 = vunpack.c.h.b16 %v412
        %v886 = vunpack.c.l.b16 %v413
        %v887 = vunpack.c.h.b16 %v413
        %v888 = vunpack.c.l.b16 %v414
        %v889 = vunpack.c.h.b16 %v414
        %v890 = vunpack.c.l.b16 %v415
        %v891 = vunpack.c.h.b16 %v415
        %v892 = vunpack.c.l.b16 %v416
        %v893 = vunpack.c.h.b16 %v416
        %v894 = vunpack.c.l.b16 %v417
        %v895 = vunpack.c.h.b16 %v417
        %v896 = vunpack.c.l.b16 %v418
        %v897 = vunpack.c.h.b16 %v418
        %v898 = vunpack.c.l.b16 %v419
        %v899 = vunpack.c.h.b16 %v419
        %v900 = vunpack.c.l.b16 %v420
        %v901 = vunpack.c.h.b16 %v420
        %v902 = vunpack.c.l.b16 %v421
        %v903 = vunpack.c.h.b16 %v421
        %v904 = vunpack.c.l.b16 %v422
        %v905 = vunpack.c.h.b16 %v422
        %v906 = vunpack.c.l.b16 %v423
        %v907 = vunpack.c.h.b16 %v423
        %v908 = vunpack.c.l.b16 %v424
        %v909 = vunpack.c.h.b16 %v424
        %v910 = vunpack.c.l.b16 %v425
        %v911 = vunpack.c.h.b16 %v425
        %v912 = vunpack.c.l.b16 %v426
        %v913 = vunpack.c.h.b16 %v426
        %v914 = vunpack.c.l.b16 %v427
        %v915 = vunpack.c.h.b16 %v427
        %v916 = vunpack.c.l.b16 %v428
        %v917 = vunpack.c.h.b16 %v428
        %v918 = vunpack.c.l.b16 %v429
        %v919 = vunpack.c.h.b16 %v429
        %v920 = vunpack.c.l.b16 %v430
        %v921 = vunpack.c.h.b16 %v430
        %v922 = vunpack.c.l.b16 %v431
        %v923 = vunpack.c.h.b16 %v431
        %v924 = vunpack.c.l.b16 %v432
        %v925 = vunpack.c.h.b16 %v432
        %v926 = vunpack.c.l.b16 %v433
        %v927 = vunpack.c.h.b16 %v433
        %v928 = vunpack.c.l.b16 %v434
        %v929 = vunpack.c.h.b16 %v434
        %v930 = vunpack.c.l.b16 %v435
        %v931 = vunpack.c.h.b16 %v435
        %v932 = vunpack.c.l.b16 %v436
        %v933 = vunpack.c.h.b16 %v436
        %v934 = vunpack.c.l.b16 %v437
        %v935 = vunpack.c.h.b16 %v437
        %v936 = vunpack.c.l.b16 %v438
        %v937 = vunpack.c.h.b16 %v438
        %v938 = vunpack.c.l.b16 %v439
        %v939 = vunpack.c.h.b16 %v439
        %v940 = vunpack.c.l.b16 %v440
        %v941 = vunpack.c.h.b16 %v440
        %v942 = vunpack.c.l.b16 %v441
        %v943 = vunpack.c.h.b16 %v441
        %v944 = vunpack.c.l.b16 %v442
        %v945 = vunpack.c.h.b16 %v442
        %v946 = vunpack.c.l.b16 %v443
        %v947 = vunpack.c.h.b16 %v443
        %v948 = vunpack.c.l.b16 %v444
        %v949 = vunpack.c.h.b16 %v444
        %v950 = vunpack.c.l.b16 %v445
        %v951 = vunpack.c.h.b16 %v445
        %v952 = vunpack.c.l.b16 %v446
        %v953 = vunpack.c.h.b16 %v446
        %v954 = vunpack.c.l.b16 %v447
        %v955 = vunpack.c.h.b16 %v447
        %v956 = vunpack.c.l.b16 %v448
        %v957 = vunpack.c.h.b16 %v448
        %v958 = vunpack.c.l.b16 %v449
        %v959 = vunpack.c.h.b16 %v449
        %v960 = vunpack.c.l.b16 %v450
        %v961 = vunpack.c.h.b16 %v450
        %v962 = vunpack.c.l.b16 %v451
        %v963 = vunpack.c.h.b16 %v451
        %v964 = vunpack.c.l.b16 %v452
        %v965 = vunpack.c.h.b16 %v452
        %v966 = vunpack.c.l.b16 %v453
        %v967 = vunpack.c.h.b16 %v453
        %v968 = vunpack.c.l.b16 %v454
        %v969 = vunpack.c.h.b16 %v454
        %v970 = vunpack.c.l.b16 %v455
        %v971 = vunpack.c.h.b16 %v455
        %v972 = vunpack.c.l.b16 %v456
        %v973 = vunpack.c.h.b16 %v456
        %v974 = vunpack.c.l.b16 %v457
        %v975 = vunpack.c.h.b16 %v457
        %v976 = vunpack.c.l.b16 %v458
        %v977 = vunpack.c.h.b16 %v458
        %v978 = vunpack.c.l.b16 %v459
        %v979 = vunpack.c.h.b16 %v459
        %v980 = vunpack.c.l.b16 %v460
        %v981 = vunpack.c.h.b16 %v460
        %v982 = vunpack.c.l.b16 %v461
        %v983 = vunpack.c.h.b16 %v461
        %v984 = vunpack.c.l.b16 %v462
        %v985 = vunpack.c.h.b16 %v462
        %v986 = vunpack.c.l.b16 %v463
        %v987 = vunpack.c.h.b16 %v463
        %v988 = vunpack.c.l.b16 %v464
        %v989 = vunpack.c.h.b16 %v464
        %v990 = vunpack.c.l.b16 %v465
        %v991 = vunpack.c.h.b16 %v465
        %v992 = vunpack.c.l.b16 %v466
        %v993 = vunpack.c.h.b16 %v466
        %v994 = vunpack.c.l.b16 %v467
        %v995 = vunpack.c.h.b16 %v467
        %v996 = vunpack.c.l.b16 %v468
        %v997 = vunpack.c.h.b16 %v468
        %v998 = vunpack.c.l.b16 %v469
        %v999 = vunpack.c.h.b16 %v469
        %v1000 = vunpack.c.l.b16 %v470
        %v1001 = vunpack.c.h.b16 %v470
        %v1002 = vunpack.c.l.b16 %v471
        %v1003 = vunpack.c.h.b16 %v471
        %v1004 = vunpack.c.l.b16 %v472
        %v1005 = vunpack.c.h.b16 %v472
        %v1006 = vunpack.c.l.b16 %v473
        %v1007 = vunpack.c.h.b16 %v473
        %v1008 = vpack.c.b16 %v884, %v880
        %v1009 = vpack.c.b16 %v885, %v881
        %v1010 = vpack.c.b16 %v886, %v882
        %v1011 = vpack.c.b16 %v887, %v883
        %v1012 = vpack.c.b16 %v892, %v888
        %v1013 = vpack.c.b16 %v893, %v889
        %v1014 = vpack.c.b16 %v894, %v890
        %v1015 = vpack.c.b16 %v895, %v891
        %v1016 = vpack.c.b16 %v900, %v896
        %v1017 = vpack.c.b16 %v901, %v897
        %v1018 = vpack.c.b16 %v902, %v898
        %v1019 = vpack.c.b16 %v903, %v899
        %v1020 = vpack.c.b16 %v908, %v904
        %v1021 = vpack.c.b16 %v909, %v905
        %v1022 = vpack.c.b16 %v910, %v906
        %v1023 = vpack.c.b16 %v911, %v907
        %v1024 = vpack.c.b16 %v916, %v912
        %v1025 = vpack.c.b16 %v917, %v913
        %v1026 = vpack.c.b16 %v918, %v914
        %v1027 = vpack.c.b16 %v919, %v915
        %v1028 = vpack.c.b16 %v924, %v920
        %v1029 = vpack.c.b16 %v925, %v921
        %v1030 = vpack.c.b16 %v926, %v922
        %v1031 = vpack.c.b16 %v927, %v923
        %v1032 = vpack.c.b16 %v932, %v928
        %v1033 = vpack.c.b16 %v933, %v929
        %v1034 = vpack.c.b16 %v934, %v930
        %v1035 = vpack.c.b16 %v935, %v931
        %v1036 = vpack.c.b16 %v940, %v936
        %v1037 = vpack.c.b16 %v941, %v937
        %v1038 = vpack.c.b16 %v942, %v938
        %v1039 = vpack.c.b16 %v943, %v939
        %v1040 = vpack.c.b16 %v948, %v944
        %v1041 = vpack.c.b16 %v949, %v945
        %v1042 = vpack.c.b16 %v950, %v946
        %v1043 = vpack.c.b16 %v951, %v947
        %v1044 = vpack.c.b16 %v956, %v952
        %v1045 = vpack.c.b16 %v957, %v953
        %v1046 = vpack.c.b16 %v958, %v954
        %v1047 = vpack.c.b16 %v959, %v955
        %v1048 = vpack.c.b16 %v964, %v960
        %v1049 = vpack.c.b16 %v965, %v961
        %v1050 = vpack.c.b16 %v966, %v962
        %v1051 = vpack.c.b16 %v967, %v963
        %v1052 = vpack.c.b16 %v972, %v968
        %v1053 = vpack.c.b16 %v973, %v969
        %v1054 = vpack.c.b16 %v974, %v970
        %v1055 = vpack.c.b16 %v975, %v971
        %v1056 = vpack.c.b16 %v980, %v976
        %v1057 = vpack.c.b16 %v981, %v977
        %v1058 = vpack.c.b16 %v982, %v978
        %v1059 = vpack.c.b16 %v983, %v979
        %v1060 = vpack.c.b16 %v988, %v984
        %v1061 = vpack.c.b16 %v989, %v985
        %v1062 = vpack.c.b16 %v990, %v986
        %v1063 = vpack.c.b16 %v991, %v987
        %v1064 = vpack.c.b16 %v996, %v992
        %v1065 = vpack.c.b16 %v997, %v993
        %v1066 = vpack.c.b16 %v998, %v994
        %v1067 = vpack.c.b16 %v999, %v995
        %v1068 = vpack.c.b16 %v1004, %v1000
        %v1069 = vpack.c.b16 %v1005, %v1001
        %v1070 = vpack.c.b16 %v1006, %v1002
        %v1071 = vpack.c.b16 %v1007, %v1003
        %1136 = vmatprep.subr.bf16.mxu0 %v1037
        %1137 = vmatpush1.bf16.msra.mxu0 %v1036
        %1138 = vmatprep.subr.bf16.mxu0 %v1033
        %1139 = vmatpush1.bf16.msra.mxu0 %v1032
        %1140 = vmatprep.subr.bf16.mxu0 %v1029
        %1141 = vmatpush1.bf16.msra.mxu0 %v1028
        %1142 = vmatprep.subr.bf16.mxu0 %v1025
        %1143 = vmatpush1.bf16.msra.mxu0 %v1024
        %1144 = vmatprep.subr.bf16.mxu0 %v1021
        %1145 = vmatpush1.bf16.msra.mxu0 %v1020
        %1146 = vmatprep.subr.bf16.mxu0 %v1017
        %1147 = vmatpush1.bf16.msra.mxu0 %v1016
        %1148 = vmatprep.subr.bf16.mxu0 %v1013
        %1149 = vmatpush1.bf16.msra.mxu0 %v1012
        %1150 = vmatprep.subr.bf16.mxu0 %v1009
        %1151 = vmatpush1.bf16.msra.mxu0 %v1008
        %1152 = vmatprep.subr.bf16.mxu0 %v1069
        %1153 = vmatpush2.bf16.msra.mxu0 %v1068
        %1154 = vmatprep.subr.bf16.mxu0 %v1065
        %1155 = vmatpush2.bf16.msra.mxu0 %v1064
        %1156 = vmatprep.subr.bf16.mxu0 %v1061
        %1157 = vmatpush2.bf16.msra.mxu0 %v1060
        %1158 = vmatprep.subr.bf16.mxu0 %v1057
        %1159 = vmatpush2.bf16.msra.mxu0 %v1056
        %1160 = vmatprep.subr.bf16.mxu0 %v1053
        %1161 = vmatpush2.bf16.msra.mxu0 %v1052
        %1162 = vmatprep.subr.bf16.mxu0 %v1049
        %1163 = vmatpush2.bf16.msra.mxu0 %v1048
        %1164 = vmatprep.subr.bf16.mxu0 %v1045
        %1165 = vmatpush2.bf16.msra.mxu0 %v1044
        %1166 = vmatprep.subr.bf16.mxu0 %v1041
        %1167 = vmatpush2.bf16.msra.mxu0 %v1040
        %1168 = vmatprep.mubr.bf16.mxu0 %v689
        %1169 = vmatmul.mubr.bf16.gmra.mxu0 %v688
        %v1170 = vpop.f32.mrf.mxu0
        %v1171 = vadd.f32 %v479, %v1170
        %v1172 = vpop.f32.mrf.mxu0
        %v1173 = vadd.f32 %v483, %v1172
        %v1174 = vpop.f32.mrf.mxu0
        %v1175 = vadd.f32 %v479, %v1174
        %v1176 = vpop.f32.mrf.mxu0
        %v1177 = vadd.f32 %v483, %v1176
        %1178 = vmatprep.mubr.bf16.mxu0 %v691
        %1179 = vmatmul.mubr.bf16.gmra.mxu0 %v690
        %v1180 = vpop.f32.mrf.mxu0
        %v1181 = vadd.f32 %v479, %v1180
        %v1182 = vpop.f32.mrf.mxu0
        %v1183 = vadd.f32 %v483, %v1182
        %v1184 = vpop.f32.mrf.mxu0
        %v1185 = vadd.f32 %v479, %v1184
        %v1186 = vpop.f32.mrf.mxu0
        %v1187 = vadd.f32 %v483, %v1186
        %1188 = vmatprep.mubr.bf16.mxu0 %v693
        %1189 = vmatmul.mubr.bf16.gmra.mxu0 %v692
        %v1190 = vpop.f32.mrf.mxu0
        %v1191 = vadd.f32 %v479, %v1190
        %v1192 = vpop.f32.mrf.mxu0
        %v1193 = vadd.f32 %v483, %v1192
        %v1194 = vpop.f32.mrf.mxu0
        %v1195 = vadd.f32 %v479, %v1194
        %v1196 = vpop.f32.mrf.mxu0
        %v1197 = vadd.f32 %v483, %v1196
        %1198 = vmatprep.mubr.bf16.mxu0 %v695
        %1199 = vmatmul.mubr.bf16.gmra.mxu0 %v694
        %v1200 = vpop.f32.mrf.mxu0
        %v1201 = vadd.f32 %v479, %v1200
        %v1202 = vpop.f32.mrf.mxu0
        %v1203 = vadd.f32 %v483, %v1202
        %v1204 = vpop.f32.mrf.mxu0
        %v1205 = vadd.f32 %v479, %v1204
        %v1206 = vpop.f32.mrf.mxu0
        %v1207 = vadd.f32 %v483, %v1206
        %1208 = vmatprep.mubr.bf16.mxu0 %v697
        %1209 = vmatmul.mubr.bf16.gmra.mxu0 %v696
        %v1210 = vpop.f32.mrf.mxu0
        %v1211 = vadd.f32 %v479, %v1210
        %v1212 = vpop.f32.mrf.mxu0
        %v1213 = vadd.f32 %v483, %v1212
        %v1214 = vpop.f32.mrf.mxu0
        %v1215 = vadd.f32 %v479, %v1214
        %v1216 = vpop.f32.mrf.mxu0
        %v1217 = vadd.f32 %v483, %v1216
        %1218 = vmatprep.mubr.bf16.mxu0 %v699
        %1219 = vmatmul.mubr.bf16.gmra.mxu0 %v698
        %v1220 = vpop.f32.mrf.mxu0
        %v1221 = vadd.f32 %v479, %v1220
        %v1222 = vpop.f32.mrf.mxu0
        %v1223 = vadd.f32 %v483, %v1222
        %v1224 = vpop.f32.mrf.mxu0
        %v1225 = vadd.f32 %v479, %v1224
        %v1226 = vpop.f32.mrf.mxu0
        %v1227 = vadd.f32 %v483, %v1226
        %1228 = vmatprep.mubr.bf16.mxu0 %v701
        %1229 = vmatmul.mubr.bf16.gmra.mxu0 %v700
        %v1230 = vpop.f32.mrf.mxu0
        %v1231 = vadd.f32 %v479, %v1230
        %v1232 = vpop.f32.mrf.mxu0
        %v1233 = vadd.f32 %v483, %v1232
        %v1234 = vpop.f32.mrf.mxu0
        %v1235 = vadd.f32 %v479, %v1234
        %v1236 = vpop.f32.mrf.mxu0
        %v1237 = vadd.f32 %v483, %v1236
        %1238 = vmatprep.mubr.bf16.mxu0 %v703
        %1239 = vmatmul.mubr.bf16.gmra.mxu0 %v702
        %v1240 = vpop.f32.mrf.mxu0
        %v1241 = vadd.f32 %v479, %v1240
        %v1242 = vpop.f32.mrf.mxu0
        %v1243 = vadd.f32 %v483, %v1242
        %v1244 = vpop.f32.mrf.mxu0
        %v1245 = vadd.f32 %v479, %v1244
        %v1246 = vpop.f32.mrf.mxu0
        %v1247 = vadd.f32 %v483, %v1246
        %1248 = vmatprep.mubr.bf16.mxu0 %v705
        %1249 = vmatmul.mubr.bf16.gmra.mxu0 %v704
        %v1250 = vpop.f32.mrf.mxu0
        %v1251 = vadd.f32 %v479, %v1250
        %v1252 = vpop.f32.mrf.mxu0
        %v1253 = vadd.f32 %v483, %v1252
        %v1254 = vpop.f32.mrf.mxu0
        %v1255 = vadd.f32 %v479, %v1254
        %v1256 = vpop.f32.mrf.mxu0
        %v1257 = vadd.f32 %v483, %v1256
        %1258 = vmatprep.mubr.bf16.mxu0 %v707
        %1259 = vmatmul.mubr.bf16.gmra.mxu0 %v706
        %v1260 = vpop.f32.mrf.mxu0
        %v1261 = vadd.f32 %v479, %v1260
        %v1262 = vpop.f32.mrf.mxu0
        %v1263 = vadd.f32 %v483, %v1262
        %v1264 = vpop.f32.mrf.mxu0
        %v1265 = vadd.f32 %v479, %v1264
        %v1266 = vpop.f32.mrf.mxu0
        %v1267 = vadd.f32 %v483, %v1266
        %1268 = vmatprep.mubr.bf16.mxu0 %v709
        %1269 = vmatmul.mubr.bf16.gmra.mxu0 %v708
        %v1270 = vpop.f32.mrf.mxu0
        %v1271 = vadd.f32 %v479, %v1270
        %v1272 = vpop.f32.mrf.mxu0
        %v1273 = vadd.f32 %v483, %v1272
        %v1274 = vpop.f32.mrf.mxu0
        %v1275 = vadd.f32 %v479, %v1274
        %v1276 = vpop.f32.mrf.mxu0
        %v1277 = vadd.f32 %v483, %v1276
        %1278 = vmatprep.mubr.bf16.mxu0 %v711
        %1279 = vmatmul.mubr.bf16.gmra.mxu0 %v710
        %v1280 = vpop.f32.mrf.mxu0
        %v1281 = vadd.f32 %v479, %v1280
        %v1282 = vpop.f32.mrf.mxu0
        %v1283 = vadd.f32 %v483, %v1282
        %v1284 = vpop.f32.mrf.mxu0
        %v1285 = vadd.f32 %v479, %v1284
        %v1286 = vpop.f32.mrf.mxu0
        %v1287 = vadd.f32 %v483, %v1286
        %1288 = vmatprep.mubr.bf16.mxu0 %v713
        %1289 = vmatmul.mubr.bf16.gmra.mxu0 %v712
        %v1290 = vpop.f32.mrf.mxu0
        %v1291 = vadd.f32 %v479, %v1290
        %v1292 = vpop.f32.mrf.mxu0
        %v1293 = vadd.f32 %v483, %v1292
        %v1294 = vpop.f32.mrf.mxu0
        %v1295 = vadd.f32 %v479, %v1294
        %v1296 = vpop.f32.mrf.mxu0
        %v1297 = vadd.f32 %v483, %v1296
        %1298 = vmatprep.mubr.bf16.mxu0 %v715
        %1299 = vmatmul.mubr.bf16.gmra.mxu0 %v714
        %v1300 = vpop.f32.mrf.mxu0
        %v1301 = vadd.f32 %v479, %v1300
        %v1302 = vpop.f32.mrf.mxu0
        %v1303 = vadd.f32 %v483, %v1302
        %v1304 = vpop.f32.mrf.mxu0
        %v1305 = vadd.f32 %v479, %v1304
        %v1306 = vpop.f32.mrf.mxu0
        %v1307 = vadd.f32 %v483, %v1306
        %1308 = vmatprep.mubr.bf16.mxu0 %v717
        %1309 = vmatmul.mubr.bf16.gmra.mxu0 %v716
        %v1310 = vpop.f32.mrf.mxu0
        %v1311 = vadd.f32 %v479, %v1310
        %v1312 = vpop.f32.mrf.mxu0
        %v1313 = vadd.f32 %v483, %v1312
        %v1314 = vpop.f32.mrf.mxu0
        %v1315 = vadd.f32 %v479, %v1314
        %v1316 = vpop.f32.mrf.mxu0
        %v1317 = vadd.f32 %v483, %v1316
        %1318 = vmatprep.mubr.bf16.mxu0 %v719
        %1319 = vmatmul.mubr.bf16.gmra.mxu0 %v718
        %v1320 = vpop.f32.mrf.mxu0
        %v1321 = vadd.f32 %v479, %v1320
        %v1322 = vpop.f32.mrf.mxu0
        %v1323 = vadd.f32 %v483, %v1322
        %v1324 = vpop.f32.mrf.mxu0
        %v1325 = vadd.f32 %v479, %v1324
        %v1326 = vpop.f32.mrf.mxu0
        %v1327 = vadd.f32 %v483, %v1326
        %1328 = vmatprep.mubr.bf16.mxu0 %v721
        %1329 = vmatmul.mubr.bf16.gmra.mxu0 %v720
        %v1330 = vpop.f32.mrf.mxu0
        %v1331 = vadd.f32 %v479, %v1330
        %v1332 = vpop.f32.mrf.mxu0
        %v1333 = vadd.f32 %v483, %v1332
        %v1334 = vpop.f32.mrf.mxu0
        %v1335 = vadd.f32 %v479, %v1334
        %v1336 = vpop.f32.mrf.mxu0
        %v1337 = vadd.f32 %v483, %v1336
        %1338 = vmatprep.mubr.bf16.mxu0 %v723
        %1339 = vmatmul.mubr.bf16.gmra.mxu0 %v722
        %v1340 = vpop.f32.mrf.mxu0
        %v1341 = vadd.f32 %v479, %v1340
        %v1342 = vpop.f32.mrf.mxu0
        %v1343 = vadd.f32 %v483, %v1342
        %v1344 = vpop.f32.mrf.mxu0
        %v1345 = vadd.f32 %v479, %v1344
        %v1346 = vpop.f32.mrf.mxu0
        %v1347 = vadd.f32 %v483, %v1346
        %1348 = vmatprep.mubr.bf16.mxu0 %v725
        %1349 = vmatmul.mubr.bf16.gmra.mxu0 %v724
        %v1350 = vpop.f32.mrf.mxu0
        %v1351 = vadd.f32 %v479, %v1350
        %v1352 = vpop.f32.mrf.mxu0
        %v1353 = vadd.f32 %v483, %v1352
        %v1354 = vpop.f32.mrf.mxu0
        %v1355 = vadd.f32 %v479, %v1354
        %v1356 = vpop.f32.mrf.mxu0
        %v1357 = vadd.f32 %v483, %v1356
        %1358 = vmatprep.mubr.bf16.mxu0 %v727
        %1359 = vmatmul.mubr.bf16.gmra.mxu0 %v726
        %v1360 = vpop.f32.mrf.mxu0
        %v1361 = vadd.f32 %v479, %v1360
        %v1362 = vpop.f32.mrf.mxu0
        %v1363 = vadd.f32 %v483, %v1362
        %v1364 = vpop.f32.mrf.mxu0
        %v1365 = vadd.f32 %v479, %v1364
        %v1366 = vpop.f32.mrf.mxu0
        %v1367 = vadd.f32 %v483, %v1366
        %1368 = vmatprep.mubr.bf16.mxu0 %v729
        %1369 = vmatmul.mubr.bf16.gmra.mxu0 %v728
        %v1370 = vpop.f32.mrf.mxu0
        %v1371 = vadd.f32 %v479, %v1370
        %v1372 = vpop.f32.mrf.mxu0
        %v1373 = vadd.f32 %v483, %v1372
        %v1374 = vpop.f32.mrf.mxu0
        %v1375 = vadd.f32 %v479, %v1374
        %v1376 = vpop.f32.mrf.mxu0
        %v1377 = vadd.f32 %v483, %v1376
        %1378 = vmatprep.mubr.bf16.mxu0 %v731
        %1379 = vmatmul.mubr.bf16.gmra.mxu0 %v730
        %v1380 = vpop.f32.mrf.mxu0
        %v1381 = vadd.f32 %v479, %v1380
        %v1382 = vpop.f32.mrf.mxu0
        %v1383 = vadd.f32 %v483, %v1382
        %v1384 = vpop.f32.mrf.mxu0
        %v1385 = vadd.f32 %v479, %v1384
        %v1386 = vpop.f32.mrf.mxu0
        %v1387 = vadd.f32 %v483, %v1386
        %1388 = vmatprep.mubr.bf16.mxu0 %v733
        %1389 = vmatmul.mubr.bf16.gmra.mxu0 %v732
        %v1390 = vpop.f32.mrf.mxu0
        %v1391 = vadd.f32 %v479, %v1390
        %v1392 = vpop.f32.mrf.mxu0
        %v1393 = vadd.f32 %v483, %v1392
        %v1394 = vpop.f32.mrf.mxu0
        %v1395 = vadd.f32 %v479, %v1394
        %v1396 = vpop.f32.mrf.mxu0
        %v1397 = vadd.f32 %v483, %v1396
        %1398 = vmatprep.mubr.bf16.mxu0 %v735
        %1399 = vmatmul.mubr.bf16.gmra.mxu0 %v734
        %v1400 = vpop.f32.mrf.mxu0
        %v1401 = vadd.f32 %v479, %v1400
        %v1402 = vpop.f32.mrf.mxu0
        %v1403 = vadd.f32 %v483, %v1402
        %v1404 = vpop.f32.mrf.mxu0
        %v1405 = vadd.f32 %v479, %v1404
        %v1406 = vpop.f32.mrf.mxu0
        %v1407 = vadd.f32 %v483, %v1406
        %1408 = vmatprep.mubr.bf16.mxu0 %v737
        %1409 = vmatmul.mubr.bf16.gmra.mxu0 %v736
        %v1410 = vpop.f32.mrf.mxu0
        %v1411 = vadd.f32 %v479, %v1410
        %v1412 = vpop.f32.mrf.mxu0
        %v1413 = vadd.f32 %v483, %v1412
        %v1414 = vpop.f32.mrf.mxu0
        %v1415 = vadd.f32 %v479, %v1414
        %v1416 = vpop.f32.mrf.mxu0
        %v1417 = vadd.f32 %v483, %v1416
        %1418 = vmatprep.mubr.bf16.mxu0 %v739
        %1419 = vmatmul.mubr.bf16.gmra.mxu0 %v738
        %v1420 = vpop.f32.mrf.mxu0
        %v1421 = vadd.f32 %v479, %v1420
        %v1422 = vpop.f32.mrf.mxu0
        %v1423 = vadd.f32 %v483, %v1422
        %v1424 = vpop.f32.mrf.mxu0
        %v1425 = vadd.f32 %v479, %v1424
        %v1426 = vpop.f32.mrf.mxu0
        %v1427 = vadd.f32 %v483, %v1426
        %1428 = vmatprep.mubr.bf16.mxu0 %v741
        %1429 = vmatmul.mubr.bf16.gmra.mxu0 %v740
        %v1430 = vpop.f32.mrf.mxu0
        %v1431 = vadd.f32 %v479, %v1430
        %v1432 = vpop.f32.mrf.mxu0
        %v1433 = vadd.f32 %v483, %v1432
        %v1434 = vpop.f32.mrf.mxu0
        %v1435 = vadd.f32 %v479, %v1434
        %v1436 = vpop.f32.mrf.mxu0
        %v1437 = vadd.f32 %v483, %v1436
        %1438 = vmatprep.mubr.bf16.mxu0 %v743
        %1439 = vmatmul.mubr.bf16.gmra.mxu0 %v742
        %v1440 = vpop.f32.mrf.mxu0
        %v1441 = vadd.f32 %v479, %v1440
        %v1442 = vpop.f32.mrf.mxu0
        %v1443 = vadd.f32 %v483, %v1442
        %v1444 = vpop.f32.mrf.mxu0
        %v1445 = vadd.f32 %v479, %v1444
        %v1446 = vpop.f32.mrf.mxu0
        %v1447 = vadd.f32 %v483, %v1446
        %1448 = vmatprep.mubr.bf16.mxu0 %v745
        %1449 = vmatmul.mubr.bf16.gmra.mxu0 %v744
        %v1450 = vpop.f32.mrf.mxu0
        %v1451 = vadd.f32 %v479, %v1450
        %v1452 = vpop.f32.mrf.mxu0
        %v1453 = vadd.f32 %v483, %v1452
        %v1454 = vpop.f32.mrf.mxu0
        %v1455 = vadd.f32 %v479, %v1454
        %v1456 = vpop.f32.mrf.mxu0
        %v1457 = vadd.f32 %v483, %v1456
        %1458 = vmatprep.mubr.bf16.mxu0 %v747
        %1459 = vmatmul.mubr.bf16.gmra.mxu0 %v746
        %v1460 = vpop.f32.mrf.mxu0
        %v1461 = vadd.f32 %v479, %v1460
        %v1462 = vpop.f32.mrf.mxu0
        %v1463 = vadd.f32 %v483, %v1462
        %v1464 = vpop.f32.mrf.mxu0
        %v1465 = vadd.f32 %v479, %v1464
        %v1466 = vpop.f32.mrf.mxu0
        %v1467 = vadd.f32 %v483, %v1466
        %1468 = vmatprep.mubr.bf16.mxu0 %v749
        %1469 = vmatmul.mubr.bf16.gmra.mxu0 %v748
        %v1470 = vpop.f32.mrf.mxu0
        %v1471 = vadd.f32 %v479, %v1470
        %v1472 = vpop.f32.mrf.mxu0
        %v1473 = vadd.f32 %v483, %v1472
        %v1474 = vpop.f32.mrf.mxu0
        %v1475 = vadd.f32 %v479, %v1474
        %v1476 = vpop.f32.mrf.mxu0
        %v1477 = vadd.f32 %v483, %v1476
        %1478 = vmatprep.mubr.bf16.mxu0 %v751
        %1479 = vmatmul.mubr.bf16.gmra.mxu0 %v750
        %v1480 = vpop.f32.mrf.mxu0
        %v1481 = vadd.f32 %v479, %v1480
        %v1482 = vpop.f32.mrf.mxu0
        %v1483 = vadd.f32 %v483, %v1482
        %v1484 = vpop.f32.mrf.mxu0
        %v1485 = vadd.f32 %v479, %v1484
        %v1486 = vpop.f32.mrf.mxu0
        %v1487 = vadd.f32 %v483, %v1486
        %1488 = vdwg.mxu0
        %1489 = vmatprep.subr.bf16.mxu0 %v1039
        %1490 = vmatpush1.bf16.msra.mxu0 %v1038
        %1491 = vmatprep.subr.bf16.mxu0 %v1035
        %1492 = vmatpush1.bf16.msra.mxu0 %v1034
        %1493 = vmatprep.subr.bf16.mxu0 %v1031
        %1494 = vmatpush1.bf16.msra.mxu0 %v1030
        %1495 = vmatprep.subr.bf16.mxu0 %v1027
        %1496 = vmatpush1.bf16.msra.mxu0 %v1026
        %1497 = vmatprep.subr.bf16.mxu0 %v1023
        %1498 = vmatpush1.bf16.msra.mxu0 %v1022
        %1499 = vmatprep.subr.bf16.mxu0 %v1019
        %1500 = vmatpush1.bf16.msra.mxu0 %v1018
        %1501 = vmatprep.subr.bf16.mxu0 %v1015
        %1502 = vmatpush1.bf16.msra.mxu0 %v1014
        %1503 = vmatprep.subr.bf16.mxu0 %v1011
        %1504 = vmatpush1.bf16.msra.mxu0 %v1010
        %1505 = vmatprep.subr.bf16.mxu0 %v1071
        %1506 = vmatpush2.bf16.msra.mxu0 %v1070
        %1507 = vmatprep.subr.bf16.mxu0 %v1067
        %1508 = vmatpush2.bf16.msra.mxu0 %v1066
        %1509 = vmatprep.subr.bf16.mxu0 %v1063
        %1510 = vmatpush2.bf16.msra.mxu0 %v1062
        %1511 = vmatprep.subr.bf16.mxu0 %v1059
        %1512 = vmatpush2.bf16.msra.mxu0 %v1058
        %1513 = vmatprep.subr.bf16.mxu0 %v1055
        %1514 = vmatpush2.bf16.msra.mxu0 %v1054
        %1515 = vmatprep.subr.bf16.mxu0 %v1051
        %1516 = vmatpush2.bf16.msra.mxu0 %v1050
        %1517 = vmatprep.subr.bf16.mxu0 %v1047
        %1518 = vmatpush2.bf16.msra.mxu0 %v1046
        %1519 = vmatprep.subr.bf16.mxu0 %v1043
        %1520 = vmatpush2.bf16.msra.mxu0 %v1042
        %1521 = vmatprep.mubr.bf16.mxu0 %v689
        %1522 = vmatmul.mubr.bf16.gmra.mxu0 %v688
        %v1523 = vpop.f32.mrf.mxu0
        %v1524 = vadd.f32 %v487, %v1523
        %v1525 = vpop.f32.mrf.mxu0
        %v1526 = vadd.f32 %v491, %v1525
        %v1527 = vpop.f32.mrf.mxu0
        %v1528 = vadd.f32 %v487, %v1527
        %v1529 = vpop.f32.mrf.mxu0
        %v1530 = vadd.f32 %v491, %v1529
        %1531 = vmatprep.mubr.bf16.mxu0 %v691
        %1532 = vmatmul.mubr.bf16.gmra.mxu0 %v690
        %v1533 = vpop.f32.mrf.mxu0
        %v1534 = vadd.f32 %v487, %v1533
        %v1535 = vpop.f32.mrf.mxu0
        %v1536 = vadd.f32 %v491, %v1535
        %v1537 = vpop.f32.mrf.mxu0
        %v1538 = vadd.f32 %v487, %v1537
        %v1539 = vpop.f32.mrf.mxu0
        %v1540 = vadd.f32 %v491, %v1539
        %1541 = vmatprep.mubr.bf16.mxu0 %v693
        %1542 = vmatmul.mubr.bf16.gmra.mxu0 %v692
        %v1543 = vpop.f32.mrf.mxu0
        %v1544 = vadd.f32 %v487, %v1543
        %v1545 = vpop.f32.mrf.mxu0
        %v1546 = vadd.f32 %v491, %v1545
        %v1547 = vpop.f32.mrf.mxu0
        %v1548 = vadd.f32 %v487, %v1547
        %v1549 = vpop.f32.mrf.mxu0
        %v1550 = vadd.f32 %v491, %v1549
        %1551 = vmatprep.mubr.bf16.mxu0 %v695
        %1552 = vmatmul.mubr.bf16.gmra.mxu0 %v694
        %v1553 = vpop.f32.mrf.mxu0
        %v1554 = vadd.f32 %v487, %v1553
        %v1555 = vpop.f32.mrf.mxu0
        %v1556 = vadd.f32 %v491, %v1555
        %v1557 = vpop.f32.mrf.mxu0
        %v1558 = vadd.f32 %v487, %v1557
        %v1559 = vpop.f32.mrf.mxu0
        %v1560 = vadd.f32 %v491, %v1559
        %1561 = vmatprep.mubr.bf16.mxu0 %v697
        %1562 = vmatmul.mubr.bf16.gmra.mxu0 %v696
        %v1563 = vpop.f32.mrf.mxu0
        %v1564 = vadd.f32 %v487, %v1563
        %v1565 = vpop.f32.mrf.mxu0
        %v1566 = vadd.f32 %v491, %v1565
        %v1567 = vpop.f32.mrf.mxu0
        %v1568 = vadd.f32 %v487, %v1567
        %v1569 = vpop.f32.mrf.mxu0
        %v1570 = vadd.f32 %v491, %v1569
        %1571 = vmatprep.mubr.bf16.mxu0 %v699
        %1572 = vmatmul.mubr.bf16.gmra.mxu0 %v698
        %v1573 = vpop.f32.mrf.mxu0
        %v1574 = vadd.f32 %v487, %v1573
        %v1575 = vpop.f32.mrf.mxu0
        %v1576 = vadd.f32 %v491, %v1575
        %v1577 = vpop.f32.mrf.mxu0
        %v1578 = vadd.f32 %v487, %v1577
        %v1579 = vpop.f32.mrf.mxu0
        %v1580 = vadd.f32 %v491, %v1579
        %1581 = vmatprep.mubr.bf16.mxu0 %v701
        %1582 = vmatmul.mubr.bf16.gmra.mxu0 %v700
        %v1583 = vpop.f32.mrf.mxu0
        %v1584 = vadd.f32 %v487, %v1583
        %v1585 = vpop.f32.mrf.mxu0
        %v1586 = vadd.f32 %v491, %v1585
        %v1587 = vpop.f32.mrf.mxu0
        %v1588 = vadd.f32 %v487, %v1587
        %v1589 = vpop.f32.mrf.mxu0
        %v1590 = vadd.f32 %v491, %v1589
        %1591 = vmatprep.mubr.bf16.mxu0 %v703
        %1592 = vmatmul.mubr.bf16.gmra.mxu0 %v702
        %v1593 = vpop.f32.mrf.mxu0
        %v1594 = vadd.f32 %v487, %v1593
        %v1595 = vpop.f32.mrf.mxu0
        %v1596 = vadd.f32 %v491, %v1595
        %v1597 = vpop.f32.mrf.mxu0
        %v1598 = vadd.f32 %v487, %v1597
        %v1599 = vpop.f32.mrf.mxu0
        %v1600 = vadd.f32 %v491, %v1599
        %1601 = vmatprep.mubr.bf16.mxu0 %v705
        %1602 = vmatmul.mubr.bf16.gmra.mxu0 %v704
        %v1603 = vpop.f32.mrf.mxu0
        %v1604 = vadd.f32 %v487, %v1603
        %v1605 = vpop.f32.mrf.mxu0
        %v1606 = vadd.f32 %v491, %v1605
        %v1607 = vpop.f32.mrf.mxu0
        %v1608 = vadd.f32 %v487, %v1607
        %v1609 = vpop.f32.mrf.mxu0
        %v1610 = vadd.f32 %v491, %v1609
        %1611 = vmatprep.mubr.bf16.mxu0 %v707
        %1612 = vmatmul.mubr.bf16.gmra.mxu0 %v706
        %v1613 = vpop.f32.mrf.mxu0
        %v1614 = vadd.f32 %v487, %v1613
        %v1615 = vpop.f32.mrf.mxu0
        %v1616 = vadd.f32 %v491, %v1615
        %v1617 = vpop.f32.mrf.mxu0
        %v1618 = vadd.f32 %v487, %v1617
        %v1619 = vpop.f32.mrf.mxu0
        %v1620 = vadd.f32 %v491, %v1619
        %1621 = vmatprep.mubr.bf16.mxu0 %v709
        %1622 = vmatmul.mubr.bf16.gmra.mxu0 %v708
        %v1623 = vpop.f32.mrf.mxu0
        %v1624 = vadd.f32 %v487, %v1623
        %v1625 = vpop.f32.mrf.mxu0
        %v1626 = vadd.f32 %v491, %v1625
        %v1627 = vpop.f32.mrf.mxu0
        %v1628 = vadd.f32 %v487, %v1627
        %v1629 = vpop.f32.mrf.mxu0
        %v1630 = vadd.f32 %v491, %v1629
        %1631 = vmatprep.mubr.bf16.mxu0 %v711
        %1632 = vmatmul.mubr.bf16.gmra.mxu0 %v710
        %v1633 = vpop.f32.mrf.mxu0
        %v1634 = vadd.f32 %v487, %v1633
        %v1635 = vpop.f32.mrf.mxu0
        %v1636 = vadd.f32 %v491, %v1635
        %v1637 = vpop.f32.mrf.mxu0
        %v1638 = vadd.f32 %v487, %v1637
        %v1639 = vpop.f32.mrf.mxu0
        %v1640 = vadd.f32 %v491, %v1639
        %1641 = vmatprep.mubr.bf16.mxu0 %v713
        %1642 = vmatmul.mubr.bf16.gmra.mxu0 %v712
        %v1643 = vpop.f32.mrf.mxu0
        %v1644 = vadd.f32 %v487, %v1643
        %v1645 = vpop.f32.mrf.mxu0
        %v1646 = vadd.f32 %v491, %v1645
        %v1647 = vpop.f32.mrf.mxu0
        %v1648 = vadd.f32 %v487, %v1647
        %v1649 = vpop.f32.mrf.mxu0
        %v1650 = vadd.f32 %v491, %v1649
        %1651 = vmatprep.mubr.bf16.mxu0 %v715
        %1652 = vmatmul.mubr.bf16.gmra.mxu0 %v714
        %v1653 = vpop.f32.mrf.mxu0
        %v1654 = vadd.f32 %v487, %v1653
        %v1655 = vpop.f32.mrf.mxu0
        %v1656 = vadd.f32 %v491, %v1655
        %v1657 = vpop.f32.mrf.mxu0
        %v1658 = vadd.f32 %v487, %v1657
        %v1659 = vpop.f32.mrf.mxu0
        %v1660 = vadd.f32 %v491, %v1659
        %1661 = vmatprep.mubr.bf16.mxu0 %v717
        %1662 = vmatmul.mubr.bf16.gmra.mxu0 %v716
        %v1663 = vpop.f32.mrf.mxu0
        %v1664 = vadd.f32 %v487, %v1663
        %v1665 = vpop.f32.mrf.mxu0
        %v1666 = vadd.f32 %v491, %v1665
        %v1667 = vpop.f32.mrf.mxu0
        %v1668 = vadd.f32 %v487, %v1667
        %v1669 = vpop.f32.mrf.mxu0
        %v1670 = vadd.f32 %v491, %v1669
        %1671 = vmatprep.mubr.bf16.mxu0 %v719
        %1672 = vmatmul.mubr.bf16.gmra.mxu0 %v718
        %v1673 = vpop.f32.mrf.mxu0
        %v1674 = vadd.f32 %v487, %v1673
        %v1675 = vpop.f32.mrf.mxu0
        %v1676 = vadd.f32 %v491, %v1675
        %v1677 = vpop.f32.mrf.mxu0
        %v1678 = vadd.f32 %v487, %v1677
        %v1679 = vpop.f32.mrf.mxu0
        %v1680 = vadd.f32 %v491, %v1679
        %1681 = vmatprep.mubr.bf16.mxu0 %v721
        %1682 = vmatmul.mubr.bf16.gmra.mxu0 %v720
        %v1683 = vpop.f32.mrf.mxu0
        %v1684 = vadd.f32 %v487, %v1683
        %v1685 = vpop.f32.mrf.mxu0
        %v1686 = vadd.f32 %v491, %v1685
        %v1687 = vpop.f32.mrf.mxu0
        %v1688 = vadd.f32 %v487, %v1687
        %v1689 = vpop.f32.mrf.mxu0
        %v1690 = vadd.f32 %v491, %v1689
        %1691 = vmatprep.mubr.bf16.mxu0 %v723
        %1692 = vmatmul.mubr.bf16.gmra.mxu0 %v722
        %v1693 = vpop.f32.mrf.mxu0
        %v1694 = vadd.f32 %v487, %v1693
        %v1695 = vpop.f32.mrf.mxu0
        %v1696 = vadd.f32 %v491, %v1695
        %v1697 = vpop.f32.mrf.mxu0
        %v1698 = vadd.f32 %v487, %v1697
        %v1699 = vpop.f32.mrf.mxu0
        %v1700 = vadd.f32 %v491, %v1699
        %1701 = vmatprep.mubr.bf16.mxu0 %v725
        %1702 = vmatmul.mubr.bf16.gmra.mxu0 %v724
        %v1703 = vpop.f32.mrf.mxu0
        %v1704 = vadd.f32 %v487, %v1703
        %v1705 = vpop.f32.mrf.mxu0
        %v1706 = vadd.f32 %v491, %v1705
        %v1707 = vpop.f32.mrf.mxu0
        %v1708 = vadd.f32 %v487, %v1707
        %v1709 = vpop.f32.mrf.mxu0
        %v1710 = vadd.f32 %v491, %v1709
        %1711 = vmatprep.mubr.bf16.mxu0 %v727
        %1712 = vmatmul.mubr.bf16.gmra.mxu0 %v726
        %v1713 = vpop.f32.mrf.mxu0
        %v1714 = vadd.f32 %v487, %v1713
        %v1715 = vpop.f32.mrf.mxu0
        %v1716 = vadd.f32 %v491, %v1715
        %v1717 = vpop.f32.mrf.mxu0
        %v1718 = vadd.f32 %v487, %v1717
        %v1719 = vpop.f32.mrf.mxu0
        %v1720 = vadd.f32 %v491, %v1719
        %1721 = vmatprep.mubr.bf16.mxu0 %v729
        %1722 = vmatmul.mubr.bf16.gmra.mxu0 %v728
        %v1723 = vpop.f32.mrf.mxu0
        %v1724 = vadd.f32 %v487, %v1723
        %v1725 = vpop.f32.mrf.mxu0
        %v1726 = vadd.f32 %v491, %v1725
        %v1727 = vpop.f32.mrf.mxu0
        %v1728 = vadd.f32 %v487, %v1727
        %v1729 = vpop.f32.mrf.mxu0
        %v1730 = vadd.f32 %v491, %v1729
        %1731 = vmatprep.mubr.bf16.mxu0 %v731
        %1732 = vmatmul.mubr.bf16.gmra.mxu0 %v730
        %v1733 = vpop.f32.mrf.mxu0
        %v1734 = vadd.f32 %v487, %v1733
        %v1735 = vpop.f32.mrf.mxu0
        %v1736 = vadd.f32 %v491, %v1735
        %v1737 = vpop.f32.mrf.mxu0
        %v1738 = vadd.f32 %v487, %v1737
        %v1739 = vpop.f32.mrf.mxu0
        %v1740 = vadd.f32 %v491, %v1739
        %1741 = vmatprep.mubr.bf16.mxu0 %v733
        %1742 = vmatmul.mubr.bf16.gmra.mxu0 %v732
        %v1743 = vpop.f32.mrf.mxu0
        %v1744 = vadd.f32 %v487, %v1743
        %v1745 = vpop.f32.mrf.mxu0
        %v1746 = vadd.f32 %v491, %v1745
        %v1747 = vpop.f32.mrf.mxu0
        %v1748 = vadd.f32 %v487, %v1747
        %v1749 = vpop.f32.mrf.mxu0
        %v1750 = vadd.f32 %v491, %v1749
        %1751 = vmatprep.mubr.bf16.mxu0 %v735
        %1752 = vmatmul.mubr.bf16.gmra.mxu0 %v734
        %v1753 = vpop.f32.mrf.mxu0
        %v1754 = vadd.f32 %v487, %v1753
        %v1755 = vpop.f32.mrf.mxu0
        %v1756 = vadd.f32 %v491, %v1755
        %v1757 = vpop.f32.mrf.mxu0
        %v1758 = vadd.f32 %v487, %v1757
        %v1759 = vpop.f32.mrf.mxu0
        %v1760 = vadd.f32 %v491, %v1759
        %1761 = vmatprep.mubr.bf16.mxu0 %v737
        %1762 = vmatmul.mubr.bf16.gmra.mxu0 %v736
        %v1763 = vpop.f32.mrf.mxu0
        %v1764 = vadd.f32 %v487, %v1763
        %v1765 = vpop.f32.mrf.mxu0
        %v1766 = vadd.f32 %v491, %v1765
        %v1767 = vpop.f32.mrf.mxu0
        %v1768 = vadd.f32 %v487, %v1767
        %v1769 = vpop.f32.mrf.mxu0
        %v1770 = vadd.f32 %v491, %v1769
        %1771 = vmatprep.mubr.bf16.mxu0 %v739
        %1772 = vmatmul.mubr.bf16.gmra.mxu0 %v738
        %v1773 = vpop.f32.mrf.mxu0
        %v1774 = vadd.f32 %v487, %v1773
        %v1775 = vpop.f32.mrf.mxu0
        %v1776 = vadd.f32 %v491, %v1775
        %v1777 = vpop.f32.mrf.mxu0
        %v1778 = vadd.f32 %v487, %v1777
        %v1779 = vpop.f32.mrf.mxu0
        %v1780 = vadd.f32 %v491, %v1779
        %1781 = vmatprep.mubr.bf16.mxu0 %v741
        %1782 = vmatmul.mubr.bf16.gmra.mxu0 %v740
        %v1783 = vpop.f32.mrf.mxu0
        %v1784 = vadd.f32 %v487, %v1783
        %v1785 = vpop.f32.mrf.mxu0
        %v1786 = vadd.f32 %v491, %v1785
        %v1787 = vpop.f32.mrf.mxu0
        %v1788 = vadd.f32 %v487, %v1787
        %v1789 = vpop.f32.mrf.mxu0
        %v1790 = vadd.f32 %v491, %v1789
        %1791 = vmatprep.mubr.bf16.mxu0 %v743
        %1792 = vmatmul.mubr.bf16.gmra.mxu0 %v742
        %v1793 = vpop.f32.mrf.mxu0
        %v1794 = vadd.f32 %v487, %v1793
        %v1795 = vpop.f32.mrf.mxu0
        %v1796 = vadd.f32 %v491, %v1795
        %v1797 = vpop.f32.mrf.mxu0
        %v1798 = vadd.f32 %v487, %v1797
        %v1799 = vpop.f32.mrf.mxu0
        %v1800 = vadd.f32 %v491, %v1799
        %1801 = vmatprep.mubr.bf16.mxu0 %v745
        %1802 = vmatmul.mubr.bf16.gmra.mxu0 %v744
        %v1803 = vpop.f32.mrf.mxu0
        %v1804 = vadd.f32 %v487, %v1803
        %v1805 = vpop.f32.mrf.mxu0
        %v1806 = vadd.f32 %v491, %v1805
        %v1807 = vpop.f32.mrf.mxu0
        %v1808 = vadd.f32 %v487, %v1807
        %v1809 = vpop.f32.mrf.mxu0
        %v1810 = vadd.f32 %v491, %v1809
        %1811 = vmatprep.mubr.bf16.mxu0 %v747
        %1812 = vmatmul.mubr.bf16.gmra.mxu0 %v746
        %v1813 = vpop.f32.mrf.mxu0
        %v1814 = vadd.f32 %v487, %v1813
        %v1815 = vpop.f32.mrf.mxu0
        %v1816 = vadd.f32 %v491, %v1815
        %v1817 = vpop.f32.mrf.mxu0
        %v1818 = vadd.f32 %v487, %v1817
        %v1819 = vpop.f32.mrf.mxu0
        %v1820 = vadd.f32 %v491, %v1819
        %1821 = vmatprep.mubr.bf16.mxu0 %v749
        %1822 = vmatmul.mubr.bf16.gmra.mxu0 %v748
        %v1823 = vpop.f32.mrf.mxu0
        %v1824 = vadd.f32 %v487, %v1823
        %v1825 = vpop.f32.mrf.mxu0
        %v1826 = vadd.f32 %v491, %v1825
        %v1827 = vpop.f32.mrf.mxu0
        %v1828 = vadd.f32 %v487, %v1827
        %v1829 = vpop.f32.mrf.mxu0
        %v1830 = vadd.f32 %v491, %v1829
        %1831 = vmatprep.mubr.bf16.mxu0 %v751
        %1832 = vmatmul.mubr.bf16.gmra.mxu0 %v750
        %v1833 = vpop.f32.mrf.mxu0
        %v1834 = vadd.f32 %v487, %v1833
        %v1835 = vpop.f32.mrf.mxu0
        %v1836 = vadd.f32 %v491, %v1835
        %v1837 = vpop.f32.mrf.mxu0
        %v1838 = vadd.f32 %v487, %v1837
        %v1839 = vpop.f32.mrf.mxu0
        %v1840 = vadd.f32 %v491, %v1839
        %1841 = vdwg.mxu0
        %v1842 = vpack.c.bf16 %v1175, %v1171
        %v1843 = vpack.c.bf16 %v1185, %v1181
        %v1844 = vpack.c.bf16 %v1195, %v1191
        %v1845 = vpack.c.bf16 %v1205, %v1201
        %v1846 = vpack.c.bf16 %v1215, %v1211
        %v1847 = vpack.c.bf16 %v1225, %v1221
        %v1848 = vpack.c.bf16 %v1235, %v1231
        %v1849 = vpack.c.bf16 %v1245, %v1241
        %v1850 = vpack.c.bf16 %v1255, %v1251
        %v1851 = vpack.c.bf16 %v1265, %v1261
        %v1852 = vpack.c.bf16 %v1275, %v1271
        %v1853 = vpack.c.bf16 %v1285, %v1281
        %v1854 = vpack.c.bf16 %v1295, %v1291
        %v1855 = vpack.c.bf16 %v1305, %v1301
        %v1856 = vpack.c.bf16 %v1315, %v1311
        %v1857 = vpack.c.bf16 %v1325, %v1321
        %v1858 = vpack.c.bf16 %v1335, %v1331
        %v1859 = vpack.c.bf16 %v1345, %v1341
        %v1860 = vpack.c.bf16 %v1355, %v1351
        %v1861 = vpack.c.bf16 %v1365, %v1361
        %v1862 = vpack.c.bf16 %v1375, %v1371
        %v1863 = vpack.c.bf16 %v1385, %v1381
        %v1864 = vpack.c.bf16 %v1395, %v1391
        %v1865 = vpack.c.bf16 %v1405, %v1401
        %v1866 = vpack.c.bf16 %v1415, %v1411
        %v1867 = vpack.c.bf16 %v1425, %v1421
        %v1868 = vpack.c.bf16 %v1435, %v1431
        %v1869 = vpack.c.bf16 %v1445, %v1441
        %v1870 = vpack.c.bf16 %v1455, %v1451
        %v1871 = vpack.c.bf16 %v1465, %v1461
        %v1872 = vpack.c.bf16 %v1475, %v1471
        %v1873 = vpack.c.bf16 %v1485, %v1481
        %v1874 = vpack.c.bf16 %v1177, %v1173
        %v1875 = vpack.c.bf16 %v1187, %v1183
        %v1876 = vpack.c.bf16 %v1197, %v1193
        %v1877 = vpack.c.bf16 %v1207, %v1203
        %v1878 = vpack.c.bf16 %v1217, %v1213
        %v1879 = vpack.c.bf16 %v1227, %v1223
        %v1880 = vpack.c.bf16 %v1237, %v1233
        %v1881 = vpack.c.bf16 %v1247, %v1243
        %v1882 = vpack.c.bf16 %v1257, %v1253
        %v1883 = vpack.c.bf16 %v1267, %v1263
        %v1884 = vpack.c.bf16 %v1277, %v1273
        %v1885 = vpack.c.bf16 %v1287, %v1283
        %v1886 = vpack.c.bf16 %v1297, %v1293
        %v1887 = vpack.c.bf16 %v1307, %v1303
        %v1888 = vpack.c.bf16 %v1317, %v1313
        %v1889 = vpack.c.bf16 %v1327, %v1323
        %v1890 = vpack.c.bf16 %v1337, %v1333
        %v1891 = vpack.c.bf16 %v1347, %v1343
        %v1892 = vpack.c.bf16 %v1357, %v1353
        %v1893 = vpack.c.bf16 %v1367, %v1363
        %v1894 = vpack.c.bf16 %v1377, %v1373
        %v1895 = vpack.c.bf16 %v1387, %v1383
        %v1896 = vpack.c.bf16 %v1397, %v1393
        %v1897 = vpack.c.bf16 %v1407, %v1403
        %v1898 = vpack.c.bf16 %v1417, %v1413
        %v1899 = vpack.c.bf16 %v1427, %v1423
        %v1900 = vpack.c.bf16 %v1437, %v1433
        %v1901 = vpack.c.bf16 %v1447, %v1443
        %v1902 = vpack.c.bf16 %v1457, %v1453
        %v1903 = vpack.c.bf16 %v1467, %v1463
        %v1904 = vpack.c.bf16 %v1477, %v1473
        %v1905 = vpack.c.bf16 %v1487, %v1483
        %v1906 = vpack.c.bf16 %v1528, %v1524
        %v1907 = vpack.c.bf16 %v1530, %v1526
        %v1908 = vpack.c.bf16 %v1538, %v1534
        %v1909 = vpack.c.bf16 %v1540, %v1536
        %v1910 = vpack.c.bf16 %v1548, %v1544
        %v1911 = vpack.c.bf16 %v1550, %v1546
        %v1912 = vpack.c.bf16 %v1558, %v1554
        %v1913 = vpack.c.bf16 %v1560, %v1556
        %v1914 = vpack.c.bf16 %v1568, %v1564
        %v1915 = vpack.c.bf16 %v1570, %v1566
        %v1916 = vpack.c.bf16 %v1578, %v1574
        %v1917 = vpack.c.bf16 %v1580, %v1576
        %v1918 = vpack.c.bf16 %v1588, %v1584
        %v1919 = vpack.c.bf16 %v1590, %v1586
        %v1920 = vpack.c.bf16 %v1598, %v1594
        %v1921 = vpack.c.bf16 %v1600, %v1596
        %v1922 = vpack.c.bf16 %v1608, %v1604
        %v1923 = vpack.c.bf16 %v1610, %v1606
        %v1924 = vpack.c.bf16 %v1618, %v1614
        %v1925 = vpack.c.bf16 %v1620, %v1616
        %v1926 = vpack.c.bf16 %v1628, %v1624
        %v1927 = vpack.c.bf16 %v1630, %v1626
        %v1928 = vpack.c.bf16 %v1638, %v1634
        %v1929 = vpack.c.bf16 %v1640, %v1636
        %v1930 = vpack.c.bf16 %v1648, %v1644
        %v1931 = vpack.c.bf16 %v1650, %v1646
        %v1932 = vpack.c.bf16 %v1658, %v1654
        %v1933 = vpack.c.bf16 %v1660, %v1656
        %v1934 = vpack.c.bf16 %v1668, %v1664
        %v1935 = vpack.c.bf16 %v1670, %v1666
        %v1936 = vpack.c.bf16 %v1678, %v1674
        %v1937 = vpack.c.bf16 %v1680, %v1676
        %v1938 = vpack.c.bf16 %v1688, %v1684
        %v1939 = vpack.c.bf16 %v1690, %v1686
        %v1940 = vpack.c.bf16 %v1698, %v1694
        %v1941 = vpack.c.bf16 %v1700, %v1696
        %v1942 = vpack.c.bf16 %v1708, %v1704
        %v1943 = vpack.c.bf16 %v1710, %v1706
        %v1944 = vpack.c.bf16 %v1718, %v1714
        %v1945 = vpack.c.bf16 %v1720, %v1716
        %v1946 = vpack.c.bf16 %v1728, %v1724
        %v1947 = vpack.c.bf16 %v1730, %v1726
        %v1948 = vpack.c.bf16 %v1738, %v1734
        %v1949 = vpack.c.bf16 %v1740, %v1736
        %v1950 = vpack.c.bf16 %v1748, %v1744
        %v1951 = vpack.c.bf16 %v1750, %v1746
        %v1952 = vpack.c.bf16 %v1758, %v1754
        %v1953 = vpack.c.bf16 %v1760, %v1756
        %v1954 = vpack.c.bf16 %v1768, %v1764
        %v1955 = vpack.c.bf16 %v1770, %v1766
        %v1956 = vpack.c.bf16 %v1778, %v1774
        %v1957 = vpack.c.bf16 %v1780, %v1776
        %v1958 = vpack.c.bf16 %v1788, %v1784
        %v1959 = vpack.c.bf16 %v1790, %v1786
        %v1960 = vpack.c.bf16 %v1798, %v1794
        %v1961 = vpack.c.bf16 %v1800, %v1796
        %v1962 = vpack.c.bf16 %v1808, %v1804
        %v1963 = vpack.c.bf16 %v1810, %v1806
        %v1964 = vpack.c.bf16 %v1818, %v1814
        %v1965 = vpack.c.bf16 %v1820, %v1816
        %v1966 = vpack.c.bf16 %v1828, %v1824
        %v1967 = vpack.c.bf16 %v1830, %v1826
        %v1968 = vpack.c.bf16 %v1838, %v1834
        %v1969 = vpack.c.bf16 %v1840, %v1836
        %1970 = vmatprep.subr.bf16.mxu0 0
        %1971 = vmatpush1.bf16.xpose.msra.mxu0 0
        %1972 = vmatprep.subr.bf16.mxu0 0
        %1973 = vmatpush1.bf16.xpose.msra.mxu0 0
        %1974 = vmatprep.subr.bf16.mxu0 0
        %1975 = vmatpush1.bf16.xpose.msra.mxu0 0
        %1976 = vmatprep.subr.bf16.mxu0 0
        %1977 = vmatpush1.bf16.xpose.msra.mxu0 0
        %1978 = vmatprep.subr.bf16.mxu0 0
        %1979 = vmatpush1.bf16.xpose.msra.mxu0 %v1877
        %1980 = vmatprep.subr.bf16.mxu0 0
        %1981 = vmatpush1.bf16.xpose.msra.mxu0 %v1876
        %1982 = vmatprep.subr.bf16.mxu0 0
        %1983 = vmatpush1.bf16.xpose.msra.mxu0 %v1875
        %1984 = vmatprep.subr.bf16.mxu0 0
        %1985 = vmatpush1.bf16.xpose.msra.mxu0 %v1874
        %1986 = vmatprep.subr.bf16.mxu0 0
        %1987 = vmatpush2.bf16.xpose.msra.mxu0 0
        %1988 = vmatprep.subr.bf16.mxu0 0
        %1989 = vmatpush2.bf16.xpose.msra.mxu0 0
        %1990 = vmatprep.subr.bf16.mxu0 0
        %1991 = vmatpush2.bf16.xpose.msra.mxu0 0
        %1992 = vmatprep.subr.bf16.mxu0 0
        %1993 = vmatpush2.bf16.xpose.msra.mxu0 0
        %1994 = vmatprep.subr.bf16.mxu0 0
        %1995 = vmatpush2.bf16.xpose.msra.mxu0 0
        %1996 = vmatprep.subr.bf16.mxu0 0
        %1997 = vmatpush2.bf16.xpose.msra.mxu0 0
        %1998 = vmatprep.subr.bf16.mxu0 0
        %1999 = vmatpush2.bf16.xpose.msra.mxu0 0
        %2000 = vmatprep.subr.bf16.mxu0 0
        %2001 = vmatpush2.bf16.xpose.msra.mxu0 0
        %2002 = vmatprep.mubr.bf16.mxu0 0
        %2003 = vmatmul.mubr.bf16.gmra.mxu0 %v1842
        %v2004 = vpop.f32.mrf.mxu0
        %v2005 = vadd.f32 0.0, %v2004
        %v2006 = vpop.f32.mrf.mxu0
        %v2007 = vpop.f32.mrf.mxu0
        %v2008 = vadd.f32 0.0, %v2007
        %v2009 = vpop.f32.mrf.mxu0
        %2010 = vmatprep.mubr.bf16.mxu0 0
        %2011 = vmatmul.mubr.bf16.gmra.mxu0 %v1843
        %v2012 = vpop.f32.mrf.mxu0
        %v2013 = vadd.f32 0.0, %v2012
        %v2014 = vpop.f32.mrf.mxu0
        %v2015 = vpop.f32.mrf.mxu0
        %v2016 = vadd.f32 0.0, %v2015
        %v2017 = vpop.f32.mrf.mxu0
        %2018 = vmatprep.mubr.bf16.mxu0 0
        %2019 = vmatmul.mubr.bf16.gmra.mxu0 %v1844
        %v2020 = vpop.f32.mrf.mxu0
        %v2021 = vadd.f32 0.0, %v2020
        %v2022 = vpop.f32.mrf.mxu0
        %v2023 = vpop.f32.mrf.mxu0
        %v2024 = vadd.f32 0.0, %v2023
        %v2025 = vpop.f32.mrf.mxu0
        %2026 = vmatprep.mubr.bf16.mxu0 0
        %2027 = vmatmul.mubr.bf16.gmra.mxu0 %v1845
        %v2028 = vpop.f32.mrf.mxu0
        %v2029 = vadd.f32 0.0, %v2028
        %v2030 = vpop.f32.mrf.mxu0
        %v2031 = vpop.f32.mrf.mxu0
        %v2032 = vadd.f32 0.0, %v2031
        %v2033 = vpop.f32.mrf.mxu0
        %2034 = vdwg.mxu0
        %2035 = vmatprep.subr.bf16.mxu0 0
        %2036 = vmatpush1.bf16.xpose.msra.mxu0 0
        %2037 = vmatprep.subr.bf16.mxu0 0
        %2038 = vmatpush1.bf16.xpose.msra.mxu0 0
        %2039 = vmatprep.subr.bf16.mxu0 0
        %2040 = vmatpush1.bf16.xpose.msra.mxu0 0
        %2041 = vmatprep.subr.bf16.mxu0 0
        %2042 = vmatpush1.bf16.xpose.msra.mxu0 0
        %2043 = vmatprep.subr.bf16.mxu0 0
        %2044 = vmatpush1.bf16.xpose.msra.mxu0 %v1881
        %2045 = vmatprep.subr.bf16.mxu0 0
        %2046 = vmatpush1.bf16.xpose.msra.mxu0 %v1880
        %2047 = vmatprep.subr.bf16.mxu0 0
        %2048 = vmatpush1.bf16.xpose.msra.mxu0 %v1879
        %2049 = vmatprep.subr.bf16.mxu0 0
        %2050 = vmatpush1.bf16.xpose.msra.mxu0 %v1878
        %2051 = vmatprep.subr.bf16.mxu0 0
        %2052 = vmatpush2.bf16.xpose.msra.mxu0 0
        %2053 = vmatprep.subr.bf16.mxu0 0
        %2054 = vmatpush2.bf16.xpose.msra.mxu0 0
        %2055 = vmatprep.subr.bf16.mxu0 0
        %2056 = vmatpush2.bf16.xpose.msra.mxu0 0
        %2057 = vmatprep.subr.bf16.mxu0 0
        %2058 = vmatpush2.bf16.xpose.msra.mxu0 0
        %2059 = vmatprep.subr.bf16.mxu0 0
        %2060 = vmatpush2.bf16.xpose.msra.mxu0 0
        %2061 = vmatprep.subr.bf16.mxu0 0
        %2062 = vmatpush2.bf16.xpose.msra.mxu0 0
        %2063 = vmatprep.subr.bf16.mxu0 0
        %2064 = vmatpush2.bf16.xpose.msra.mxu0 0
        %2065 = vmatprep.subr.bf16.mxu0 0
        %2066 = vmatpush2.bf16.xpose.msra.mxu0 0
        %2067 = vmatprep.mubr.bf16.mxu0 0
        %2068 = vmatmul.mubr.bf16.gmra.mxu0 %v1846
        %v2069 = vpop.f32.mrf.mxu0
        %v2070 = vadd.f32 0.0, %v2069
        %v2071 = vpop.f32.mrf.mxu0
        %v2072 = vpop.f32.mrf.mxu0
        %v2073 = vadd.f32 0.0, %v2072
        %v2074 = vpop.f32.mrf.mxu0
        %2075 = vmatprep.mubr.bf16.mxu0 0
        %2076 = vmatmul.mubr.bf16.gmra.mxu0 %v1847
        %v2077 = vpop.f32.mrf.mxu0
        %v2078 = vadd.f32 0.0, %v2077
        %v2079 = vpop.f32.mrf.mxu0
        %v2080 = vpop.f32.mrf.mxu0
        %v2081 = vadd.f32 0.0, %v2080
        %v2082 = vpop.f32.mrf.mxu0
        %2083 = vmatprep.mubr.bf16.mxu0 0
        %2084 = vmatmul.mubr.bf16.gmra.mxu0 %v1848
        %v2085 = vpop.f32.mrf.mxu0
        %v2086 = vadd.f32 0.0, %v2085
        %v2087 = vpop.f32.mrf.mxu0
        %v2088 = vpop.f32.mrf.mxu0
        %v2089 = vadd.f32 0.0, %v2088
        %v2090 = vpop.f32.mrf.mxu0
        %2091 = vmatprep.mubr.bf16.mxu0 0
        %2092 = vmatmul.mubr.bf16.gmra.mxu0 %v1849
        %v2093 = vpop.f32.mrf.mxu0
        %v2094 = vadd.f32 0.0, %v2093
        %v2095 = vpop.f32.mrf.mxu0
        %v2096 = vpop.f32.mrf.mxu0
        %v2097 = vadd.f32 0.0, %v2096
        %v2098 = vpop.f32.mrf.mxu0
        %2099 = vdwg.mxu0
        %2100 = vmatprep.subr.bf16.mxu0 0
        %2101 = vmatpush1.bf16.xpose.msra.mxu0 0
        %2102 = vmatprep.subr.bf16.mxu0 0
        %2103 = vmatpush1.bf16.xpose.msra.mxu0 0
        %2104 = vmatprep.subr.bf16.mxu0 0
        %2105 = vmatpush1.bf16.xpose.msra.mxu0 0
        %2106 = vmatprep.subr.bf16.mxu0 0
        %2107 = vmatpush1.bf16.xpose.msra.mxu0 0
        %2108 = vmatprep.subr.bf16.mxu0 0
        %2109 = vmatpush1.bf16.xpose.msra.mxu0 %v1885
        %2110 = vmatprep.subr.bf16.mxu0 0
        %2111 = vmatpush1.bf16.xpose.msra.mxu0 %v1884
        %2112 = vmatprep.subr.bf16.mxu0 0
        %2113 = vmatpush1.bf16.xpose.msra.mxu0 %v1883
        %2114 = vmatprep.subr.bf16.mxu0 0
        %2115 = vmatpush1.bf16.xpose.msra.mxu0 %v1882
        %2116 = vmatprep.subr.bf16.mxu0 0
        %2117 = vmatpush2.bf16.xpose.msra.mxu0 0
        %2118 = vmatprep.subr.bf16.mxu0 0
        %2119 = vmatpush2.bf16.xpose.msra.mxu0 0
        %2120 = vmatprep.subr.bf16.mxu0 0
        %2121 = vmatpush2.bf16.xpose.msra.mxu0 0
        %2122 = vmatprep.subr.bf16.mxu0 0
        %2123 = vmatpush2.bf16.xpose.msra.mxu0 0
        %2124 = vmatprep.subr.bf16.mxu0 0
        %2125 = vmatpush2.bf16.xpose.msra.mxu0 0
        %2126 = vmatprep.subr.bf16.mxu0 0
        %2127 = vmatpush2.bf16.xpose.msra.mxu0 0
        %2128 = vmatprep.subr.bf16.mxu0 0
        %2129 = vmatpush2.bf16.xpose.msra.mxu0 0
        %2130 = vmatprep.subr.bf16.mxu0 0
        %2131 = vmatpush2.bf16.xpose.msra.mxu0 0
        %2132 = vmatprep.mubr.bf16.mxu0 0
        %2133 = vmatmul.mubr.bf16.gmra.mxu0 %v1850
        %v2134 = vpop.f32.mrf.mxu0
        %v2135 = vadd.f32 0.0, %v2134
        %v2136 = vpop.f32.mrf.mxu0
        %v2137 = vpop.f32.mrf.mxu0
        %v2138 = vadd.f32 0.0, %v2137
        %v2139 = vpop.f32.mrf.mxu0
        %2140 = vmatprep.mubr.bf16.mxu0 0
        %2141 = vmatmul.mubr.bf16.gmra.mxu0 %v1851
        %v2142 = vpop.f32.mrf.mxu0
        %v2143 = vadd.f32 0.0, %v2142
        %v2144 = vpop.f32.mrf.mxu0
        %v2145 = vpop.f32.mrf.mxu0
        %v2146 = vadd.f32 0.0, %v2145
        %v2147 = vpop.f32.mrf.mxu0
        %2148 = vmatprep.mubr.bf16.mxu0 0
        %2149 = vmatmul.mubr.bf16.gmra.mxu0 %v1852
        %v2150 = vpop.f32.mrf.mxu0
        %v2151 = vadd.f32 0.0, %v2150
        %v2152 = vpop.f32.mrf.mxu0
        %v2153 = vpop.f32.mrf.mxu0
        %v2154 = vadd.f32 0.0, %v2153
        %v2155 = vpop.f32.mrf.mxu0
        %2156 = vmatprep.mubr.bf16.mxu0 0
        %2157 = vmatmul.mubr.bf16.gmra.mxu0 %v1853
        %v2158 = vpop.f32.mrf.mxu0
        %v2159 = vadd.f32 0.0, %v2158
        %v2160 = vpop.f32.mrf.mxu0
        %v2161 = vpop.f32.mrf.mxu0
        %v2162 = vadd.f32 0.0, %v2161
        %v2163 = vpop.f32.mrf.mxu0
        %2164 = vdwg.mxu0
        %2165 = vmatprep.subr.bf16.mxu0 0
        %2166 = vmatpush1.bf16.xpose.msra.mxu0 0
        %2167 = vmatprep.subr.bf16.mxu0 0
        %2168 = vmatpush1.bf16.xpose.msra.mxu0 0
        %2169 = vmatprep.subr.bf16.mxu0 0
        %2170 = vmatpush1.bf16.xpose.msra.mxu0 0
        %2171 = vmatprep.subr.bf16.mxu0 0
        %2172 = vmatpush1.bf16.xpose.msra.mxu0 0
        %2173 = vmatprep.subr.bf16.mxu0 0
        %2174 = vmatpush1.bf16.xpose.msra.mxu0 %v1889
        %2175 = vmatprep.subr.bf16.mxu0 0
        %2176 = vmatpush1.bf16.xpose.msra.mxu0 %v1888
        %2177 = vmatprep.subr.bf16.mxu0 0
        %2178 = vmatpush1.bf16.xpose.msra.mxu0 %v1887
        %2179 = vmatprep.subr.bf16.mxu0 0
        %2180 = vmatpush1.bf16.xpose.msra.mxu0 %v1886
        %2181 = vmatprep.subr.bf16.mxu0 0
        %2182 = vmatpush2.bf16.xpose.msra.mxu0 0
        %2183 = vmatprep.subr.bf16.mxu0 0
        %2184 = vmatpush2.bf16.xpose.msra.mxu0 0
        %2185 = vmatprep.subr.bf16.mxu0 0
        %2186 = vmatpush2.bf16.xpose.msra.mxu0 0
        %2187 = vmatprep.subr.bf16.mxu0 0
        %2188 = vmatpush2.bf16.xpose.msra.mxu0 0
        %2189 = vmatprep.subr.bf16.mxu0 0
        %2190 = vmatpush2.bf16.xpose.msra.mxu0 0
        %2191 = vmatprep.subr.bf16.mxu0 0
        %2192 = vmatpush2.bf16.xpose.msra.mxu0 0
        %2193 = vmatprep.subr.bf16.mxu0 0
        %2194 = vmatpush2.bf16.xpose.msra.mxu0 0
        %2195 = vmatprep.subr.bf16.mxu0 0
        %2196 = vmatpush2.bf16.xpose.msra.mxu0 0
        %2197 = vmatprep.mubr.bf16.mxu0 0
        %2198 = vmatmul.mubr.bf16.gmra.mxu0 %v1854
        %v2199 = vpop.f32.mrf.mxu0
        %v2200 = vadd.f32 0.0, %v2199
        %v2201 = vpop.f32.mrf.mxu0
        %v2202 = vpop.f32.mrf.mxu0
        %v2203 = vadd.f32 0.0, %v2202
        %v2204 = vpop.f32.mrf.mxu0
        %2205 = vmatprep.mubr.bf16.mxu0 0
        %2206 = vmatmul.mubr.bf16.gmra.mxu0 %v1855
        %v2207 = vpop.f32.mrf.mxu0
        %v2208 = vadd.f32 0.0, %v2207
        %v2209 = vpop.f32.mrf.mxu0
        %v2210 = vpop.f32.mrf.mxu0
        %v2211 = vadd.f32 0.0, %v2210
        %v2212 = vpop.f32.mrf.mxu0
        %2213 = vmatprep.mubr.bf16.mxu0 0
        %2214 = vmatmul.mubr.bf16.gmra.mxu0 %v1856
        %v2215 = vpop.f32.mrf.mxu0
        %v2216 = vadd.f32 0.0, %v2215
        %v2217 = vpop.f32.mrf.mxu0
        %v2218 = vpop.f32.mrf.mxu0
        %v2219 = vadd.f32 0.0, %v2218
        %v2220 = vpop.f32.mrf.mxu0
        %2221 = vmatprep.mubr.bf16.mxu0 0
        %2222 = vmatmul.mubr.bf16.gmra.mxu0 %v1857
        %v2223 = vpop.f32.mrf.mxu0
        %v2224 = vadd.f32 0.0, %v2223
        %v2225 = vpop.f32.mrf.mxu0
        %v2226 = vpop.f32.mrf.mxu0
        %v2227 = vadd.f32 0.0, %v2226
        %v2228 = vpop.f32.mrf.mxu0
        %2229 = vdwg.mxu0
        %2230 = vmatprep.subr.bf16.mxu0 0
        %2231 = vmatpush1.bf16.xpose.msra.mxu0 0
        %2232 = vmatprep.subr.bf16.mxu0 0
        %2233 = vmatpush1.bf16.xpose.msra.mxu0 0
        %2234 = vmatprep.subr.bf16.mxu0 0
        %2235 = vmatpush1.bf16.xpose.msra.mxu0 0
        %2236 = vmatprep.subr.bf16.mxu0 0
        %2237 = vmatpush1.bf16.xpose.msra.mxu0 0
        %2238 = vmatprep.subr.bf16.mxu0 0
        %2239 = vmatpush1.bf16.xpose.msra.mxu0 %v1893
        %2240 = vmatprep.subr.bf16.mxu0 0
        %2241 = vmatpush1.bf16.xpose.msra.mxu0 %v1892
        %2242 = vmatprep.subr.bf16.mxu0 0
        %2243 = vmatpush1.bf16.xpose.msra.mxu0 %v1891
        %2244 = vmatprep.subr.bf16.mxu0 0
        %2245 = vmatpush1.bf16.xpose.msra.mxu0 %v1890
        %2246 = vmatprep.subr.bf16.mxu0 0
        %2247 = vmatpush2.bf16.xpose.msra.mxu0 0
        %2248 = vmatprep.subr.bf16.mxu0 0
        %2249 = vmatpush2.bf16.xpose.msra.mxu0 0
        %2250 = vmatprep.subr.bf16.mxu0 0
        %2251 = vmatpush2.bf16.xpose.msra.mxu0 0
        %2252 = vmatprep.subr.bf16.mxu0 0
        %2253 = vmatpush2.bf16.xpose.msra.mxu0 0
        %2254 = vmatprep.subr.bf16.mxu0 0
        %2255 = vmatpush2.bf16.xpose.msra.mxu0 0
        %2256 = vmatprep.subr.bf16.mxu0 0
        %2257 = vmatpush2.bf16.xpose.msra.mxu0 0
        %2258 = vmatprep.subr.bf16.mxu0 0
        %2259 = vmatpush2.bf16.xpose.msra.mxu0 0
        %2260 = vmatprep.subr.bf16.mxu0 0
        %2261 = vmatpush2.bf16.xpose.msra.mxu0 0
        %2262 = vmatprep.mubr.bf16.mxu0 0
        %2263 = vmatmul.mubr.bf16.gmra.mxu0 %v1858
        %v2264 = vpop.f32.mrf.mxu0
        %v2265 = vadd.f32 0.0, %v2264
        %v2266 = vpop.f32.mrf.mxu0
        %v2267 = vpop.f32.mrf.mxu0
        %v2268 = vadd.f32 0.0, %v2267
        %v2269 = vpop.f32.mrf.mxu0
        %2270 = vmatprep.mubr.bf16.mxu0 0
        %2271 = vmatmul.mubr.bf16.gmra.mxu0 %v1859
        %v2272 = vpop.f32.mrf.mxu0
        %v2273 = vadd.f32 0.0, %v2272
        %v2274 = vpop.f32.mrf.mxu0
        %v2275 = vpop.f32.mrf.mxu0
        %v2276 = vadd.f32 0.0, %v2275
        %v2277 = vpop.f32.mrf.mxu0
        %2278 = vmatprep.mubr.bf16.mxu0 0
        %2279 = vmatmul.mubr.bf16.gmra.mxu0 %v1860
        %v2280 = vpop.f32.mrf.mxu0
        %v2281 = vadd.f32 0.0, %v2280
        %v2282 = vpop.f32.mrf.mxu0
        %v2283 = vpop.f32.mrf.mxu0
        %v2284 = vadd.f32 0.0, %v2283
        %v2285 = vpop.f32.mrf.mxu0
        %2286 = vmatprep.mubr.bf16.mxu0 0
        %2287 = vmatmul.mubr.bf16.gmra.mxu0 %v1861
        %v2288 = vpop.f32.mrf.mxu0
        %v2289 = vadd.f32 0.0, %v2288
        %v2290 = vpop.f32.mrf.mxu0
        %v2291 = vpop.f32.mrf.mxu0
        %v2292 = vadd.f32 0.0, %v2291
        %v2293 = vpop.f32.mrf.mxu0
        %2294 = vdwg.mxu0
        %2295 = vmatprep.subr.bf16.mxu0 0
        %2296 = vmatpush1.bf16.xpose.msra.mxu0 0
        %2297 = vmatprep.subr.bf16.mxu0 0
        %2298 = vmatpush1.bf16.xpose.msra.mxu0 0
        %2299 = vmatprep.subr.bf16.mxu0 0
        %2300 = vmatpush1.bf16.xpose.msra.mxu0 0
        %2301 = vmatprep.subr.bf16.mxu0 0
        %2302 = vmatpush1.bf16.xpose.msra.mxu0 0
        %2303 = vmatprep.subr.bf16.mxu0 0
        %2304 = vmatpush1.bf16.xpose.msra.mxu0 %v1897
        %2305 = vmatprep.subr.bf16.mxu0 0
        %2306 = vmatpush1.bf16.xpose.msra.mxu0 %v1896
        %2307 = vmatprep.subr.bf16.mxu0 0
        %2308 = vmatpush1.bf16.xpose.msra.mxu0 %v1895
        %2309 = vmatprep.subr.bf16.mxu0 0
        %2310 = vmatpush1.bf16.xpose.msra.mxu0 %v1894
        %2311 = vmatprep.subr.bf16.mxu0 0
        %2312 = vmatpush2.bf16.xpose.msra.mxu0 0
        %2313 = vmatprep.subr.bf16.mxu0 0
        %2314 = vmatpush2.bf16.xpose.msra.mxu0 0
        %2315 = vmatprep.subr.bf16.mxu0 0
        %2316 = vmatpush2.bf16.xpose.msra.mxu0 0
        %2317 = vmatprep.subr.bf16.mxu0 0
        %2318 = vmatpush2.bf16.xpose.msra.mxu0 0
        %2319 = vmatprep.subr.bf16.mxu0 0
        %2320 = vmatpush2.bf16.xpose.msra.mxu0 0
        %2321 = vmatprep.subr.bf16.mxu0 0
        %2322 = vmatpush2.bf16.xpose.msra.mxu0 0
        %2323 = vmatprep.subr.bf16.mxu0 0
        %2324 = vmatpush2.bf16.xpose.msra.mxu0 0
        %2325 = vmatprep.subr.bf16.mxu0 0
        %2326 = vmatpush2.bf16.xpose.msra.mxu0 0
        %2327 = vmatprep.mubr.bf16.mxu0 0
        %2328 = vmatmul.mubr.bf16.gmra.mxu0 %v1862
        %v2329 = vpop.f32.mrf.mxu0
        %v2330 = vadd.f32 0.0, %v2329
        %v2331 = vpop.f32.mrf.mxu0
        %v2332 = vpop.f32.mrf.mxu0
        %v2333 = vadd.f32 0.0, %v2332
        %v2334 = vpop.f32.mrf.mxu0
        %2335 = vmatprep.mubr.bf16.mxu0 0
        %2336 = vmatmul.mubr.bf16.gmra.mxu0 %v1863
        %v2337 = vpop.f32.mrf.mxu0
        %v2338 = vadd.f32 0.0, %v2337
        %v2339 = vpop.f32.mrf.mxu0
        %v2340 = vpop.f32.mrf.mxu0
        %v2341 = vadd.f32 0.0, %v2340
        %v2342 = vpop.f32.mrf.mxu0
        %2343 = vmatprep.mubr.bf16.mxu0 0
        %2344 = vmatmul.mubr.bf16.gmra.mxu0 %v1864
        %v2345 = vpop.f32.mrf.mxu0
        %v2346 = vadd.f32 0.0, %v2345
        %v2347 = vpop.f32.mrf.mxu0
        %v2348 = vpop.f32.mrf.mxu0
        %v2349 = vadd.f32 0.0, %v2348
        %v2350 = vpop.f32.mrf.mxu0
        %2351 = vmatprep.mubr.bf16.mxu0 0
        %2352 = vmatmul.mubr.bf16.gmra.mxu0 %v1865
        %v2353 = vpop.f32.mrf.mxu0
        %v2354 = vadd.f32 0.0, %v2353
        %v2355 = vpop.f32.mrf.mxu0
        %v2356 = vpop.f32.mrf.mxu0
        %v2357 = vadd.f32 0.0, %v2356
        %v2358 = vpop.f32.mrf.mxu0
        %2359 = vdwg.mxu0
        %2360 = vmatprep.subr.bf16.mxu0 0
        %2361 = vmatpush1.bf16.xpose.msra.mxu0 0
        %2362 = vmatprep.subr.bf16.mxu0 0
        %2363 = vmatpush1.bf16.xpose.msra.mxu0 0
        %2364 = vmatprep.subr.bf16.mxu0 0
        %2365 = vmatpush1.bf16.xpose.msra.mxu0 0
        %2366 = vmatprep.subr.bf16.mxu0 0
        %2367 = vmatpush1.bf16.xpose.msra.mxu0 0
        %2368 = vmatprep.subr.bf16.mxu0 0
        %2369 = vmatpush1.bf16.xpose.msra.mxu0 %v1901
        %2370 = vmatprep.subr.bf16.mxu0 0
        %2371 = vmatpush1.bf16.xpose.msra.mxu0 %v1900
        %2372 = vmatprep.subr.bf16.mxu0 0
        %2373 = vmatpush1.bf16.xpose.msra.mxu0 %v1899
        %2374 = vmatprep.subr.bf16.mxu0 0
        %2375 = vmatpush1.bf16.xpose.msra.mxu0 %v1898
        %2376 = vmatprep.subr.bf16.mxu0 0
        %2377 = vmatpush2.bf16.xpose.msra.mxu0 0
        %2378 = vmatprep.subr.bf16.mxu0 0
        %2379 = vmatpush2.bf16.xpose.msra.mxu0 0
        %2380 = vmatprep.subr.bf16.mxu0 0
        %2381 = vmatpush2.bf16.xpose.msra.mxu0 0
        %2382 = vmatprep.subr.bf16.mxu0 0
        %2383 = vmatpush2.bf16.xpose.msra.mxu0 0
        %2384 = vmatprep.subr.bf16.mxu0 0
        %2385 = vmatpush2.bf16.xpose.msra.mxu0 0
        %2386 = vmatprep.subr.bf16.mxu0 0
        %2387 = vmatpush2.bf16.xpose.msra.mxu0 0
        %2388 = vmatprep.subr.bf16.mxu0 0
        %2389 = vmatpush2.bf16.xpose.msra.mxu0 0
        %2390 = vmatprep.subr.bf16.mxu0 0
        %2391 = vmatpush2.bf16.xpose.msra.mxu0 0
        %2392 = vmatprep.mubr.bf16.mxu0 0
        %2393 = vmatmul.mubr.bf16.gmra.mxu0 %v1866
        %v2394 = vpop.f32.mrf.mxu0
        %v2395 = vadd.f32 0.0, %v2394
        %v2396 = vpop.f32.mrf.mxu0
        %v2397 = vpop.f32.mrf.mxu0
        %v2398 = vadd.f32 0.0, %v2397
        %v2399 = vpop.f32.mrf.mxu0
        %2400 = vmatprep.mubr.bf16.mxu0 0
        %2401 = vmatmul.mubr.bf16.gmra.mxu0 %v1867
        %v2402 = vpop.f32.mrf.mxu0
        %v2403 = vadd.f32 0.0, %v2402
        %v2404 = vpop.f32.mrf.mxu0
        %v2405 = vpop.f32.mrf.mxu0
        %v2406 = vadd.f32 0.0, %v2405
        %v2407 = vpop.f32.mrf.mxu0
        %2408 = vmatprep.mubr.bf16.mxu0 0
        %2409 = vmatmul.mubr.bf16.gmra.mxu0 %v1868
        %v2410 = vpop.f32.mrf.mxu0
        %v2411 = vadd.f32 0.0, %v2410
        %v2412 = vpop.f32.mrf.mxu0
        %v2413 = vpop.f32.mrf.mxu0
        %v2414 = vadd.f32 0.0, %v2413
        %v2415 = vpop.f32.mrf.mxu0
        %2416 = vmatprep.mubr.bf16.mxu0 0
        %2417 = vmatmul.mubr.bf16.gmra.mxu0 %v1869
        %v2418 = vpop.f32.mrf.mxu0
        %v2419 = vadd.f32 0.0, %v2418
        %v2420 = vpop.f32.mrf.mxu0
        %v2421 = vpop.f32.mrf.mxu0
        %v2422 = vadd.f32 0.0, %v2421
        %v2423 = vpop.f32.mrf.mxu0
        %2424 = vdwg.mxu0
        %2425 = vmatprep.subr.bf16.mxu0 0
        %2426 = vmatpush1.bf16.xpose.msra.mxu0 0
        %2427 = vmatprep.subr.bf16.mxu0 0
        %2428 = vmatpush1.bf16.xpose.msra.mxu0 0
        %2429 = vmatprep.subr.bf16.mxu0 0
        %2430 = vmatpush1.bf16.xpose.msra.mxu0 0
        %2431 = vmatprep.subr.bf16.mxu0 0
        %2432 = vmatpush1.bf16.xpose.msra.mxu0 0
        %2433 = vmatprep.subr.bf16.mxu0 0
        %2434 = vmatpush1.bf16.xpose.msra.mxu0 %v1905
        %2435 = vmatprep.subr.bf16.mxu0 0
        %2436 = vmatpush1.bf16.xpose.msra.mxu0 %v1904
        %2437 = vmatprep.subr.bf16.mxu0 0
        %2438 = vmatpush1.bf16.xpose.msra.mxu0 %v1903
        %2439 = vmatprep.subr.bf16.mxu0 0
        %2440 = vmatpush1.bf16.xpose.msra.mxu0 %v1902
        %2441 = vmatprep.subr.bf16.mxu0 0
        %2442 = vmatpush2.bf16.xpose.msra.mxu0 0
        %2443 = vmatprep.subr.bf16.mxu0 0
        %2444 = vmatpush2.bf16.xpose.msra.mxu0 0
        %2445 = vmatprep.subr.bf16.mxu0 0
        %2446 = vmatpush2.bf16.xpose.msra.mxu0 0
        %2447 = vmatprep.subr.bf16.mxu0 0
        %2448 = vmatpush2.bf16.xpose.msra.mxu0 0
        %2449 = vmatprep.subr.bf16.mxu0 0
        %2450 = vmatpush2.bf16.xpose.msra.mxu0 0
        %2451 = vmatprep.subr.bf16.mxu0 0
        %2452 = vmatpush2.bf16.xpose.msra.mxu0 0
        %2453 = vmatprep.subr.bf16.mxu0 0
        %2454 = vmatpush2.bf16.xpose.msra.mxu0 0
        %2455 = vmatprep.subr.bf16.mxu0 0
        %2456 = vmatpush2.bf16.xpose.msra.mxu0 0
        %2457 = vmatprep.mubr.bf16.mxu0 0
        %2458 = vmatmul.mubr.bf16.gmra.mxu0 %v1870
        %v2459 = vpop.f32.mrf.mxu0
        %v2460 = vadd.f32 0.0, %v2459
        %v2461 = vpop.f32.mrf.mxu0
        %v2462 = vpop.f32.mrf.mxu0
        %v2463 = vadd.f32 0.0, %v2462
        %v2464 = vpop.f32.mrf.mxu0
        %2465 = vmatprep.mubr.bf16.mxu0 0
        %2466 = vmatmul.mubr.bf16.gmra.mxu0 %v1871
        %v2467 = vpop.f32.mrf.mxu0
        %v2468 = vadd.f32 0.0, %v2467
        %v2469 = vpop.f32.mrf.mxu0
        %v2470 = vpop.f32.mrf.mxu0
        %v2471 = vadd.f32 0.0, %v2470
        %v2472 = vpop.f32.mrf.mxu0
        %2473 = vmatprep.mubr.bf16.mxu0 0
        %2474 = vmatmul.mubr.bf16.gmra.mxu0 %v1872
        %v2475 = vpop.f32.mrf.mxu0
        %v2476 = vadd.f32 0.0, %v2475
        %v2477 = vpop.f32.mrf.mxu0
        %v2478 = vpop.f32.mrf.mxu0
        %v2479 = vadd.f32 0.0, %v2478
        %v2480 = vpop.f32.mrf.mxu0
        %2481 = vmatprep.mubr.bf16.mxu0 0
        %2482 = vmatmul.mubr.bf16.gmra.mxu0 %v1873
        %v2483 = vpop.f32.mrf.mxu0
        %v2484 = vadd.f32 0.0, %v2483
        %v2485 = vpop.f32.mrf.mxu0
        %v2486 = vpop.f32.mrf.mxu0
        %v2487 = vadd.f32 0.0, %v2486
        %v2488 = vpop.f32.mrf.mxu0
        %2489 = vdwg.mxu0
        %vm2490 = vcmask 523264
        %v2491 = vsel %vm2490, %v2005, -inf
        %2492 = vmax.xlane.f32.xlu0 %v2491
        %v2493 = vpop.xlane.xlu0 %2492
        %v2494 = vsel %vm2490, %v2008, -inf
        %2495 = vmax.xlane.f32.xlu0 %v2494
        %v2496 = vpop.xlane.xlu0 %2495
        %v2497 = vsel %vm2490, %v2013, -inf
        %2498 = vmax.xlane.f32.xlu0 %v2497
        %v2499 = vpop.xlane.xlu0 %2498
        %v2500 = vsel %vm2490, %v2016, -inf
        %2501 = vmax.xlane.f32.xlu0 %v2500
        %v2502 = vpop.xlane.xlu0 %2501
        %v2503 = vsel %vm2490, %v2021, -inf
        %2504 = vmax.xlane.f32.xlu0 %v2503
        %v2505 = vpop.xlane.xlu0 %2504
        %v2506 = vsel %vm2490, %v2024, -inf
        %2507 = vmax.xlane.f32.xlu0 %v2506
        %v2508 = vpop.xlane.xlu0 %2507
        %v2509 = vsel %vm2490, %v2029, -inf
        %2510 = vmax.xlane.f32.xlu0 %v2509
        %v2511 = vpop.xlane.xlu0 %2510
        %v2512 = vsel %vm2490, %v2032, -inf
        %2513 = vmax.xlane.f32.xlu0 %v2512
        %v2514 = vpop.xlane.xlu0 %2513
        %v2515 = vsel %vm2490, %v2070, -inf
        %2516 = vmax.xlane.f32.xlu0 %v2515
        %v2517 = vpop.xlane.xlu0 %2516
        %v2518 = vsel %vm2490, %v2073, -inf
        %2519 = vmax.xlane.f32.xlu0 %v2518
        %v2520 = vpop.xlane.xlu0 %2519
        %v2521 = vsel %vm2490, %v2078, -inf
        %2522 = vmax.xlane.f32.xlu0 %v2521
        %v2523 = vpop.xlane.xlu0 %2522
        %v2524 = vsel %vm2490, %v2081, -inf
        %2525 = vmax.xlane.f32.xlu0 %v2524
        %v2526 = vpop.xlane.xlu0 %2525
        %v2527 = vsel %vm2490, %v2086, -inf
        %2528 = vmax.xlane.f32.xlu0 %v2527
        %v2529 = vpop.xlane.xlu0 %2528
        %v2530 = vsel %vm2490, %v2089, -inf
        %2531 = vmax.xlane.f32.xlu0 %v2530
        %v2532 = vpop.xlane.xlu0 %2531
        %v2533 = vsel %vm2490, %v2094, -inf
        %2534 = vmax.xlane.f32.xlu0 %v2533
        %v2535 = vpop.xlane.xlu0 %2534
        %v2536 = vsel %vm2490, %v2097, -inf
        %2537 = vmax.xlane.f32.xlu0 %v2536
        %v2538 = vpop.xlane.xlu0 %2537
        %v2539 = vsel %vm2490, %v2135, -inf
        %2540 = vmax.xlane.f32.xlu0 %v2539
        %v2541 = vpop.xlane.xlu0 %2540
        %v2542 = vsel %vm2490, %v2138, -inf
        %2543 = vmax.xlane.f32.xlu0 %v2542
        %v2544 = vpop.xlane.xlu0 %2543
        %v2545 = vsel %vm2490, %v2143, -inf
        %2546 = vmax.xlane.f32.xlu0 %v2545
        %v2547 = vpop.xlane.xlu0 %2546
        %v2548 = vsel %vm2490, %v2146, -inf
        %2549 = vmax.xlane.f32.xlu0 %v2548
        %v2550 = vpop.xlane.xlu0 %2549
        %v2551 = vsel %vm2490, %v2151, -inf
        %2552 = vmax.xlane.f32.xlu0 %v2551
        %v2553 = vpop.xlane.xlu0 %2552
        %v2554 = vsel %vm2490, %v2154, -inf
        %2555 = vmax.xlane.f32.xlu0 %v2554
        %v2556 = vpop.xlane.xlu0 %2555
        %v2557 = vsel %vm2490, %v2159, -inf
        %2558 = vmax.xlane.f32.xlu0 %v2557
        %v2559 = vpop.xlane.xlu0 %2558
        %v2560 = vsel %vm2490, %v2162, -inf
        %2561 = vmax.xlane.f32.xlu0 %v2560
        %v2562 = vpop.xlane.xlu0 %2561
        %v2563 = vsel %vm2490, %v2200, -inf
        %2564 = vmax.xlane.f32.xlu0 %v2563
        %v2565 = vpop.xlane.xlu0 %2564
        %v2566 = vsel %vm2490, %v2203, -inf
        %2567 = vmax.xlane.f32.xlu0 %v2566
        %v2568 = vpop.xlane.xlu0 %2567
        %v2569 = vsel %vm2490, %v2208, -inf
        %2570 = vmax.xlane.f32.xlu0 %v2569
        %v2571 = vpop.xlane.xlu0 %2570
        %v2572 = vsel %vm2490, %v2211, -inf
        %2573 = vmax.xlane.f32.xlu0 %v2572
        %v2574 = vpop.xlane.xlu0 %2573
        %v2575 = vsel %vm2490, %v2216, -inf
        %2576 = vmax.xlane.f32.xlu0 %v2575
        %v2577 = vpop.xlane.xlu0 %2576
        %v2578 = vsel %vm2490, %v2219, -inf
        %2579 = vmax.xlane.f32.xlu0 %v2578
        %v2580 = vpop.xlane.xlu0 %2579
        %v2581 = vsel %vm2490, %v2224, -inf
        %2582 = vmax.xlane.f32.xlu0 %v2581
        %v2583 = vpop.xlane.xlu0 %2582
        %v2584 = vsel %vm2490, %v2227, -inf
        %2585 = vmax.xlane.f32.xlu0 %v2584
        %v2586 = vpop.xlane.xlu0 %2585
        %v2587 = vsel %vm2490, %v2265, -inf
        %2588 = vmax.xlane.f32.xlu0 %v2587
        %v2589 = vpop.xlane.xlu0 %2588
        %v2590 = vsel %vm2490, %v2268, -inf
        %2591 = vmax.xlane.f32.xlu0 %v2590
        %v2592 = vpop.xlane.xlu0 %2591
        %v2593 = vsel %vm2490, %v2273, -inf
        %2594 = vmax.xlane.f32.xlu0 %v2593
        %v2595 = vpop.xlane.xlu0 %2594
        %v2596 = vsel %vm2490, %v2276, -inf
        %2597 = vmax.xlane.f32.xlu0 %v2596
        %v2598 = vpop.xlane.xlu0 %2597
        %v2599 = vsel %vm2490, %v2281, -inf
        %2600 = vmax.xlane.f32.xlu0 %v2599
        %v2601 = vpop.xlane.xlu0 %2600
        %v2602 = vsel %vm2490, %v2284, -inf
        %2603 = vmax.xlane.f32.xlu0 %v2602
        %v2604 = vpop.xlane.xlu0 %2603
        %v2605 = vsel %vm2490, %v2289, -inf
        %2606 = vmax.xlane.f32.xlu0 %v2605
        %v2607 = vpop.xlane.xlu0 %2606
        %v2608 = vsel %vm2490, %v2292, -inf
        %2609 = vmax.xlane.f32.xlu0 %v2608
        %v2610 = vpop.xlane.xlu0 %2609
        %v2611 = vsel %vm2490, %v2330, -inf
        %2612 = vmax.xlane.f32.xlu0 %v2611
        %v2613 = vpop.xlane.xlu0 %2612
        %v2614 = vsel %vm2490, %v2333, -inf
        %2615 = vmax.xlane.f32.xlu0 %v2614
        %v2616 = vpop.xlane.xlu0 %2615
        %v2617 = vsel %vm2490, %v2338, -inf
        %2618 = vmax.xlane.f32.xlu0 %v2617
        %v2619 = vpop.xlane.xlu0 %2618
        %v2620 = vsel %vm2490, %v2341, -inf
        %2621 = vmax.xlane.f32.xlu0 %v2620
        %v2622 = vpop.xlane.xlu0 %2621
        %v2623 = vsel %vm2490, %v2346, -inf
        %2624 = vmax.xlane.f32.xlu0 %v2623
        %v2625 = vpop.xlane.xlu0 %2624
        %v2626 = vsel %vm2490, %v2349, -inf
        %2627 = vmax.xlane.f32.xlu0 %v2626
        %v2628 = vpop.xlane.xlu0 %2627
        %v2629 = vsel %vm2490, %v2354, -inf
        %2630 = vmax.xlane.f32.xlu0 %v2629
        %v2631 = vpop.xlane.xlu0 %2630
        %v2632 = vsel %vm2490, %v2357, -inf
        %2633 = vmax.xlane.f32.xlu0 %v2632
        %v2634 = vpop.xlane.xlu0 %2633
        %v2635 = vsel %vm2490, %v2395, -inf
        %2636 = vmax.xlane.f32.xlu0 %v2635
        %v2637 = vpop.xlane.xlu0 %2636
        %v2638 = vsel %vm2490, %v2398, -inf
        %2639 = vmax.xlane.f32.xlu0 %v2638
        %v2640 = vpop.xlane.xlu0 %2639
        %v2641 = vsel %vm2490, %v2403, -inf
        %2642 = vmax.xlane.f32.xlu0 %v2641
        %v2643 = vpop.xlane.xlu0 %2642
        %v2644 = vsel %vm2490, %v2406, -inf
        %2645 = vmax.xlane.f32.xlu0 %v2644
        %v2646 = vpop.xlane.xlu0 %2645
        %v2647 = vsel %vm2490, %v2411, -inf
        %2648 = vmax.xlane.f32.xlu0 %v2647
        %v2649 = vpop.xlane.xlu0 %2648
        %v2650 = vsel %vm2490, %v2414, -inf
        %2651 = vmax.xlane.f32.xlu0 %v2650
        %v2652 = vpop.xlane.xlu0 %2651
        %v2653 = vsel %vm2490, %v2419, -inf
        %2654 = vmax.xlane.f32.xlu0 %v2653
        %v2655 = vpop.xlane.xlu0 %2654
        %v2656 = vsel %vm2490, %v2422, -inf
        %2657 = vmax.xlane.f32.xlu0 %v2656
        %v2658 = vpop.xlane.xlu0 %2657
        %v2659 = vsel %vm2490, %v2460, -inf
        %2660 = vmax.xlane.f32.xlu0 %v2659
        %v2661 = vpop.xlane.xlu0 %2660
        %v2662 = vsel %vm2490, %v2463, -inf
        %2663 = vmax.xlane.f32.xlu0 %v2662
        %v2664 = vpop.xlane.xlu0 %2663
        %v2665 = vsel %vm2490, %v2468, -inf
        %2666 = vmax.xlane.f32.xlu0 %v2665
        %v2667 = vpop.xlane.xlu0 %2666
        %v2668 = vsel %vm2490, %v2471, -inf
        %2669 = vmax.xlane.f32.xlu0 %v2668
        %v2670 = vpop.xlane.xlu0 %2669
        %v2671 = vsel %vm2490, %v2476, -inf
        %2672 = vmax.xlane.f32.xlu0 %v2671
        %v2673 = vpop.xlane.xlu0 %2672
        %v2674 = vsel %vm2490, %v2479, -inf
        %2675 = vmax.xlane.f32.xlu0 %v2674
        %v2676 = vpop.xlane.xlu0 %2675
        %v2677 = vsel %vm2490, %v2484, -inf
        %2678 = vmax.xlane.f32.xlu0 %v2677
        %v2679 = vpop.xlane.xlu0 %2678
        %v2680 = vsel %vm2490, %v2487, -inf
        %2681 = vmax.xlane.f32.xlu0 %v2680
        %v2682 = vpop.xlane.xlu0 %2681
        %v2683 = vsub.f32 %v2005, %v2493
        %v2684 = vsub.f32 %v2008, %v2496
        %v2685 = vsub.f32 %v2013, %v2499
        %v2686 = vsub.f32 %v2016, %v2502
        %v2687 = vsub.f32 %v2021, %v2505
        %v2688 = vsub.f32 %v2024, %v2508
        %v2689 = vsub.f32 %v2029, %v2511
        %v2690 = vsub.f32 %v2032, %v2514
        %v2691 = vsub.f32 %v2070, %v2517
        %v2692 = vsub.f32 %v2073, %v2520
        %v2693 = vsub.f32 %v2078, %v2523
        %v2694 = vsub.f32 %v2081, %v2526
        %v2695 = vsub.f32 %v2086, %v2529
        %v2696 = vsub.f32 %v2089, %v2532
        %v2697 = vsub.f32 %v2094, %v2535
        %v2698 = vsub.f32 %v2097, %v2538
        %v2699 = vsub.f32 %v2135, %v2541
        %v2700 = vsub.f32 %v2138, %v2544
        %v2701 = vsub.f32 %v2143, %v2547
        %v2702 = vsub.f32 %v2146, %v2550
        %v2703 = vsub.f32 %v2151, %v2553
        %v2704 = vsub.f32 %v2154, %v2556
        %v2705 = vsub.f32 %v2159, %v2559
        %v2706 = vsub.f32 %v2162, %v2562
        %v2707 = vsub.f32 %v2200, %v2565
        %v2708 = vsub.f32 %v2203, %v2568
        %v2709 = vsub.f32 %v2208, %v2571
        %v2710 = vsub.f32 %v2211, %v2574
        %v2711 = vsub.f32 %v2216, %v2577
        %v2712 = vsub.f32 %v2219, %v2580
        %v2713 = vsub.f32 %v2224, %v2583
        %v2714 = vsub.f32 %v2227, %v2586
        %v2715 = vsub.f32 %v2265, %v2589
        %v2716 = vsub.f32 %v2268, %v2592
        %v2717 = vsub.f32 %v2273, %v2595
        %v2718 = vsub.f32 %v2276, %v2598
        %v2719 = vsub.f32 %v2281, %v2601
        %v2720 = vsub.f32 %v2284, %v2604
        %v2721 = vsub.f32 %v2289, %v2607
        %v2722 = vsub.f32 %v2292, %v2610
        %v2723 = vsub.f32 %v2330, %v2613
        %v2724 = vsub.f32 %v2333, %v2616
        %v2725 = vsub.f32 %v2338, %v2619
        %v2726 = vsub.f32 %v2341, %v2622
        %v2727 = vsub.f32 %v2346, %v2625
        %v2728 = vsub.f32 %v2349, %v2628
        %v2729 = vsub.f32 %v2354, %v2631
        %v2730 = vsub.f32 %v2357, %v2634
        %v2731 = vsub.f32 %v2395, %v2637
        %v2732 = vsub.f32 %v2398, %v2640
        %v2733 = vsub.f32 %v2403, %v2643
        %v2734 = vsub.f32 %v2406, %v2646
        %v2735 = vsub.f32 %v2411, %v2649
        %v2736 = vsub.f32 %v2414, %v2652
        %v2737 = vsub.f32 %v2419, %v2655
        %v2738 = vsub.f32 %v2422, %v2658
        %v2739 = vsub.f32 %v2460, %v2661
        %v2740 = vsub.f32 %v2463, %v2664
        %v2741 = vsub.f32 %v2468, %v2667
        %v2742 = vsub.f32 %v2471, %v2670
        %v2743 = vsub.f32 %v2476, %v2673
        %v2744 = vsub.f32 %v2479, %v2676
        %v2745 = vsub.f32 %v2484, %v2679
        %v2746 = vsub.f32 %v2487, %v2682
        %v2747 = vmul.f32 %v2683, 1.442695
        %v2748 = vpow.pop %v2747
        %v2749 = vmul.f32 %v2684, 1.442695
        %v2750 = vpow.pop %v2749
        %v2751 = vmul.f32 %v2685, 1.442695
        %v2752 = vpow.pop %v2751
        %v2753 = vmul.f32 %v2686, 1.442695
        %v2754 = vpow.pop %v2753
        %v2755 = vmul.f32 %v2687, 1.442695
        %v2756 = vpow.pop %v2755
        %v2757 = vmul.f32 %v2688, 1.442695
        %v2758 = vpow.pop %v2757
        %v2759 = vmul.f32 %v2689, 1.442695
        %v2760 = vpow.pop %v2759
        %v2761 = vmul.f32 %v2690, 1.442695
        %v2762 = vpow.pop %v2761
        %v2763 = vmul.f32 %v2691, 1.442695
        %v2764 = vpow.pop %v2763
        %v2765 = vmul.f32 %v2692, 1.442695
        %v2766 = vpow.pop %v2765
        %v2767 = vmul.f32 %v2693, 1.442695
        %v2768 = vpow.pop %v2767
        %v2769 = vmul.f32 %v2694, 1.442695
        %v2770 = vpow.pop %v2769
        %v2771 = vmul.f32 %v2695, 1.442695
        %v2772 = vpow.pop %v2771
        %v2773 = vmul.f32 %v2696, 1.442695
        %v2774 = vpow.pop %v2773
        %v2775 = vmul.f32 %v2697, 1.442695
        %v2776 = vpow.pop %v2775
        %v2777 = vmul.f32 %v2698, 1.442695
        %v2778 = vpow.pop %v2777
        %v2779 = vmul.f32 %v2699, 1.442695
        %v2780 = vpow.pop %v2779
        %v2781 = vmul.f32 %v2700, 1.442695
        %v2782 = vpow.pop %v2781
        %v2783 = vmul.f32 %v2701, 1.442695
        %v2784 = vpow.pop %v2783
        %v2785 = vmul.f32 %v2702, 1.442695
        %v2786 = vpow.pop %v2785
        %v2787 = vmul.f32 %v2703, 1.442695
        %v2788 = vpow.pop %v2787
        %v2789 = vmul.f32 %v2704, 1.442695
        %v2790 = vpow.pop %v2789
        %v2791 = vmul.f32 %v2705, 1.442695
        %v2792 = vpow.pop %v2791
        %v2793 = vmul.f32 %v2706, 1.442695
        %v2794 = vpow.pop %v2793
        %v2795 = vmul.f32 %v2707, 1.442695
        %v2796 = vpow.pop %v2795
        %v2797 = vmul.f32 %v2708, 1.442695
        %v2798 = vpow.pop %v2797
        %v2799 = vmul.f32 %v2709, 1.442695
        %v2800 = vpow.pop %v2799
        %v2801 = vmul.f32 %v2710, 1.442695
        %v2802 = vpow.pop %v2801
        %v2803 = vmul.f32 %v2711, 1.442695
        %v2804 = vpow.pop %v2803
        %v2805 = vmul.f32 %v2712, 1.442695
        %v2806 = vpow.pop %v2805
        %v2807 = vmul.f32 %v2713, 1.442695
        %v2808 = vpow.pop %v2807
        %v2809 = vmul.f32 %v2714, 1.442695
        %v2810 = vpow.pop %v2809
        %v2811 = vmul.f32 %v2715, 1.442695
        %v2812 = vpow.pop %v2811
        %v2813 = vmul.f32 %v2716, 1.442695
        %v2814 = vpow.pop %v2813
        %v2815 = vmul.f32 %v2717, 1.442695
        %v2816 = vpow.pop %v2815
        %v2817 = vmul.f32 %v2718, 1.442695
        %v2818 = vpow.pop %v2817
        %v2819 = vmul.f32 %v2719, 1.442695
        %v2820 = vpow.pop %v2819
        %v2821 = vmul.f32 %v2720, 1.442695
        %v2822 = vpow.pop %v2821
        %v2823 = vmul.f32 %v2721, 1.442695
        %v2824 = vpow.pop %v2823
        %v2825 = vmul.f32 %v2722, 1.442695
        %v2826 = vpow.pop %v2825
        %v2827 = vmul.f32 %v2723, 1.442695
        %v2828 = vpow.pop %v2827
        %v2829 = vmul.f32 %v2724, 1.442695
        %v2830 = vpow.pop %v2829
        %v2831 = vmul.f32 %v2725, 1.442695
        %v2832 = vpow.pop %v2831
        %v2833 = vmul.f32 %v2726, 1.442695
        %v2834 = vpow.pop %v2833
        %v2835 = vmul.f32 %v2727, 1.442695
        %v2836 = vpow.pop %v2835
        %v2837 = vmul.f32 %v2728, 1.442695
        %v2838 = vpow.pop %v2837
        %v2839 = vmul.f32 %v2729, 1.442695
        %v2840 = vpow.pop %v2839
        %v2841 = vmul.f32 %v2730, 1.442695
        %v2842 = vpow.pop %v2841
        %v2843 = vmul.f32 %v2731, 1.442695
        %v2844 = vpow.pop %v2843
        %v2845 = vmul.f32 %v2732, 1.442695
        %v2846 = vpow.pop %v2845
        %v2847 = vmul.f32 %v2733, 1.442695
        %v2848 = vpow.pop %v2847
        %v2849 = vmul.f32 %v2734, 1.442695
        %v2850 = vpow.pop %v2849
        %v2851 = vmul.f32 %v2735, 1.442695
        %v2852 = vpow.pop %v2851
        %v2853 = vmul.f32 %v2736, 1.442695
        %v2854 = vpow.pop %v2853
        %v2855 = vmul.f32 %v2737, 1.442695
        %v2856 = vpow.pop %v2855
        %v2857 = vmul.f32 %v2738, 1.442695
        %v2858 = vpow.pop %v2857
        %v2859 = vmul.f32 %v2739, 1.442695
        %v2860 = vpow.pop %v2859
        %v2861 = vmul.f32 %v2740, 1.442695
        %v2862 = vpow.pop %v2861
        %v2863 = vmul.f32 %v2741, 1.442695
        %v2864 = vpow.pop %v2863
        %v2865 = vmul.f32 %v2742, 1.442695
        %v2866 = vpow.pop %v2865
        %v2867 = vmul.f32 %v2743, 1.442695
        %v2868 = vpow.pop %v2867
        %v2869 = vmul.f32 %v2744, 1.442695
        %v2870 = vpow.pop %v2869
        %v2871 = vmul.f32 %v2745, 1.442695
        %v2872 = vpow.pop %v2871
        %v2873 = vmul.f32 %v2746, 1.442695
        %v2874 = vpow.pop %v2873
        %v2875 = vsel %vm2490, %v2748, 0.0
        %2876 = vadd.xlane.f32.xlu0 %v2875
        %v2877 = vpop.xlane.xlu0 %2876
        %v2878 = vsel %vm2490, %v2750, 0.0
        %2879 = vadd.xlane.f32.xlu0 %v2878
        %v2880 = vpop.xlane.xlu0 %2879
        %v2881 = vsel %vm2490, %v2752, 0.0
        %2882 = vadd.xlane.f32.xlu0 %v2881
        %v2883 = vpop.xlane.xlu0 %2882
        %v2884 = vsel %vm2490, %v2754, 0.0
        %2885 = vadd.xlane.f32.xlu0 %v2884
        %v2886 = vpop.xlane.xlu0 %2885
        %v2887 = vsel %vm2490, %v2756, 0.0
        %2888 = vadd.xlane.f32.xlu0 %v2887
        %v2889 = vpop.xlane.xlu0 %2888
        %v2890 = vsel %vm2490, %v2758, 0.0
        %2891 = vadd.xlane.f32.xlu0 %v2890
        %v2892 = vpop.xlane.xlu0 %2891
        %v2893 = vsel %vm2490, %v2760, 0.0
        %2894 = vadd.xlane.f32.xlu0 %v2893
        %v2895 = vpop.xlane.xlu0 %2894
        %v2896 = vsel %vm2490, %v2762, 0.0
        %2897 = vadd.xlane.f32.xlu0 %v2896
        %v2898 = vpop.xlane.xlu0 %2897
        %v2899 = vsel %vm2490, %v2764, 0.0
        %2900 = vadd.xlane.f32.xlu0 %v2899
        %v2901 = vpop.xlane.xlu0 %2900
        %v2902 = vsel %vm2490, %v2766, 0.0
        %2903 = vadd.xlane.f32.xlu0 %v2902
        %v2904 = vpop.xlane.xlu0 %2903
        %v2905 = vsel %vm2490, %v2768, 0.0
        %2906 = vadd.xlane.f32.xlu0 %v2905
        %v2907 = vpop.xlane.xlu0 %2906
        %v2908 = vsel %vm2490, %v2770, 0.0
        %2909 = vadd.xlane.f32.xlu0 %v2908
        %v2910 = vpop.xlane.xlu0 %2909
        %v2911 = vsel %vm2490, %v2772, 0.0
        %2912 = vadd.xlane.f32.xlu0 %v2911
        %v2913 = vpop.xlane.xlu0 %2912
        %v2914 = vsel %vm2490, %v2774, 0.0
        %2915 = vadd.xlane.f32.xlu0 %v2914
        %v2916 = vpop.xlane.xlu0 %2915
        %v2917 = vsel %vm2490, %v2776, 0.0
        %2918 = vadd.xlane.f32.xlu0 %v2917
        %v2919 = vpop.xlane.xlu0 %2918
        %v2920 = vsel %vm2490, %v2778, 0.0
        %2921 = vadd.xlane.f32.xlu0 %v2920
        %v2922 = vpop.xlane.xlu0 %2921
        %v2923 = vsel %vm2490, %v2780, 0.0
        %2924 = vadd.xlane.f32.xlu0 %v2923
        %v2925 = vpop.xlane.xlu0 %2924
        %v2926 = vsel %vm2490, %v2782, 0.0
        %2927 = vadd.xlane.f32.xlu0 %v2926
        %v2928 = vpop.xlane.xlu0 %2927
        %v2929 = vsel %vm2490, %v2784, 0.0
        %2930 = vadd.xlane.f32.xlu0 %v2929
        %v2931 = vpop.xlane.xlu0 %2930
        %v2932 = vsel %vm2490, %v2786, 0.0
        %2933 = vadd.xlane.f32.xlu0 %v2932
        %v2934 = vpop.xlane.xlu0 %2933
        %v2935 = vsel %vm2490, %v2788, 0.0
        %2936 = vadd.xlane.f32.xlu0 %v2935
        %v2937 = vpop.xlane.xlu0 %2936
        %v2938 = vsel %vm2490, %v2790, 0.0
        %2939 = vadd.xlane.f32.xlu0 %v2938
        %v2940 = vpop.xlane.xlu0 %2939
        %v2941 = vsel %vm2490, %v2792, 0.0
        %2942 = vadd.xlane.f32.xlu0 %v2941
        %v2943 = vpop.xlane.xlu0 %2942
        %v2944 = vsel %vm2490, %v2794, 0.0
        %2945 = vadd.xlane.f32.xlu0 %v2944
        %v2946 = vpop.xlane.xlu0 %2945
        %v2947 = vsel %vm2490, %v2796, 0.0
        %2948 = vadd.xlane.f32.xlu0 %v2947
        %v2949 = vpop.xlane.xlu0 %2948
        %v2950 = vsel %vm2490, %v2798, 0.0
        %2951 = vadd.xlane.f32.xlu0 %v2950
        %v2952 = vpop.xlane.xlu0 %2951
        %v2953 = vsel %vm2490, %v2800, 0.0
        %2954 = vadd.xlane.f32.xlu0 %v2953
        %v2955 = vpop.xlane.xlu0 %2954
        %v2956 = vsel %vm2490, %v2802, 0.0
        %2957 = vadd.xlane.f32.xlu0 %v2956
        %v2958 = vpop.xlane.xlu0 %2957
        %v2959 = vsel %vm2490, %v2804, 0.0
        %2960 = vadd.xlane.f32.xlu0 %v2959
        %v2961 = vpop.xlane.xlu0 %2960
        %v2962 = vsel %vm2490, %v2806, 0.0
        %2963 = vadd.xlane.f32.xlu0 %v2962
        %v2964 = vpop.xlane.xlu0 %2963
        %v2965 = vsel %vm2490, %v2808, 0.0
        %2966 = vadd.xlane.f32.xlu0 %v2965
        %v2967 = vpop.xlane.xlu0 %2966
        %v2968 = vsel %vm2490, %v2810, 0.0
        %2969 = vadd.xlane.f32.xlu0 %v2968
        %v2970 = vpop.xlane.xlu0 %2969
        %v2971 = vsel %vm2490, %v2812, 0.0
        %2972 = vadd.xlane.f32.xlu0 %v2971
        %v2973 = vpop.xlane.xlu0 %2972
        %v2974 = vsel %vm2490, %v2814, 0.0
        %2975 = vadd.xlane.f32.xlu0 %v2974
        %v2976 = vpop.xlane.xlu0 %2975
        %v2977 = vsel %vm2490, %v2816, 0.0
        %2978 = vadd.xlane.f32.xlu0 %v2977
        %v2979 = vpop.xlane.xlu0 %2978
        %v2980 = vsel %vm2490, %v2818, 0.0
        %2981 = vadd.xlane.f32.xlu0 %v2980
        %v2982 = vpop.xlane.xlu0 %2981
        %v2983 = vsel %vm2490, %v2820, 0.0
        %2984 = vadd.xlane.f32.xlu0 %v2983
        %v2985 = vpop.xlane.xlu0 %2984
        %v2986 = vsel %vm2490, %v2822, 0.0
        %2987 = vadd.xlane.f32.xlu0 %v2986
        %v2988 = vpop.xlane.xlu0 %2987
        %v2989 = vsel %vm2490, %v2824, 0.0
        %2990 = vadd.xlane.f32.xlu0 %v2989
        %v2991 = vpop.xlane.xlu0 %2990
        %v2992 = vsel %vm2490, %v2826, 0.0
        %2993 = vadd.xlane.f32.xlu0 %v2992
        %v2994 = vpop.xlane.xlu0 %2993
        %v2995 = vsel %vm2490, %v2828, 0.0
        %2996 = vadd.xlane.f32.xlu0 %v2995
        %v2997 = vpop.xlane.xlu0 %2996
        %v2998 = vsel %vm2490, %v2830, 0.0
        %2999 = vadd.xlane.f32.xlu0 %v2998
        %v3000 = vpop.xlane.xlu0 %2999
        %v3001 = vsel %vm2490, %v2832, 0.0
        %3002 = vadd.xlane.f32.xlu0 %v3001
        %v3003 = vpop.xlane.xlu0 %3002
        %v3004 = vsel %vm2490, %v2834, 0.0
        %3005 = vadd.xlane.f32.xlu0 %v3004
        %v3006 = vpop.xlane.xlu0 %3005
        %v3007 = vsel %vm2490, %v2836, 0.0
        %3008 = vadd.xlane.f32.xlu0 %v3007
        %v3009 = vpop.xlane.xlu0 %3008
        %v3010 = vsel %vm2490, %v2838, 0.0
        %3011 = vadd.xlane.f32.xlu0 %v3010
        %v3012 = vpop.xlane.xlu0 %3011
        %v3013 = vsel %vm2490, %v2840, 0.0
        %3014 = vadd.xlane.f32.xlu0 %v3013
        %v3015 = vpop.xlane.xlu0 %3014
        %v3016 = vsel %vm2490, %v2842, 0.0
        %3017 = vadd.xlane.f32.xlu0 %v3016
        %v3018 = vpop.xlane.xlu0 %3017
        %v3019 = vsel %vm2490, %v2844, 0.0
        %3020 = vadd.xlane.f32.xlu0 %v3019
        %v3021 = vpop.xlane.xlu0 %3020
        %v3022 = vsel %vm2490, %v2846, 0.0
        %3023 = vadd.xlane.f32.xlu0 %v3022
        %v3024 = vpop.xlane.xlu0 %3023
        %v3025 = vsel %vm2490, %v2848, 0.0
        %3026 = vadd.xlane.f32.xlu0 %v3025
        %v3027 = vpop.xlane.xlu0 %3026
        %v3028 = vsel %vm2490, %v2850, 0.0
        %3029 = vadd.xlane.f32.xlu0 %v3028
        %v3030 = vpop.xlane.xlu0 %3029
        %v3031 = vsel %vm2490, %v2852, 0.0
        %3032 = vadd.xlane.f32.xlu0 %v3031
        %v3033 = vpop.xlane.xlu0 %3032
        %v3034 = vsel %vm2490, %v2854, 0.0
        %3035 = vadd.xlane.f32.xlu0 %v3034
        %v3036 = vpop.xlane.xlu0 %3035
        %v3037 = vsel %vm2490, %v2856, 0.0
        %3038 = vadd.xlane.f32.xlu0 %v3037
        %v3039 = vpop.xlane.xlu0 %3038
        %v3040 = vsel %vm2490, %v2858, 0.0
        %3041 = vadd.xlane.f32.xlu0 %v3040
        %v3042 = vpop.xlane.xlu0 %3041
        %v3043 = vsel %vm2490, %v2860, 0.0
        %3044 = vadd.xlane.f32.xlu0 %v3043
        %v3045 = vpop.xlane.xlu0 %3044
        %v3046 = vsel %vm2490, %v2862, 0.0
        %3047 = vadd.xlane.f32.xlu0 %v3046
        %v3048 = vpop.xlane.xlu0 %3047
        %v3049 = vsel %vm2490, %v2864, 0.0
        %3050 = vadd.xlane.f32.xlu0 %v3049
        %v3051 = vpop.xlane.xlu0 %3050
        %v3052 = vsel %vm2490, %v2866, 0.0
        %3053 = vadd.xlane.f32.xlu0 %v3052
        %v3054 = vpop.xlane.xlu0 %3053
        %v3055 = vsel %vm2490, %v2868, 0.0
        %3056 = vadd.xlane.f32.xlu0 %v3055
        %v3057 = vpop.xlane.xlu0 %3056
        %v3058 = vsel %vm2490, %v2870, 0.0
        %3059 = vadd.xlane.f32.xlu0 %v3058
        %v3060 = vpop.xlane.xlu0 %3059
        %v3061 = vsel %vm2490, %v2872, 0.0
        %3062 = vadd.xlane.f32.xlu0 %v3061
        %v3063 = vpop.xlane.xlu0 %3062
        %v3064 = vsel %vm2490, %v2874, 0.0
        %3065 = vadd.xlane.f32.xlu0 %v3064
        %v3066 = vpop.xlane.xlu0 %3065
        %v3067 = vrcp.pop %v2877
        %v3068 = vrcp.pop %v2880
        %v3069 = vrcp.pop %v2883
        %v3070 = vrcp.pop %v2886
        %v3071 = vrcp.pop %v2889
        %v3072 = vrcp.pop %v2892
        %v3073 = vrcp.pop %v2895
        %v3074 = vrcp.pop %v2898
        %v3075 = vrcp.pop %v2901
        %v3076 = vrcp.pop %v2904
        %v3077 = vrcp.pop %v2907
        %v3078 = vrcp.pop %v2910
        %v3079 = vrcp.pop %v2913
        %v3080 = vrcp.pop %v2916
        %v3081 = vrcp.pop %v2919
        %v3082 = vrcp.pop %v2922
        %v3083 = vrcp.pop %v2925
        %v3084 = vrcp.pop %v2928
        %v3085 = vrcp.pop %v2931
        %v3086 = vrcp.pop %v2934
        %v3087 = vrcp.pop %v2937
        %v3088 = vrcp.pop %v2940
        %v3089 = vrcp.pop %v2943
        %v3090 = vrcp.pop %v2946
        %v3091 = vrcp.pop %v2949
        %v3092 = vrcp.pop %v2952
        %v3093 = vrcp.pop %v2955
        %v3094 = vrcp.pop %v2958
        %v3095 = vrcp.pop %v2961
        %v3096 = vrcp.pop %v2964
        %v3097 = vrcp.pop %v2967
        %v3098 = vrcp.pop %v2970
        %v3099 = vrcp.pop %v2973
        %v3100 = vrcp.pop %v2976
        %v3101 = vrcp.pop %v2979
        %v3102 = vrcp.pop %v2982
        %v3103 = vrcp.pop %v2985
        %v3104 = vrcp.pop %v2988
        %v3105 = vrcp.pop %v2991
        %v3106 = vrcp.pop %v2994
        %v3107 = vrcp.pop %v2997
        %v3108 = vrcp.pop %v3000
        %v3109 = vrcp.pop %v3003
        %v3110 = vrcp.pop %v3006
        %v3111 = vrcp.pop %v3009
        %v3112 = vrcp.pop %v3012
        %v3113 = vrcp.pop %v3015
        %v3114 = vrcp.pop %v3018
        %v3115 = vrcp.pop %v3021
        %v3116 = vrcp.pop %v3024
        %v3117 = vrcp.pop %v3027
        %v3118 = vrcp.pop %v3030
        %v3119 = vrcp.pop %v3033
        %v3120 = vrcp.pop %v3036
        %v3121 = vrcp.pop %v3039
        %v3122 = vrcp.pop %v3042
        %v3123 = vrcp.pop %v3045
        %v3124 = vrcp.pop %v3048
        %v3125 = vrcp.pop %v3051
        %v3126 = vrcp.pop %v3054
        %v3127 = vrcp.pop %v3057
        %v3128 = vrcp.pop %v3060
        %v3129 = vrcp.pop %v3063
        %v3130 = vrcp.pop %v3066
        %v3131 = vmul.f32 %v2748, %v3067
        %v3132 = vmul.f32 %v2750, %v3068
        %v3133 = vmul.f32 %v2752, %v3069
        %v3134 = vmul.f32 %v2754, %v3070
        %v3135 = vmul.f32 %v2756, %v3071
        %v3136 = vmul.f32 %v2758, %v3072
        %v3137 = vmul.f32 %v2760, %v3073
        %v3138 = vmul.f32 %v2762, %v3074
        %v3139 = vmul.f32 %v2764, %v3075
        %v3140 = vmul.f32 %v2766, %v3076
        %v3141 = vmul.f32 %v2768, %v3077
        %v3142 = vmul.f32 %v2770, %v3078
        %v3143 = vmul.f32 %v2772, %v3079
        %v3144 = vmul.f32 %v2774, %v3080
        %v3145 = vmul.f32 %v2776, %v3081
        %v3146 = vmul.f32 %v2778, %v3082
        %v3147 = vmul.f32 %v2780, %v3083
        %v3148 = vmul.f32 %v2782, %v3084
        %v3149 = vmul.f32 %v2784, %v3085
        %v3150 = vmul.f32 %v2786, %v3086
        %v3151 = vmul.f32 %v2788, %v3087
        %v3152 = vmul.f32 %v2790, %v3088
        %v3153 = vmul.f32 %v2792, %v3089
        %v3154 = vmul.f32 %v2794, %v3090
        %v3155 = vmul.f32 %v2796, %v3091
        %v3156 = vmul.f32 %v2798, %v3092
        %v3157 = vmul.f32 %v2800, %v3093
        %v3158 = vmul.f32 %v2802, %v3094
        %v3159 = vmul.f32 %v2804, %v3095
        %v3160 = vmul.f32 %v2806, %v3096
        %v3161 = vmul.f32 %v2808, %v3097
        %v3162 = vmul.f32 %v2810, %v3098
        %v3163 = vmul.f32 %v2812, %v3099
        %v3164 = vmul.f32 %v2814, %v3100
        %v3165 = vmul.f32 %v2816, %v3101
        %v3166 = vmul.f32 %v2818, %v3102
        %v3167 = vmul.f32 %v2820, %v3103
        %v3168 = vmul.f32 %v2822, %v3104
        %v3169 = vmul.f32 %v2824, %v3105
        %v3170 = vmul.f32 %v2826, %v3106
        %v3171 = vmul.f32 %v2828, %v3107
        %v3172 = vmul.f32 %v2830, %v3108
        %v3173 = vmul.f32 %v2832, %v3109
        %v3174 = vmul.f32 %v2834, %v3110
        %v3175 = vmul.f32 %v2836, %v3111
        %v3176 = vmul.f32 %v2838, %v3112
        %v3177 = vmul.f32 %v2840, %v3113
        %v3178 = vmul.f32 %v2842, %v3114
        %v3179 = vmul.f32 %v2844, %v3115
        %v3180 = vmul.f32 %v2846, %v3116
        %v3181 = vmul.f32 %v2848, %v3117
        %v3182 = vmul.f32 %v2850, %v3118
        %v3183 = vmul.f32 %v2852, %v3119
        %v3184 = vmul.f32 %v2854, %v3120
        %v3185 = vmul.f32 %v2856, %v3121
        %v3186 = vmul.f32 %v2858, %v3122
        %v3187 = vmul.f32 %v2860, %v3123
        %v3188 = vmul.f32 %v2862, %v3124
        %v3189 = vmul.f32 %v2864, %v3125
        %v3190 = vmul.f32 %v2866, %v3126
        %v3191 = vmul.f32 %v2868, %v3127
        %v3192 = vmul.f32 %v2870, %v3128
        %v3193 = vmul.f32 %v2872, %v3129
        %v3194 = vmul.f32 %v2874, %v3130
        %v3195 = vpack.c.bf16 %v3132, %v3131
        %v3196 = vpack.c.bf16 %v3134, %v3133
        %v3197 = vpack.c.bf16 %v3136, %v3135
        %v3198 = vpack.c.bf16 %v3138, %v3137
        %v3199 = vpack.c.bf16 %v3140, %v3139
        %v3200 = vpack.c.bf16 %v3142, %v3141
        %v3201 = vpack.c.bf16 %v3144, %v3143
        %v3202 = vpack.c.bf16 %v3146, %v3145
        %v3203 = vpack.c.bf16 %v3148, %v3147
        %v3204 = vpack.c.bf16 %v3150, %v3149
        %v3205 = vpack.c.bf16 %v3152, %v3151
        %v3206 = vpack.c.bf16 %v3154, %v3153
        %v3207 = vpack.c.bf16 %v3156, %v3155
        %v3208 = vpack.c.bf16 %v3158, %v3157
        %v3209 = vpack.c.bf16 %v3160, %v3159
        %v3210 = vpack.c.bf16 %v3162, %v3161
        %v3211 = vpack.c.bf16 %v3164, %v3163
        %v3212 = vpack.c.bf16 %v3166, %v3165
        %v3213 = vpack.c.bf16 %v3168, %v3167
        %v3214 = vpack.c.bf16 %v3170, %v3169
        %v3215 = vpack.c.bf16 %v3172, %v3171
        %v3216 = vpack.c.bf16 %v3174, %v3173
        %v3217 = vpack.c.bf16 %v3176, %v3175
        %v3218 = vpack.c.bf16 %v3178, %v3177
        %v3219 = vpack.c.bf16 %v3180, %v3179
        %v3220 = vpack.c.bf16 %v3182, %v3181
        %v3221 = vpack.c.bf16 %v3184, %v3183
        %v3222 = vpack.c.bf16 %v3186, %v3185
        %v3223 = vpack.c.bf16 %v3188, %v3187
        %v3224 = vpack.c.bf16 %v3190, %v3189
        %v3225 = vpack.c.bf16 %v3192, %v3191
        %v3226 = vpack.c.bf16 %v3194, %v3193
        %v3228 = vsel %vm2490, %v3195, 0
        %v3231 = vsel %vm2490, %v3196, 0
        %v3234 = vsel %vm2490, %v3197, 0
        %v3237 = vsel %vm2490, %v3198, 0
        %3239 = vmatprep.subr.bf16.mxu0 0
        %3240 = vmatpush1.bf16.msra.mxu0 0
        %3241 = vmatprep.subr.bf16.mxu0 0
        %3242 = vmatpush1.bf16.msra.mxu0 0
        %3243 = vmatprep.subr.bf16.mxu0 0
        %3244 = vmatpush1.bf16.msra.mxu0 0
        %3245 = vmatprep.subr.bf16.mxu0 0
        %3246 = vmatpush1.bf16.msra.mxu0 0
        %3247 = vmatprep.subr.bf16.mxu0 %v1913
        %3248 = vmatpush1.bf16.msra.mxu0 %v1912
        %3249 = vmatprep.subr.bf16.mxu0 %v1911
        %3250 = vmatpush1.bf16.msra.mxu0 %v1910
        %3251 = vmatprep.subr.bf16.mxu0 %v1909
        %3252 = vmatpush1.bf16.msra.mxu0 %v1908
        %3253 = vmatprep.subr.bf16.mxu0 %v1907
        %3254 = vmatpush1.bf16.msra.mxu0 %v1906
        %3255 = vmatprep.subr.bf16.mxu0 0
        %3256 = vmatpush2.bf16.msra.mxu0 0
        %3257 = vmatprep.subr.bf16.mxu0 0
        %3258 = vmatpush2.bf16.msra.mxu0 0
        %3259 = vmatprep.subr.bf16.mxu0 0
        %3260 = vmatpush2.bf16.msra.mxu0 0
        %3261 = vmatprep.subr.bf16.mxu0 0
        %3262 = vmatpush2.bf16.msra.mxu0 0
        %3263 = vmatprep.subr.bf16.mxu0 0
        %3264 = vmatpush2.bf16.msra.mxu0 0
        %3265 = vmatprep.subr.bf16.mxu0 0
        %3266 = vmatpush2.bf16.msra.mxu0 0
        %3267 = vmatprep.subr.bf16.mxu0 0
        %3268 = vmatpush2.bf16.msra.mxu0 0
        %3269 = vmatprep.subr.bf16.mxu0 0
        %3270 = vmatpush2.bf16.msra.mxu0 0
        %3271 = vmatprep.mubr.bf16.mxu0 0
        %3272 = vmatmul.mubr.bf16.gmra.mxu0 %v3228
        %v3273 = vpop.f32.mrf.mxu0
        %v3274 = vadd.f32 0.0, %v3273
        %v3275 = vpop.f32.mrf.mxu0
        %v3276 = vadd.f32 0.0, %v3275
        %v3277 = vpop.f32.mrf.mxu0
        %v3278 = vadd.f32 0.0, %v3277
        %v3279 = vpop.f32.mrf.mxu0
        %v3280 = vadd.f32 0.0, %v3279
        %3281 = vmatprep.mubr.bf16.mxu0 0
        %3282 = vmatmul.mubr.bf16.gmra.mxu0 %v3231
        %v3283 = vpop.f32.mrf.mxu0
        %v3284 = vadd.f32 0.0, %v3283
        %v3285 = vpop.f32.mrf.mxu0
        %v3286 = vadd.f32 0.0, %v3285
        %v3287 = vpop.f32.mrf.mxu0
        %v3288 = vadd.f32 0.0, %v3287
        %v3289 = vpop.f32.mrf.mxu0
        %v3290 = vadd.f32 0.0, %v3289
        %3291 = vmatprep.mubr.bf16.mxu0 0
        %3292 = vmatmul.mubr.bf16.gmra.mxu0 %v3234
        %v3293 = vpop.f32.mrf.mxu0
        %v3294 = vadd.f32 0.0, %v3293
        %v3295 = vpop.f32.mrf.mxu0
        %v3296 = vadd.f32 0.0, %v3295
        %v3297 = vpop.f32.mrf.mxu0
        %v3298 = vadd.f32 0.0, %v3297
        %v3299 = vpop.f32.mrf.mxu0
        %v3300 = vadd.f32 0.0, %v3299
        %3301 = vmatprep.mubr.bf16.mxu0 0
        %3302 = vmatmul.mubr.bf16.gmra.mxu0 %v3237
        %v3303 = vpop.f32.mrf.mxu0
        %v3304 = vadd.f32 0.0, %v3303
        %v3305 = vpop.f32.mrf.mxu0
        %v3306 = vadd.f32 0.0, %v3305
        %v3307 = vpop.f32.mrf.mxu0
        %v3308 = vadd.f32 0.0, %v3307
        %v3309 = vpop.f32.mrf.mxu0
        %v3310 = vadd.f32 0.0, %v3309
        %3311 = vdwg.mxu0
        %v3313 = vsel %vm2490, %v3199, 0
        %v3316 = vsel %vm2490, %v3200, 0
        %v3319 = vsel %vm2490, %v3201, 0
        %v3322 = vsel %vm2490, %v3202, 0
        %3324 = vmatprep.subr.bf16.mxu0 0
        %3325 = vmatpush1.bf16.msra.mxu0 0
        %3326 = vmatprep.subr.bf16.mxu0 0
        %3327 = vmatpush1.bf16.msra.mxu0 0
        %3328 = vmatprep.subr.bf16.mxu0 0
        %3329 = vmatpush1.bf16.msra.mxu0 0
        %3330 = vmatprep.subr.bf16.mxu0 0
        %3331 = vmatpush1.bf16.msra.mxu0 0
        %3332 = vmatprep.subr.bf16.mxu0 %v1921
        %3333 = vmatpush1.bf16.msra.mxu0 %v1920
        %3334 = vmatprep.subr.bf16.mxu0 %v1919
        %3335 = vmatpush1.bf16.msra.mxu0 %v1918
        %3336 = vmatprep.subr.bf16.mxu0 %v1917
        %3337 = vmatpush1.bf16.msra.mxu0 %v1916
        %3338 = vmatprep.subr.bf16.mxu0 %v1915
        %3339 = vmatpush1.bf16.msra.mxu0 %v1914
        %3340 = vmatprep.subr.bf16.mxu0 0
        %3341 = vmatpush2.bf16.msra.mxu0 0
        %3342 = vmatprep.subr.bf16.mxu0 0
        %3343 = vmatpush2.bf16.msra.mxu0 0
        %3344 = vmatprep.subr.bf16.mxu0 0
        %3345 = vmatpush2.bf16.msra.mxu0 0
        %3346 = vmatprep.subr.bf16.mxu0 0
        %3347 = vmatpush2.bf16.msra.mxu0 0
        %3348 = vmatprep.subr.bf16.mxu0 0
        %3349 = vmatpush2.bf16.msra.mxu0 0
        %3350 = vmatprep.subr.bf16.mxu0 0
        %3351 = vmatpush2.bf16.msra.mxu0 0
        %3352 = vmatprep.subr.bf16.mxu0 0
        %3353 = vmatpush2.bf16.msra.mxu0 0
        %3354 = vmatprep.subr.bf16.mxu0 0
        %3355 = vmatpush2.bf16.msra.mxu0 0
        %3356 = vmatprep.mubr.bf16.mxu0 0
        %3357 = vmatmul.mubr.bf16.gmra.mxu0 %v3313
        %v3358 = vpop.f32.mrf.mxu0
        %v3359 = vadd.f32 0.0, %v3358
        %v3360 = vpop.f32.mrf.mxu0
        %v3361 = vadd.f32 0.0, %v3360
        %v3362 = vpop.f32.mrf.mxu0
        %v3363 = vadd.f32 0.0, %v3362
        %v3364 = vpop.f32.mrf.mxu0
        %v3365 = vadd.f32 0.0, %v3364
        %3366 = vmatprep.mubr.bf16.mxu0 0
        %3367 = vmatmul.mubr.bf16.gmra.mxu0 %v3316
        %v3368 = vpop.f32.mrf.mxu0
        %v3369 = vadd.f32 0.0, %v3368
        %v3370 = vpop.f32.mrf.mxu0
        %v3371 = vadd.f32 0.0, %v3370
        %v3372 = vpop.f32.mrf.mxu0
        %v3373 = vadd.f32 0.0, %v3372
        %v3374 = vpop.f32.mrf.mxu0
        %v3375 = vadd.f32 0.0, %v3374
        %3376 = vmatprep.mubr.bf16.mxu0 0
        %3377 = vmatmul.mubr.bf16.gmra.mxu0 %v3319
        %v3378 = vpop.f32.mrf.mxu0
        %v3379 = vadd.f32 0.0, %v3378
        %v3380 = vpop.f32.mrf.mxu0
        %v3381 = vadd.f32 0.0, %v3380
        %v3382 = vpop.f32.mrf.mxu0
        %v3383 = vadd.f32 0.0, %v3382
        %v3384 = vpop.f32.mrf.mxu0
        %v3385 = vadd.f32 0.0, %v3384
        %3386 = vmatprep.mubr.bf16.mxu0 0
        %3387 = vmatmul.mubr.bf16.gmra.mxu0 %v3322
        %v3388 = vpop.f32.mrf.mxu0
        %v3389 = vadd.f32 0.0, %v3388
        %v3390 = vpop.f32.mrf.mxu0
        %v3391 = vadd.f32 0.0, %v3390
        %v3392 = vpop.f32.mrf.mxu0
        %v3393 = vadd.f32 0.0, %v3392
        %v3394 = vpop.f32.mrf.mxu0
        %v3395 = vadd.f32 0.0, %v3394
        %3396 = vdwg.mxu0
        %v3398 = vsel %vm2490, %v3203, 0
        %v3401 = vsel %vm2490, %v3204, 0
        %v3404 = vsel %vm2490, %v3205, 0
        %v3407 = vsel %vm2490, %v3206, 0
        %3409 = vmatprep.subr.bf16.mxu0 0
        %3410 = vmatpush1.bf16.msra.mxu0 0
        %3411 = vmatprep.subr.bf16.mxu0 0
        %3412 = vmatpush1.bf16.msra.mxu0 0
        %3413 = vmatprep.subr.bf16.mxu0 0
        %3414 = vmatpush1.bf16.msra.mxu0 0
        %3415 = vmatprep.subr.bf16.mxu0 0
        %3416 = vmatpush1.bf16.msra.mxu0 0
        %3417 = vmatprep.subr.bf16.mxu0 %v1929
        %3418 = vmatpush1.bf16.msra.mxu0 %v1928
        %3419 = vmatprep.subr.bf16.mxu0 %v1927
        %3420 = vmatpush1.bf16.msra.mxu0 %v1926
        %3421 = vmatprep.subr.bf16.mxu0 %v1925
        %3422 = vmatpush1.bf16.msra.mxu0 %v1924
        %3423 = vmatprep.subr.bf16.mxu0 %v1923
        %3424 = vmatpush1.bf16.msra.mxu0 %v1922
        %3425 = vmatprep.subr.bf16.mxu0 0
        %3426 = vmatpush2.bf16.msra.mxu0 0
        %3427 = vmatprep.subr.bf16.mxu0 0
        %3428 = vmatpush2.bf16.msra.mxu0 0
        %3429 = vmatprep.subr.bf16.mxu0 0
        %3430 = vmatpush2.bf16.msra.mxu0 0
        %3431 = vmatprep.subr.bf16.mxu0 0
        %3432 = vmatpush2.bf16.msra.mxu0 0
        %3433 = vmatprep.subr.bf16.mxu0 0
        %3434 = vmatpush2.bf16.msra.mxu0 0
        %3435 = vmatprep.subr.bf16.mxu0 0
        %3436 = vmatpush2.bf16.msra.mxu0 0
        %3437 = vmatprep.subr.bf16.mxu0 0
        %3438 = vmatpush2.bf16.msra.mxu0 0
        %3439 = vmatprep.subr.bf16.mxu0 0
        %3440 = vmatpush2.bf16.msra.mxu0 0
        %3441 = vmatprep.mubr.bf16.mxu0 0
        %3442 = vmatmul.mubr.bf16.gmra.mxu0 %v3398
        %v3443 = vpop.f32.mrf.mxu0
        %v3444 = vadd.f32 0.0, %v3443
        %v3445 = vpop.f32.mrf.mxu0
        %v3446 = vadd.f32 0.0, %v3445
        %v3447 = vpop.f32.mrf.mxu0
        %v3448 = vadd.f32 0.0, %v3447
        %v3449 = vpop.f32.mrf.mxu0
        %v3450 = vadd.f32 0.0, %v3449
        %3451 = vmatprep.mubr.bf16.mxu0 0
        %3452 = vmatmul.mubr.bf16.gmra.mxu0 %v3401
        %v3453 = vpop.f32.mrf.mxu0
        %v3454 = vadd.f32 0.0, %v3453
        %v3455 = vpop.f32.mrf.mxu0
        %v3456 = vadd.f32 0.0, %v3455
        %v3457 = vpop.f32.mrf.mxu0
        %v3458 = vadd.f32 0.0, %v3457
        %v3459 = vpop.f32.mrf.mxu0
        %v3460 = vadd.f32 0.0, %v3459
        %3461 = vmatprep.mubr.bf16.mxu0 0
        %3462 = vmatmul.mubr.bf16.gmra.mxu0 %v3404
        %v3463 = vpop.f32.mrf.mxu0
        %v3464 = vadd.f32 0.0, %v3463
        %v3465 = vpop.f32.mrf.mxu0
        %v3466 = vadd.f32 0.0, %v3465
        %v3467 = vpop.f32.mrf.mxu0
        %v3468 = vadd.f32 0.0, %v3467
        %v3469 = vpop.f32.mrf.mxu0
        %v3470 = vadd.f32 0.0, %v3469
        %3471 = vmatprep.mubr.bf16.mxu0 0
        %3472 = vmatmul.mubr.bf16.gmra.mxu0 %v3407
        %v3473 = vpop.f32.mrf.mxu0
        %v3474 = vadd.f32 0.0, %v3473
        %v3475 = vpop.f32.mrf.mxu0
        %v3476 = vadd.f32 0.0, %v3475
        %v3477 = vpop.f32.mrf.mxu0
        %v3478 = vadd.f32 0.0, %v3477
        %v3479 = vpop.f32.mrf.mxu0
        %v3480 = vadd.f32 0.0, %v3479
        %3481 = vdwg.mxu0
        %v3483 = vsel %vm2490, %v3207, 0
        %v3486 = vsel %vm2490, %v3208, 0
        %v3489 = vsel %vm2490, %v3209, 0
        %v3492 = vsel %vm2490, %v3210, 0
        %3494 = vmatprep.subr.bf16.mxu0 0
        %3495 = vmatpush1.bf16.msra.mxu0 0
        %3496 = vmatprep.subr.bf16.mxu0 0
        %3497 = vmatpush1.bf16.msra.mxu0 0
        %3498 = vmatprep.subr.bf16.mxu0 0
        %3499 = vmatpush1.bf16.msra.mxu0 0
        %3500 = vmatprep.subr.bf16.mxu0 0
        %3501 = vmatpush1.bf16.msra.mxu0 0
        %3502 = vmatprep.subr.bf16.mxu0 %v1937
        %3503 = vmatpush1.bf16.msra.mxu0 %v1936
        %3504 = vmatprep.subr.bf16.mxu0 %v1935
        %3505 = vmatpush1.bf16.msra.mxu0 %v1934
        %3506 = vmatprep.subr.bf16.mxu0 %v1933
        %3507 = vmatpush1.bf16.msra.mxu0 %v1932
        %3508 = vmatprep.subr.bf16.mxu0 %v1931
        %3509 = vmatpush1.bf16.msra.mxu0 %v1930
        %3510 = vmatprep.subr.bf16.mxu0 0
        %3511 = vmatpush2.bf16.msra.mxu0 0
        %3512 = vmatprep.subr.bf16.mxu0 0
        %3513 = vmatpush2.bf16.msra.mxu0 0
        %3514 = vmatprep.subr.bf16.mxu0 0
        %3515 = vmatpush2.bf16.msra.mxu0 0
        %3516 = vmatprep.subr.bf16.mxu0 0
        %3517 = vmatpush2.bf16.msra.mxu0 0
        %3518 = vmatprep.subr.bf16.mxu0 0
        %3519 = vmatpush2.bf16.msra.mxu0 0
        %3520 = vmatprep.subr.bf16.mxu0 0
        %3521 = vmatpush2.bf16.msra.mxu0 0
        %3522 = vmatprep.subr.bf16.mxu0 0
        %3523 = vmatpush2.bf16.msra.mxu0 0
        %3524 = vmatprep.subr.bf16.mxu0 0
        %3525 = vmatpush2.bf16.msra.mxu0 0
        %3526 = vmatprep.mubr.bf16.mxu0 0
        %3527 = vmatmul.mubr.bf16.gmra.mxu0 %v3483
        %v3528 = vpop.f32.mrf.mxu0
        %v3529 = vadd.f32 0.0, %v3528
        %v3530 = vpop.f32.mrf.mxu0
        %v3531 = vadd.f32 0.0, %v3530
        %v3532 = vpop.f32.mrf.mxu0
        %v3533 = vadd.f32 0.0, %v3532
        %v3534 = vpop.f32.mrf.mxu0
        %v3535 = vadd.f32 0.0, %v3534
        %3536 = vmatprep.mubr.bf16.mxu0 0
        %3537 = vmatmul.mubr.bf16.gmra.mxu0 %v3486
        %v3538 = vpop.f32.mrf.mxu0
        %v3539 = vadd.f32 0.0, %v3538
        %v3540 = vpop.f32.mrf.mxu0
        %v3541 = vadd.f32 0.0, %v3540
        %v3542 = vpop.f32.mrf.mxu0
        %v3543 = vadd.f32 0.0, %v3542
        %v3544 = vpop.f32.mrf.mxu0
        %v3545 = vadd.f32 0.0, %v3544
        %3546 = vmatprep.mubr.bf16.mxu0 0
        %3547 = vmatmul.mubr.bf16.gmra.mxu0 %v3489
        %v3548 = vpop.f32.mrf.mxu0
        %v3549 = vadd.f32 0.0, %v3548
        %v3550 = vpop.f32.mrf.mxu0
        %v3551 = vadd.f32 0.0, %v3550
        %v3552 = vpop.f32.mrf.mxu0
        %v3553 = vadd.f32 0.0, %v3552
        %v3554 = vpop.f32.mrf.mxu0
        %v3555 = vadd.f32 0.0, %v3554
        %3556 = vmatprep.mubr.bf16.mxu0 0
        %3557 = vmatmul.mubr.bf16.gmra.mxu0 %v3492
        %v3558 = vpop.f32.mrf.mxu0
        %v3559 = vadd.f32 0.0, %v3558
        %v3560 = vpop.f32.mrf.mxu0
        %v3561 = vadd.f32 0.0, %v3560
        %v3562 = vpop.f32.mrf.mxu0
        %v3563 = vadd.f32 0.0, %v3562
        %v3564 = vpop.f32.mrf.mxu0
        %v3565 = vadd.f32 0.0, %v3564
        %3566 = vdwg.mxu0
        %v3568 = vsel %vm2490, %v3211, 0
        %v3571 = vsel %vm2490, %v3212, 0
        %v3574 = vsel %vm2490, %v3213, 0
        %v3577 = vsel %vm2490, %v3214, 0
        %3579 = vmatprep.subr.bf16.mxu0 0
        %3580 = vmatpush1.bf16.msra.mxu0 0
        %3581 = vmatprep.subr.bf16.mxu0 0
        %3582 = vmatpush1.bf16.msra.mxu0 0
        %3583 = vmatprep.subr.bf16.mxu0 0
        %3584 = vmatpush1.bf16.msra.mxu0 0
        %3585 = vmatprep.subr.bf16.mxu0 0
        %3586 = vmatpush1.bf16.msra.mxu0 0
        %3587 = vmatprep.subr.bf16.mxu0 %v1945
        %3588 = vmatpush1.bf16.msra.mxu0 %v1944
        %3589 = vmatprep.subr.bf16.mxu0 %v1943
        %3590 = vmatpush1.bf16.msra.mxu0 %v1942
        %3591 = vmatprep.subr.bf16.mxu0 %v1941
        %3592 = vmatpush1.bf16.msra.mxu0 %v1940
        %3593 = vmatprep.subr.bf16.mxu0 %v1939
        %3594 = vmatpush1.bf16.msra.mxu0 %v1938
        %3595 = vmatprep.subr.bf16.mxu0 0
        %3596 = vmatpush2.bf16.msra.mxu0 0
        %3597 = vmatprep.subr.bf16.mxu0 0
        %3598 = vmatpush2.bf16.msra.mxu0 0
        %3599 = vmatprep.subr.bf16.mxu0 0
        %3600 = vmatpush2.bf16.msra.mxu0 0
        %3601 = vmatprep.subr.bf16.mxu0 0
        %3602 = vmatpush2.bf16.msra.mxu0 0
        %3603 = vmatprep.subr.bf16.mxu0 0
        %3604 = vmatpush2.bf16.msra.mxu0 0
        %3605 = vmatprep.subr.bf16.mxu0 0
        %3606 = vmatpush2.bf16.msra.mxu0 0
        %3607 = vmatprep.subr.bf16.mxu0 0
        %3608 = vmatpush2.bf16.msra.mxu0 0
        %3609 = vmatprep.subr.bf16.mxu0 0
        %3610 = vmatpush2.bf16.msra.mxu0 0
        %3611 = vmatprep.mubr.bf16.mxu0 0
        %3612 = vmatmul.mubr.bf16.gmra.mxu0 %v3568
        %v3613 = vpop.f32.mrf.mxu0
        %v3614 = vadd.f32 0.0, %v3613
        %v3615 = vpop.f32.mrf.mxu0
        %v3616 = vadd.f32 0.0, %v3615
        %v3617 = vpop.f32.mrf.mxu0
        %v3618 = vadd.f32 0.0, %v3617
        %v3619 = vpop.f32.mrf.mxu0
        %v3620 = vadd.f32 0.0, %v3619
        %3621 = vmatprep.mubr.bf16.mxu0 0
        %3622 = vmatmul.mubr.bf16.gmra.mxu0 %v3571
        %v3623 = vpop.f32.mrf.mxu0
        %v3624 = vadd.f32 0.0, %v3623
        %v3625 = vpop.f32.mrf.mxu0
        %v3626 = vadd.f32 0.0, %v3625
        %v3627 = vpop.f32.mrf.mxu0
        %v3628 = vadd.f32 0.0, %v3627
        %v3629 = vpop.f32.mrf.mxu0
        %v3630 = vadd.f32 0.0, %v3629
        %3631 = vmatprep.mubr.bf16.mxu0 0
        %3632 = vmatmul.mubr.bf16.gmra.mxu0 %v3574
        %v3633 = vpop.f32.mrf.mxu0
        %v3634 = vadd.f32 0.0, %v3633
        %v3635 = vpop.f32.mrf.mxu0
        %v3636 = vadd.f32 0.0, %v3635
        %v3637 = vpop.f32.mrf.mxu0
        %v3638 = vadd.f32 0.0, %v3637
        %v3639 = vpop.f32.mrf.mxu0
        %v3640 = vadd.f32 0.0, %v3639
        %3641 = vmatprep.mubr.bf16.mxu0 0
        %3642 = vmatmul.mubr.bf16.gmra.mxu0 %v3577
        %v3643 = vpop.f32.mrf.mxu0
        %v3644 = vadd.f32 0.0, %v3643
        %v3645 = vpop.f32.mrf.mxu0
        %v3646 = vadd.f32 0.0, %v3645
        %v3647 = vpop.f32.mrf.mxu0
        %v3648 = vadd.f32 0.0, %v3647
        %v3649 = vpop.f32.mrf.mxu0
        %v3650 = vadd.f32 0.0, %v3649
        %3651 = vdwg.mxu0
        %v3653 = vsel %vm2490, %v3215, 0
        %v3656 = vsel %vm2490, %v3216, 0
        %v3659 = vsel %vm2490, %v3217, 0
        %v3662 = vsel %vm2490, %v3218, 0
        %3664 = vmatprep.subr.bf16.mxu0 0
        %3665 = vmatpush1.bf16.msra.mxu0 0
        %3666 = vmatprep.subr.bf16.mxu0 0
        %3667 = vmatpush1.bf16.msra.mxu0 0
        %3668 = vmatprep.subr.bf16.mxu0 0
        %3669 = vmatpush1.bf16.msra.mxu0 0
        %3670 = vmatprep.subr.bf16.mxu0 0
        %3671 = vmatpush1.bf16.msra.mxu0 0
        %3672 = vmatprep.subr.bf16.mxu0 %v1953
        %3673 = vmatpush1.bf16.msra.mxu0 %v1952
        %3674 = vmatprep.subr.bf16.mxu0 %v1951
        %3675 = vmatpush1.bf16.msra.mxu0 %v1950
        %3676 = vmatprep.subr.bf16.mxu0 %v1949
        %3677 = vmatpush1.bf16.msra.mxu0 %v1948
        %3678 = vmatprep.subr.bf16.mxu0 %v1947
        %3679 = vmatpush1.bf16.msra.mxu0 %v1946
        %3680 = vmatprep.subr.bf16.mxu0 0
        %3681 = vmatpush2.bf16.msra.mxu0 0
        %3682 = vmatprep.subr.bf16.mxu0 0
        %3683 = vmatpush2.bf16.msra.mxu0 0
        %3684 = vmatprep.subr.bf16.mxu0 0
        %3685 = vmatpush2.bf16.msra.mxu0 0
        %3686 = vmatprep.subr.bf16.mxu0 0
        %3687 = vmatpush2.bf16.msra.mxu0 0
        %3688 = vmatprep.subr.bf16.mxu0 0
        %3689 = vmatpush2.bf16.msra.mxu0 0
        %3690 = vmatprep.subr.bf16.mxu0 0
        %3691 = vmatpush2.bf16.msra.mxu0 0
        %3692 = vmatprep.subr.bf16.mxu0 0
        %3693 = vmatpush2.bf16.msra.mxu0 0
        %3694 = vmatprep.subr.bf16.mxu0 0
        %3695 = vmatpush2.bf16.msra.mxu0 0
        %3696 = vmatprep.mubr.bf16.mxu0 0
        %3697 = vmatmul.mubr.bf16.gmra.mxu0 %v3653
        %v3698 = vpop.f32.mrf.mxu0
        %v3699 = vadd.f32 0.0, %v3698
        %v3700 = vpop.f32.mrf.mxu0
        %v3701 = vadd.f32 0.0, %v3700
        %v3702 = vpop.f32.mrf.mxu0
        %v3703 = vadd.f32 0.0, %v3702
        %v3704 = vpop.f32.mrf.mxu0
        %v3705 = vadd.f32 0.0, %v3704
        %3706 = vmatprep.mubr.bf16.mxu0 0
        %3707 = vmatmul.mubr.bf16.gmra.mxu0 %v3656
        %v3708 = vpop.f32.mrf.mxu0
        %v3709 = vadd.f32 0.0, %v3708
        %v3710 = vpop.f32.mrf.mxu0
        %v3711 = vadd.f32 0.0, %v3710
        %v3712 = vpop.f32.mrf.mxu0
        %v3713 = vadd.f32 0.0, %v3712
        %v3714 = vpop.f32.mrf.mxu0
        %v3715 = vadd.f32 0.0, %v3714
        %3716 = vmatprep.mubr.bf16.mxu0 0
        %3717 = vmatmul.mubr.bf16.gmra.mxu0 %v3659
        %v3718 = vpop.f32.mrf.mxu0
        %v3719 = vadd.f32 0.0, %v3718
        %v3720 = vpop.f32.mrf.mxu0
        %v3721 = vadd.f32 0.0, %v3720
        %v3722 = vpop.f32.mrf.mxu0
        %v3723 = vadd.f32 0.0, %v3722
        %v3724 = vpop.f32.mrf.mxu0
        %v3725 = vadd.f32 0.0, %v3724
        %3726 = vmatprep.mubr.bf16.mxu0 0
        %3727 = vmatmul.mubr.bf16.gmra.mxu0 %v3662
        %v3728 = vpop.f32.mrf.mxu0
        %v3729 = vadd.f32 0.0, %v3728
        %v3730 = vpop.f32.mrf.mxu0
        %v3731 = vadd.f32 0.0, %v3730
        %v3732 = vpop.f32.mrf.mxu0
        %v3733 = vadd.f32 0.0, %v3732
        %v3734 = vpop.f32.mrf.mxu0
        %v3735 = vadd.f32 0.0, %v3734
        %3736 = vdwg.mxu0
        %v3738 = vsel %vm2490, %v3219, 0
        %v3741 = vsel %vm2490, %v3220, 0
        %v3744 = vsel %vm2490, %v3221, 0
        %v3747 = vsel %vm2490, %v3222, 0
        %3749 = vmatprep.subr.bf16.mxu0 0
        %3750 = vmatpush1.bf16.msra.mxu0 0
        %3751 = vmatprep.subr.bf16.mxu0 0
        %3752 = vmatpush1.bf16.msra.mxu0 0
        %3753 = vmatprep.subr.bf16.mxu0 0
        %3754 = vmatpush1.bf16.msra.mxu0 0
        %3755 = vmatprep.subr.bf16.mxu0 0
        %3756 = vmatpush1.bf16.msra.mxu0 0
        %3757 = vmatprep.subr.bf16.mxu0 %v1961
        %3758 = vmatpush1.bf16.msra.mxu0 %v1960
        %3759 = vmatprep.subr.bf16.mxu0 %v1959
        %3760 = vmatpush1.bf16.msra.mxu0 %v1958
        %3761 = vmatprep.subr.bf16.mxu0 %v1957
        %3762 = vmatpush1.bf16.msra.mxu0 %v1956
        %3763 = vmatprep.subr.bf16.mxu0 %v1955
        %3764 = vmatpush1.bf16.msra.mxu0 %v1954
        %3765 = vmatprep.subr.bf16.mxu0 0
        %3766 = vmatpush2.bf16.msra.mxu0 0
        %3767 = vmatprep.subr.bf16.mxu0 0
        %3768 = vmatpush2.bf16.msra.mxu0 0
        %3769 = vmatprep.subr.bf16.mxu0 0
        %3770 = vmatpush2.bf16.msra.mxu0 0
        %3771 = vmatprep.subr.bf16.mxu0 0
        %3772 = vmatpush2.bf16.msra.mxu0 0
        %3773 = vmatprep.subr.bf16.mxu0 0
        %3774 = vmatpush2.bf16.msra.mxu0 0
        %3775 = vmatprep.subr.bf16.mxu0 0
        %3776 = vmatpush2.bf16.msra.mxu0 0
        %3777 = vmatprep.subr.bf16.mxu0 0
        %3778 = vmatpush2.bf16.msra.mxu0 0
        %3779 = vmatprep.subr.bf16.mxu0 0
        %3780 = vmatpush2.bf16.msra.mxu0 0
        %3781 = vmatprep.mubr.bf16.mxu0 0
        %3782 = vmatmul.mubr.bf16.gmra.mxu0 %v3738
        %v3783 = vpop.f32.mrf.mxu0
        %v3784 = vadd.f32 0.0, %v3783
        %v3785 = vpop.f32.mrf.mxu0
        %v3786 = vadd.f32 0.0, %v3785
        %v3787 = vpop.f32.mrf.mxu0
        %v3788 = vadd.f32 0.0, %v3787
        %v3789 = vpop.f32.mrf.mxu0
        %v3790 = vadd.f32 0.0, %v3789
        %3791 = vmatprep.mubr.bf16.mxu0 0
        %3792 = vmatmul.mubr.bf16.gmra.mxu0 %v3741
        %v3793 = vpop.f32.mrf.mxu0
        %v3794 = vadd.f32 0.0, %v3793
        %v3795 = vpop.f32.mrf.mxu0
        %v3796 = vadd.f32 0.0, %v3795
        %v3797 = vpop.f32.mrf.mxu0
        %v3798 = vadd.f32 0.0, %v3797
        %v3799 = vpop.f32.mrf.mxu0
        %v3800 = vadd.f32 0.0, %v3799
        %3801 = vmatprep.mubr.bf16.mxu0 0
        %3802 = vmatmul.mubr.bf16.gmra.mxu0 %v3744
        %v3803 = vpop.f32.mrf.mxu0
        %v3804 = vadd.f32 0.0, %v3803
        %v3805 = vpop.f32.mrf.mxu0
        %v3806 = vadd.f32 0.0, %v3805
        %v3807 = vpop.f32.mrf.mxu0
        %v3808 = vadd.f32 0.0, %v3807
        %v3809 = vpop.f32.mrf.mxu0
        %v3810 = vadd.f32 0.0, %v3809
        %3811 = vmatprep.mubr.bf16.mxu0 0
        %3812 = vmatmul.mubr.bf16.gmra.mxu0 %v3747
        %v3813 = vpop.f32.mrf.mxu0
        %v3814 = vadd.f32 0.0, %v3813
        %v3815 = vpop.f32.mrf.mxu0
        %v3816 = vadd.f32 0.0, %v3815
        %v3817 = vpop.f32.mrf.mxu0
        %v3818 = vadd.f32 0.0, %v3817
        %v3819 = vpop.f32.mrf.mxu0
        %v3820 = vadd.f32 0.0, %v3819
        %3821 = vdwg.mxu0
        %v3823 = vsel %vm2490, %v3223, 0
        %v3826 = vsel %vm2490, %v3224, 0
        %v3829 = vsel %vm2490, %v3225, 0
        %v3832 = vsel %vm2490, %v3226, 0
        %3834 = vmatprep.subr.bf16.mxu0 0
        %3835 = vmatpush1.bf16.msra.mxu0 0
        %3836 = vmatprep.subr.bf16.mxu0 0
        %3837 = vmatpush1.bf16.msra.mxu0 0
        %3838 = vmatprep.subr.bf16.mxu0 0
        %3839 = vmatpush1.bf16.msra.mxu0 0
        %3840 = vmatprep.subr.bf16.mxu0 0
        %3841 = vmatpush1.bf16.msra.mxu0 0
        %3842 = vmatprep.subr.bf16.mxu0 %v1969
        %3843 = vmatpush1.bf16.msra.mxu0 %v1968
        %3844 = vmatprep.subr.bf16.mxu0 %v1967
        %3845 = vmatpush1.bf16.msra.mxu0 %v1966
        %3846 = vmatprep.subr.bf16.mxu0 %v1965
        %3847 = vmatpush1.bf16.msra.mxu0 %v1964
        %3848 = vmatprep.subr.bf16.mxu0 %v1963
        %3849 = vmatpush1.bf16.msra.mxu0 %v1962
        %3850 = vmatprep.subr.bf16.mxu0 0
        %3851 = vmatpush2.bf16.msra.mxu0 0
        %3852 = vmatprep.subr.bf16.mxu0 0
        %3853 = vmatpush2.bf16.msra.mxu0 0
        %3854 = vmatprep.subr.bf16.mxu0 0
        %3855 = vmatpush2.bf16.msra.mxu0 0
        %3856 = vmatprep.subr.bf16.mxu0 0
        %3857 = vmatpush2.bf16.msra.mxu0 0
        %3858 = vmatprep.subr.bf16.mxu0 0
        %3859 = vmatpush2.bf16.msra.mxu0 0
        %3860 = vmatprep.subr.bf16.mxu0 0
        %3861 = vmatpush2.bf16.msra.mxu0 0
        %3862 = vmatprep.subr.bf16.mxu0 0
        %3863 = vmatpush2.bf16.msra.mxu0 0
        %3864 = vmatprep.subr.bf16.mxu0 0
        %3865 = vmatpush2.bf16.msra.mxu0 0
        %3866 = vmatprep.mubr.bf16.mxu0 0
        %3867 = vmatmul.mubr.bf16.gmra.mxu0 %v3823
        %v3868 = vpop.f32.mrf.mxu0
        %v3869 = vadd.f32 0.0, %v3868
        %v3870 = vpop.f32.mrf.mxu0
        %v3871 = vadd.f32 0.0, %v3870
        %v3872 = vpop.f32.mrf.mxu0
        %v3873 = vadd.f32 0.0, %v3872
        %v3874 = vpop.f32.mrf.mxu0
        %v3875 = vadd.f32 0.0, %v3874
        %3876 = vmatprep.mubr.bf16.mxu0 0
        %3877 = vmatmul.mubr.bf16.gmra.mxu0 %v3826
        %v3878 = vpop.f32.mrf.mxu0
        %v3879 = vadd.f32 0.0, %v3878
        %v3880 = vpop.f32.mrf.mxu0
        %v3881 = vadd.f32 0.0, %v3880
        %v3882 = vpop.f32.mrf.mxu0
        %v3883 = vadd.f32 0.0, %v3882
        %v3884 = vpop.f32.mrf.mxu0
        %v3885 = vadd.f32 0.0, %v3884
        %3886 = vmatprep.mubr.bf16.mxu0 0
        %3887 = vmatmul.mubr.bf16.gmra.mxu0 %v3829
        %v3888 = vpop.f32.mrf.mxu0
        %v3889 = vadd.f32 0.0, %v3888
        %v3890 = vpop.f32.mrf.mxu0
        %v3891 = vadd.f32 0.0, %v3890
        %v3892 = vpop.f32.mrf.mxu0
        %v3893 = vadd.f32 0.0, %v3892
        %v3894 = vpop.f32.mrf.mxu0
        %v3895 = vadd.f32 0.0, %v3894
        %3896 = vmatprep.mubr.bf16.mxu0 0
        %3897 = vmatmul.mubr.bf16.gmra.mxu0 %v3832
        %v3898 = vpop.f32.mrf.mxu0
        %v3899 = vadd.f32 0.0, %v3898
        %v3900 = vpop.f32.mrf.mxu0
        %v3901 = vadd.f32 0.0, %v3900
        %v3902 = vpop.f32.mrf.mxu0
        %v3903 = vadd.f32 0.0, %v3902
        %v3904 = vpop.f32.mrf.mxu0
        %v3905 = vadd.f32 0.0, %v3904
        %3906 = vdwg.mxu0
        %v3907 = vld [vmem:[#allocation2] sm:$0x1]
        %v3909 = vlaneseq
        %v3910 = vshrl.u32 %v3909, 7
        %v3911 = vsub.s32 0, %v3910
        %v3912 = vrot.slane %v3907, %v3911
        %3913 = vset.pattern.permute.xlu0 0
        %3914 = vperm.xlu0 %3913, %v3912
        %v3915 = vpop.permute.xlu0 %3914
        %v3917 = vmul.f32 %v3915, %v3274
        %v3918 = vmul.f32 %v3915, %v3276
        %v3919 = vmul.f32 %v3915, %v3278
        %v3920 = vmul.f32 %v3915, %v3280
        %v3921 = vmul.f32 %v3915, %v3284
        %v3922 = vmul.f32 %v3915, %v3286
        %v3923 = vmul.f32 %v3915, %v3288
        %v3924 = vmul.f32 %v3915, %v3290
        %v3925 = vmul.f32 %v3915, %v3294
        %v3926 = vmul.f32 %v3915, %v3296
        %v3927 = vmul.f32 %v3915, %v3298
        %v3928 = vmul.f32 %v3915, %v3300
        %v3929 = vmul.f32 %v3915, %v3304
        %v3930 = vmul.f32 %v3915, %v3306
        %v3931 = vmul.f32 %v3915, %v3308
        %v3932 = vmul.f32 %v3915, %v3310
        %v3933 = vmul.f32 %v3915, %v3359
        %v3934 = vmul.f32 %v3915, %v3361
        %v3935 = vmul.f32 %v3915, %v3363
        %v3936 = vmul.f32 %v3915, %v3365
        %v3937 = vmul.f32 %v3915, %v3369
        %v3938 = vmul.f32 %v3915, %v3371
        %v3939 = vmul.f32 %v3915, %v3373
        %v3940 = vmul.f32 %v3915, %v3375
        %v3941 = vmul.f32 %v3915, %v3379
        %v3942 = vmul.f32 %v3915, %v3381
        %v3943 = vmul.f32 %v3915, %v3383
        %v3944 = vmul.f32 %v3915, %v3385
        %v3945 = vmul.f32 %v3915, %v3389
        %v3946 = vmul.f32 %v3915, %v3391
        %v3947 = vmul.f32 %v3915, %v3393
        %v3948 = vmul.f32 %v3915, %v3395
        %v3949 = vmul.f32 %v3915, %v3444
        %v3950 = vmul.f32 %v3915, %v3446
        %v3951 = vmul.f32 %v3915, %v3448
        %v3952 = vmul.f32 %v3915, %v3450
        %v3953 = vmul.f32 %v3915, %v3454
        %v3954 = vmul.f32 %v3915, %v3456
        %v3955 = vmul.f32 %v3915, %v3458
        %v3956 = vmul.f32 %v3915, %v3460
        %v3957 = vmul.f32 %v3915, %v3464
        %v3958 = vmul.f32 %v3915, %v3466
        %v3959 = vmul.f32 %v3915, %v3468
        %v3960 = vmul.f32 %v3915, %v3470
        %v3961 = vmul.f32 %v3915, %v3474
        %v3962 = vmul.f32 %v3915, %v3476
        %v3963 = vmul.f32 %v3915, %v3478
        %v3964 = vmul.f32 %v3915, %v3480
        %v3965 = vmul.f32 %v3915, %v3529
        %v3966 = vmul.f32 %v3915, %v3531
        %v3967 = vmul.f32 %v3915, %v3533
        %v3968 = vmul.f32 %v3915, %v3535
        %v3969 = vmul.f32 %v3915, %v3539
        %v3970 = vmul.f32 %v3915, %v3541
        %v3971 = vmul.f32 %v3915, %v3543
        %v3972 = vmul.f32 %v3915, %v3545
        %v3973 = vmul.f32 %v3915, %v3549
        %v3974 = vmul.f32 %v3915, %v3551
        %v3975 = vmul.f32 %v3915, %v3553
        %v3976 = vmul.f32 %v3915, %v3555
        %v3977 = vmul.f32 %v3915, %v3559
        %v3978 = vmul.f32 %v3915, %v3561
        %v3979 = vmul.f32 %v3915, %v3563
        %v3980 = vmul.f32 %v3915, %v3565
        %v3981 = vmul.f32 %v3915, %v3614
        %v3982 = vmul.f32 %v3915, %v3616
        %v3983 = vmul.f32 %v3915, %v3618
        %v3984 = vmul.f32 %v3915, %v3620
        %v3985 = vmul.f32 %v3915, %v3624
        %v3986 = vmul.f32 %v3915, %v3626
        %v3987 = vmul.f32 %v3915, %v3628
        %v3988 = vmul.f32 %v3915, %v3630
        %v3989 = vmul.f32 %v3915, %v3634
        %v3990 = vmul.f32 %v3915, %v3636
        %v3991 = vmul.f32 %v3915, %v3638
        %v3992 = vmul.f32 %v3915, %v3640
        %v3993 = vmul.f32 %v3915, %v3644
        %v3994 = vmul.f32 %v3915, %v3646
        %v3995 = vmul.f32 %v3915, %v3648
        %v3996 = vmul.f32 %v3915, %v3650
        %v3997 = vmul.f32 %v3915, %v3699
        %v3998 = vmul.f32 %v3915, %v3701
        %v3999 = vmul.f32 %v3915, %v3703
        %v4000 = vmul.f32 %v3915, %v3705
        %v4001 = vmul.f32 %v3915, %v3709
        %v4002 = vmul.f32 %v3915, %v3711
        %v4003 = vmul.f32 %v3915, %v3713
        %v4004 = vmul.f32 %v3915, %v3715
        %v4005 = vmul.f32 %v3915, %v3719
        %v4006 = vmul.f32 %v3915, %v3721
        %v4007 = vmul.f32 %v3915, %v3723
        %v4008 = vmul.f32 %v3915, %v3725
        %v4009 = vmul.f32 %v3915, %v3729
        %v4010 = vmul.f32 %v3915, %v3731
        %v4011 = vmul.f32 %v3915, %v3733
        %v4012 = vmul.f32 %v3915, %v3735
        %v4013 = vmul.f32 %v3915, %v3784
        %v4014 = vmul.f32 %v3915, %v3786
        %v4015 = vmul.f32 %v3915, %v3788
        %v4016 = vmul.f32 %v3915, %v3790
        %v4017 = vmul.f32 %v3915, %v3794
        %v4018 = vmul.f32 %v3915, %v3796
        %v4019 = vmul.f32 %v3915, %v3798
        %v4020 = vmul.f32 %v3915, %v3800
        %v4021 = vmul.f32 %v3915, %v3804
        %v4022 = vmul.f32 %v3915, %v3806
        %v4023 = vmul.f32 %v3915, %v3808
        %v4024 = vmul.f32 %v3915, %v3810
        %v4025 = vmul.f32 %v3915, %v3814
        %v4026 = vmul.f32 %v3915, %v3816
        %v4027 = vmul.f32 %v3915, %v3818
        %v4028 = vmul.f32 %v3915, %v3820
        %v4029 = vmul.f32 %v3915, %v3869
        %v4030 = vmul.f32 %v3915, %v3871
        %v4031 = vmul.f32 %v3915, %v3873
        %v4032 = vmul.f32 %v3915, %v3875
        %v4033 = vmul.f32 %v3915, %v3879
        %v4034 = vmul.f32 %v3915, %v3881
        %v4035 = vmul.f32 %v3915, %v3883
        %v4036 = vmul.f32 %v3915, %v3885
        %v4037 = vmul.f32 %v3915, %v3889
        %v4038 = vmul.f32 %v3915, %v3891
        %v4039 = vmul.f32 %v3915, %v3893
        %v4040 = vmul.f32 %v3915, %v3895
        %v4041 = vmul.f32 %v3915, %v3899
        %v4042 = vmul.f32 %v3915, %v3901
        %v4043 = vmul.f32 %v3915, %v3903
        %v4044 = vmul.f32 %v3915, %v3905
        %v4045 = vunpack.c.l.bf16 %v346
        %v4046 = vunpack.c.h.bf16 %v346
        %v4047 = vunpack.c.l.bf16 %v347
        %v4048 = vunpack.c.h.bf16 %v347
        %v4049 = vunpack.c.l.bf16 %v348
        %v4050 = vunpack.c.h.bf16 %v348
        %v4051 = vunpack.c.l.bf16 %v349
        %v4052 = vunpack.c.h.bf16 %v349
        %v4053 = vunpack.c.l.bf16 %v350
        %v4054 = vunpack.c.h.bf16 %v350
        %v4055 = vunpack.c.l.bf16 %v351
        %v4056 = vunpack.c.h.bf16 %v351
        %v4057 = vunpack.c.l.bf16 %v352
        %v4058 = vunpack.c.h.bf16 %v352
        %v4059 = vunpack.c.l.bf16 %v353
        %v4060 = vunpack.c.h.bf16 %v353
        %v4061 = vunpack.c.l.bf16 %v354
        %v4062 = vunpack.c.h.bf16 %v354
        %v4063 = vunpack.c.l.bf16 %v355
        %v4064 = vunpack.c.h.bf16 %v355
        %v4065 = vunpack.c.l.bf16 %v356
        %v4066 = vunpack.c.h.bf16 %v356
        %v4067 = vunpack.c.l.bf16 %v357
        %v4068 = vunpack.c.h.bf16 %v357
        %v4069 = vunpack.c.l.bf16 %v358
        %v4070 = vunpack.c.h.bf16 %v358
        %v4071 = vunpack.c.l.bf16 %v359
        %v4072 = vunpack.c.h.bf16 %v359
        %v4073 = vunpack.c.l.bf16 %v360
        %v4074 = vunpack.c.h.bf16 %v360
        %v4075 = vunpack.c.l.bf16 %v361
        %v4076 = vunpack.c.h.bf16 %v361
        %v4077 = vunpack.c.l.bf16 %v362
        %v4078 = vunpack.c.h.bf16 %v362
        %v4079 = vunpack.c.l.bf16 %v363
        %v4080 = vunpack.c.h.bf16 %v363
        %v4081 = vunpack.c.l.bf16 %v364
        %v4082 = vunpack.c.h.bf16 %v364
        %v4083 = vunpack.c.l.bf16 %v365
        %v4084 = vunpack.c.h.bf16 %v365
        %v4085 = vunpack.c.l.bf16 %v366
        %v4086 = vunpack.c.h.bf16 %v366
        %v4087 = vunpack.c.l.bf16 %v367
        %v4088 = vunpack.c.h.bf16 %v367
        %v4089 = vunpack.c.l.bf16 %v368
        %v4090 = vunpack.c.h.bf16 %v368
        %v4091 = vunpack.c.l.bf16 %v369
        %v4092 = vunpack.c.h.bf16 %v369
        %v4093 = vunpack.c.l.bf16 %v370
        %v4094 = vunpack.c.h.bf16 %v370
        %v4095 = vunpack.c.l.bf16 %v371
        %v4096 = vunpack.c.h.bf16 %v371
        %v4097 = vunpack.c.l.bf16 %v372
        %v4098 = vunpack.c.h.bf16 %v372
        %v4099 = vunpack.c.l.bf16 %v373
        %v4100 = vunpack.c.h.bf16 %v373
        %v4101 = vunpack.c.l.bf16 %v374
        %v4102 = vunpack.c.h.bf16 %v374
        %v4103 = vunpack.c.l.bf16 %v375
        %v4104 = vunpack.c.h.bf16 %v375
        %v4105 = vunpack.c.l.bf16 %v376
        %v4106 = vunpack.c.h.bf16 %v376
        %v4107 = vunpack.c.l.bf16 %v377
        %v4108 = vunpack.c.h.bf16 %v377
        %v4109 = vunpack.c.l.bf16 %v378
        %v4110 = vunpack.c.h.bf16 %v378
        %v4111 = vunpack.c.l.bf16 %v379
        %v4112 = vunpack.c.h.bf16 %v379
        %v4113 = vunpack.c.l.bf16 %v380
        %v4114 = vunpack.c.h.bf16 %v380
        %v4115 = vunpack.c.l.bf16 %v381
        %v4116 = vunpack.c.h.bf16 %v381
        %v4117 = vunpack.c.l.bf16 %v382
        %v4118 = vunpack.c.h.bf16 %v382
        %v4119 = vunpack.c.l.bf16 %v383
        %v4120 = vunpack.c.h.bf16 %v383
        %v4121 = vunpack.c.l.bf16 %v384
        %v4122 = vunpack.c.h.bf16 %v384
        %v4123 = vunpack.c.l.bf16 %v385
        %v4124 = vunpack.c.h.bf16 %v385
        %v4125 = vunpack.c.l.bf16 %v386
        %v4126 = vunpack.c.h.bf16 %v386
        %v4127 = vunpack.c.l.bf16 %v387
        %v4128 = vunpack.c.h.bf16 %v387
        %v4129 = vunpack.c.l.bf16 %v388
        %v4130 = vunpack.c.h.bf16 %v388
        %v4131 = vunpack.c.l.bf16 %v389
        %v4132 = vunpack.c.h.bf16 %v389
        %v4133 = vunpack.c.l.bf16 %v390
        %v4134 = vunpack.c.h.bf16 %v390
        %v4135 = vunpack.c.l.bf16 %v391
        %v4136 = vunpack.c.h.bf16 %v391
        %v4137 = vunpack.c.l.bf16 %v392
        %v4138 = vunpack.c.h.bf16 %v392
        %v4139 = vunpack.c.l.bf16 %v393
        %v4140 = vunpack.c.h.bf16 %v393
        %v4141 = vunpack.c.l.bf16 %v394
        %v4142 = vunpack.c.h.bf16 %v394
        %v4143 = vunpack.c.l.bf16 %v395
        %v4144 = vunpack.c.h.bf16 %v395
        %v4145 = vunpack.c.l.bf16 %v396
        %v4146 = vunpack.c.h.bf16 %v396
        %v4147 = vunpack.c.l.bf16 %v397
        %v4148 = vunpack.c.h.bf16 %v397
        %v4149 = vunpack.c.l.bf16 %v398
        %v4150 = vunpack.c.h.bf16 %v398
        %v4151 = vunpack.c.l.bf16 %v399
        %v4152 = vunpack.c.h.bf16 %v399
        %v4153 = vunpack.c.l.bf16 %v400
        %v4154 = vunpack.c.h.bf16 %v400
        %v4155 = vunpack.c.l.bf16 %v401
        %v4156 = vunpack.c.h.bf16 %v401
        %v4157 = vunpack.c.l.bf16 %v402
        %v4158 = vunpack.c.h.bf16 %v402
        %v4159 = vunpack.c.l.bf16 %v403
        %v4160 = vunpack.c.h.bf16 %v403
        %v4161 = vunpack.c.l.bf16 %v404
        %v4162 = vunpack.c.h.bf16 %v404
        %v4163 = vunpack.c.l.bf16 %v405
        %v4164 = vunpack.c.h.bf16 %v405
        %v4165 = vunpack.c.l.bf16 %v406
        %v4166 = vunpack.c.h.bf16 %v406
        %v4167 = vunpack.c.l.bf16 %v407
        %v4168 = vunpack.c.h.bf16 %v407
        %v4169 = vunpack.c.l.bf16 %v408
        %v4170 = vunpack.c.h.bf16 %v408
        %v4171 = vunpack.c.l.bf16 %v409
        %v4172 = vunpack.c.h.bf16 %v409
        %v4173 = vadd.f32 %v3917, %v4045
        %v4174 = vadd.f32 %v3918, %v4046
        %v4175 = vadd.f32 %v3919, %v4047
        %v4176 = vadd.f32 %v3920, %v4048
        %v4177 = vadd.f32 %v3921, %v4049
        %v4178 = vadd.f32 %v3922, %v4050
        %v4179 = vadd.f32 %v3923, %v4051
        %v4180 = vadd.f32 %v3924, %v4052
        %v4181 = vadd.f32 %v3925, %v4053
        %v4182 = vadd.f32 %v3926, %v4054
        %v4183 = vadd.f32 %v3927, %v4055
        %v4184 = vadd.f32 %v3928, %v4056
        %v4185 = vadd.f32 %v3929, %v4057
        %v4186 = vadd.f32 %v3930, %v4058
        %v4187 = vadd.f32 %v3931, %v4059
        %v4188 = vadd.f32 %v3932, %v4060
        %v4189 = vadd.f32 %v3933, %v4061
        %v4190 = vadd.f32 %v3934, %v4062
        %v4191 = vadd.f32 %v3935, %v4063
        %v4192 = vadd.f32 %v3936, %v4064
        %v4193 = vadd.f32 %v3937, %v4065
        %v4194 = vadd.f32 %v3938, %v4066
        %v4195 = vadd.f32 %v3939, %v4067
        %v4196 = vadd.f32 %v3940, %v4068
        %v4197 = vadd.f32 %v3941, %v4069
        %v4198 = vadd.f32 %v3942, %v4070
        %v4199 = vadd.f32 %v3943, %v4071
        %v4200 = vadd.f32 %v3944, %v4072
        %v4201 = vadd.f32 %v3945, %v4073
        %v4202 = vadd.f32 %v3946, %v4074
        %v4203 = vadd.f32 %v3947, %v4075
        %v4204 = vadd.f32 %v3948, %v4076
        %v4205 = vadd.f32 %v3949, %v4077
        %v4206 = vadd.f32 %v3950, %v4078
        %v4207 = vadd.f32 %v3951, %v4079
        %v4208 = vadd.f32 %v3952, %v4080
        %v4209 = vadd.f32 %v3953, %v4081
        %v4210 = vadd.f32 %v3954, %v4082
        %v4211 = vadd.f32 %v3955, %v4083
        %v4212 = vadd.f32 %v3956, %v4084
        %v4213 = vadd.f32 %v3957, %v4085
        %v4214 = vadd.f32 %v3958, %v4086
        %v4215 = vadd.f32 %v3959, %v4087
        %v4216 = vadd.f32 %v3960, %v4088
        %v4217 = vadd.f32 %v3961, %v4089
        %v4218 = vadd.f32 %v3962, %v4090
        %v4219 = vadd.f32 %v3963, %v4091
        %v4220 = vadd.f32 %v3964, %v4092
        %v4221 = vadd.f32 %v3965, %v4093
        %v4222 = vadd.f32 %v3966, %v4094
        %v4223 = vadd.f32 %v3967, %v4095
        %v4224 = vadd.f32 %v3968, %v4096
        %v4225 = vadd.f32 %v3969, %v4097
        %v4226 = vadd.f32 %v3970, %v4098
        %v4227 = vadd.f32 %v3971, %v4099
        %v4228 = vadd.f32 %v3972, %v4100
        %v4229 = vadd.f32 %v3973, %v4101
        %v4230 = vadd.f32 %v3974, %v4102
        %v4231 = vadd.f32 %v3975, %v4103
        %v4232 = vadd.f32 %v3976, %v4104
        %v4233 = vadd.f32 %v3977, %v4105
        %v4234 = vadd.f32 %v3978, %v4106
        %v4235 = vadd.f32 %v3979, %v4107
        %v4236 = vadd.f32 %v3980, %v4108
        %v4237 = vadd.f32 %v3981, %v4109
        %v4238 = vadd.f32 %v3982, %v4110
        %v4239 = vadd.f32 %v3983, %v4111
        %v4240 = vadd.f32 %v3984, %v4112
        %v4241 = vadd.f32 %v3985, %v4113
        %v4242 = vadd.f32 %v3986, %v4114
        %v4243 = vadd.f32 %v3987, %v4115
        %v4244 = vadd.f32 %v3988, %v4116
        %v4245 = vadd.f32 %v3989, %v4117
        %v4246 = vadd.f32 %v3990, %v4118
        %v4247 = vadd.f32 %v3991, %v4119
        %v4248 = vadd.f32 %v3992, %v4120
        %v4249 = vadd.f32 %v3993, %v4121
        %v4250 = vadd.f32 %v3994, %v4122
        %v4251 = vadd.f32 %v3995, %v4123
        %v4252 = vadd.f32 %v3996, %v4124
        %v4253 = vadd.f32 %v3997, %v4125
        %v4254 = vadd.f32 %v3998, %v4126
        %v4255 = vadd.f32 %v3999, %v4127
        %v4256 = vadd.f32 %v4000, %v4128
        %v4257 = vadd.f32 %v4001, %v4129
        %v4258 = vadd.f32 %v4002, %v4130
        %v4259 = vadd.f32 %v4003, %v4131
        %v4260 = vadd.f32 %v4004, %v4132
        %v4261 = vadd.f32 %v4005, %v4133
        %v4262 = vadd.f32 %v4006, %v4134
        %v4263 = vadd.f32 %v4007, %v4135
        %v4264 = vadd.f32 %v4008, %v4136
        %v4265 = vadd.f32 %v4009, %v4137
        %v4266 = vadd.f32 %v4010, %v4138
        %v4267 = vadd.f32 %v4011, %v4139
        %v4268 = vadd.f32 %v4012, %v4140
        %v4269 = vadd.f32 %v4013, %v4141
        %v4270 = vadd.f32 %v4014, %v4142
        %v4271 = vadd.f32 %v4015, %v4143
        %v4272 = vadd.f32 %v4016, %v4144
        %v4273 = vadd.f32 %v4017, %v4145
        %v4274 = vadd.f32 %v4018, %v4146
        %v4275 = vadd.f32 %v4019, %v4147
        %v4276 = vadd.f32 %v4020, %v4148
        %v4277 = vadd.f32 %v4021, %v4149
        %v4278 = vadd.f32 %v4022, %v4150
        %v4279 = vadd.f32 %v4023, %v4151
        %v4280 = vadd.f32 %v4024, %v4152
        %v4281 = vadd.f32 %v4025, %v4153
        %v4282 = vadd.f32 %v4026, %v4154
        %v4283 = vadd.f32 %v4027, %v4155
        %v4284 = vadd.f32 %v4028, %v4156
        %v4285 = vadd.f32 %v4029, %v4157
        %v4286 = vadd.f32 %v4030, %v4158
        %v4287 = vadd.f32 %v4031, %v4159
        %v4288 = vadd.f32 %v4032, %v4160
        %v4289 = vadd.f32 %v4033, %v4161
        %v4290 = vadd.f32 %v4034, %v4162
        %v4291 = vadd.f32 %v4035, %v4163
        %v4292 = vadd.f32 %v4036, %v4164
        %v4293 = vadd.f32 %v4037, %v4165
        %v4294 = vadd.f32 %v4038, %v4166
        %v4295 = vadd.f32 %v4039, %v4167
        %v4296 = vadd.f32 %v4040, %v4168
        %v4297 = vadd.f32 %v4041, %v4169
        %v4298 = vadd.f32 %v4042, %v4170
        %v4299 = vadd.f32 %v4043, %v4171
        %v4300 = vadd.f32 %v4044, %v4172
        %v4301 = vmax.f32 %v4173, 0.0
        %v4302 = vmax.f32 %v4174, 0.0
        %v4303 = vmax.f32 %v4175, 0.0
        %v4304 = vmax.f32 %v4176, 0.0
        %v4305 = vmax.f32 %v4177, 0.0
        %v4306 = vmax.f32 %v4178, 0.0
        %v4307 = vmax.f32 %v4179, 0.0
        %v4308 = vmax.f32 %v4180, 0.0
        %v4309 = vmax.f32 %v4181, 0.0
        %v4310 = vmax.f32 %v4182, 0.0
        %v4311 = vmax.f32 %v4183, 0.0
        %v4312 = vmax.f32 %v4184, 0.0
        %v4313 = vmax.f32 %v4185, 0.0
        %v4314 = vmax.f32 %v4186, 0.0
        %v4315 = vmax.f32 %v4187, 0.0
        %v4316 = vmax.f32 %v4188, 0.0
        %v4317 = vmax.f32 %v4189, 0.0
        %v4318 = vmax.f32 %v4190, 0.0
        %v4319 = vmax.f32 %v4191, 0.0
        %v4320 = vmax.f32 %v4192, 0.0
        %v4321 = vmax.f32 %v4193, 0.0
        %v4322 = vmax.f32 %v4194, 0.0
        %v4323 = vmax.f32 %v4195, 0.0
        %v4324 = vmax.f32 %v4196, 0.0
        %v4325 = vmax.f32 %v4197, 0.0
        %v4326 = vmax.f32 %v4198, 0.0
        %v4327 = vmax.f32 %v4199, 0.0
        %v4328 = vmax.f32 %v4200, 0.0
        %v4329 = vmax.f32 %v4201, 0.0
        %v4330 = vmax.f32 %v4202, 0.0
        %v4331 = vmax.f32 %v4203, 0.0
        %v4332 = vmax.f32 %v4204, 0.0
        %v4333 = vmax.f32 %v4205, 0.0
        %v4334 = vmax.f32 %v4206, 0.0
        %v4335 = vmax.f32 %v4207, 0.0
        %v4336 = vmax.f32 %v4208, 0.0
        %v4337 = vmax.f32 %v4209, 0.0
        %v4338 = vmax.f32 %v4210, 0.0
        %v4339 = vmax.f32 %v4211, 0.0
        %v4340 = vmax.f32 %v4212, 0.0
        %v4341 = vmax.f32 %v4213, 0.0
        %v4342 = vmax.f32 %v4214, 0.0
        %v4343 = vmax.f32 %v4215, 0.0
        %v4344 = vmax.f32 %v4216, 0.0
        %v4345 = vmax.f32 %v4217, 0.0
        %v4346 = vmax.f32 %v4218, 0.0
        %v4347 = vmax.f32 %v4219, 0.0
        %v4348 = vmax.f32 %v4220, 0.0
        %v4349 = vmax.f32 %v4221, 0.0
        %v4350 = vmax.f32 %v4222, 0.0
        %v4351 = vmax.f32 %v4223, 0.0
        %v4352 = vmax.f32 %v4224, 0.0
        %v4353 = vmax.f32 %v4225, 0.0
        %v4354 = vmax.f32 %v4226, 0.0
        %v4355 = vmax.f32 %v4227, 0.0
        %v4356 = vmax.f32 %v4228, 0.0
        %v4357 = vmax.f32 %v4229, 0.0
        %v4358 = vmax.f32 %v4230, 0.0
        %v4359 = vmax.f32 %v4231, 0.0
        %v4360 = vmax.f32 %v4232, 0.0
        %v4361 = vmax.f32 %v4233, 0.0
        %v4362 = vmax.f32 %v4234, 0.0
        %v4363 = vmax.f32 %v4235, 0.0
        %v4364 = vmax.f32 %v4236, 0.0
        %v4365 = vmax.f32 %v4237, 0.0
        %v4366 = vmax.f32 %v4238, 0.0
        %v4367 = vmax.f32 %v4239, 0.0
        %v4368 = vmax.f32 %v4240, 0.0
        %v4369 = vmax.f32 %v4241, 0.0
        %v4370 = vmax.f32 %v4242, 0.0
        %v4371 = vmax.f32 %v4243, 0.0
        %v4372 = vmax.f32 %v4244, 0.0
        %v4373 = vmax.f32 %v4245, 0.0
        %v4374 = vmax.f32 %v4246, 0.0
        %v4375 = vmax.f32 %v4247, 0.0
        %v4376 = vmax.f32 %v4248, 0.0
        %v4377 = vmax.f32 %v4249, 0.0
        %v4378 = vmax.f32 %v4250, 0.0
        %v4379 = vmax.f32 %v4251, 0.0
        %v4380 = vmax.f32 %v4252, 0.0
        %v4381 = vmax.f32 %v4253, 0.0
        %v4382 = vmax.f32 %v4254, 0.0
        %v4383 = vmax.f32 %v4255, 0.0
        %v4384 = vmax.f32 %v4256, 0.0
        %v4385 = vmax.f32 %v4257, 0.0
        %v4386 = vmax.f32 %v4258, 0.0
        %v4387 = vmax.f32 %v4259, 0.0
        %v4388 = vmax.f32 %v4260, 0.0
        %v4389 = vmax.f32 %v4261, 0.0
        %v4390 = vmax.f32 %v4262, 0.0
        %v4391 = vmax.f32 %v4263, 0.0
        %v4392 = vmax.f32 %v4264, 0.0
        %v4393 = vmax.f32 %v4265, 0.0
        %v4394 = vmax.f32 %v4266, 0.0
        %v4395 = vmax.f32 %v4267, 0.0
        %v4396 = vmax.f32 %v4268, 0.0
        %v4397 = vmax.f32 %v4269, 0.0
        %v4398 = vmax.f32 %v4270, 0.0
        %v4399 = vmax.f32 %v4271, 0.0
        %v4400 = vmax.f32 %v4272, 0.0
        %v4401 = vmax.f32 %v4273, 0.0
        %v4402 = vmax.f32 %v4274, 0.0
        %v4403 = vmax.f32 %v4275, 0.0
        %v4404 = vmax.f32 %v4276, 0.0
        %v4405 = vmax.f32 %v4277, 0.0
        %v4406 = vmax.f32 %v4278, 0.0
        %v4407 = vmax.f32 %v4279, 0.0
        %v4408 = vmax.f32 %v4280, 0.0
        %v4409 = vmax.f32 %v4281, 0.0
        %v4410 = vmax.f32 %v4282, 0.0
        %v4411 = vmax.f32 %v4283, 0.0
        %v4412 = vmax.f32 %v4284, 0.0
        %v4413 = vmax.f32 %v4285, 0.0
        %v4414 = vmax.f32 %v4286, 0.0
        %v4415 = vmax.f32 %v4287, 0.0
        %v4416 = vmax.f32 %v4288, 0.0
        %v4417 = vmax.f32 %v4289, 0.0
        %v4418 = vmax.f32 %v4290, 0.0
        %v4419 = vmax.f32 %v4291, 0.0
        %v4420 = vmax.f32 %v4292, 0.0
        %v4421 = vmax.f32 %v4293, 0.0
        %v4422 = vmax.f32 %v4294, 0.0
        %v4423 = vmax.f32 %v4295, 0.0
        %v4424 = vmax.f32 %v4296, 0.0
        %v4425 = vmax.f32 %v4297, 0.0
        %v4426 = vmax.f32 %v4298, 0.0
        %v4427 = vmax.f32 %v4299, 0.0
        %v4428 = vmax.f32 %v4300, 0.0
        %v4429 = vpack.c.bf16 %v4303, %v4301
        %v4430 = vpack.c.bf16 %v4304, %v4302
        %v4431 = vpack.c.bf16 %v4307, %v4305
        %v4432 = vpack.c.bf16 %v4308, %v4306
        %v4433 = vpack.c.bf16 %v4311, %v4309
        %v4434 = vpack.c.bf16 %v4312, %v4310
        %v4435 = vpack.c.bf16 %v4315, %v4313
        %v4436 = vpack.c.bf16 %v4316, %v4314
        %v4437 = vpack.c.bf16 %v4319, %v4317
        %v4438 = vpack.c.bf16 %v4320, %v4318
        %v4439 = vpack.c.bf16 %v4323, %v4321
        %v4440 = vpack.c.bf16 %v4324, %v4322
        %v4441 = vpack.c.bf16 %v4327, %v4325
        %v4442 = vpack.c.bf16 %v4328, %v4326
        %v4443 = vpack.c.bf16 %v4331, %v4329
        %v4444 = vpack.c.bf16 %v4332, %v4330
        %v4445 = vpack.c.bf16 %v4335, %v4333
        %v4446 = vpack.c.bf16 %v4336, %v4334
        %v4447 = vpack.c.bf16 %v4339, %v4337
        %v4448 = vpack.c.bf16 %v4340, %v4338
        %v4449 = vpack.c.bf16 %v4343, %v4341
        %v4450 = vpack.c.bf16 %v4344, %v4342
        %v4451 = vpack.c.bf16 %v4347, %v4345
        %v4452 = vpack.c.bf16 %v4348, %v4346
        %v4453 = vpack.c.bf16 %v4351, %v4349
        %v4454 = vpack.c.bf16 %v4352, %v4350
        %v4455 = vpack.c.bf16 %v4355, %v4353
        %v4456 = vpack.c.bf16 %v4356, %v4354
        %v4457 = vpack.c.bf16 %v4359, %v4357
        %v4458 = vpack.c.bf16 %v4360, %v4358
        %v4459 = vpack.c.bf16 %v4363, %v4361
        %v4460 = vpack.c.bf16 %v4364, %v4362
        %v4461 = vpack.c.bf16 %v4367, %v4365
        %v4462 = vpack.c.bf16 %v4368, %v4366
        %v4463 = vpack.c.bf16 %v4371, %v4369
        %v4464 = vpack.c.bf16 %v4372, %v4370
        %v4465 = vpack.c.bf16 %v4375, %v4373
        %v4466 = vpack.c.bf16 %v4376, %v4374
        %v4467 = vpack.c.bf16 %v4379, %v4377
        %v4468 = vpack.c.bf16 %v4380, %v4378
        %v4469 = vpack.c.bf16 %v4383, %v4381
        %v4470 = vpack.c.bf16 %v4384, %v4382
        %v4471 = vpack.c.bf16 %v4387, %v4385
        %v4472 = vpack.c.bf16 %v4388, %v4386
        %v4473 = vpack.c.bf16 %v4391, %v4389
        %v4474 = vpack.c.bf16 %v4392, %v4390
        %v4475 = vpack.c.bf16 %v4395, %v4393
        %v4476 = vpack.c.bf16 %v4396, %v4394
        %v4477 = vpack.c.bf16 %v4399, %v4397
        %v4478 = vpack.c.bf16 %v4400, %v4398
        %v4479 = vpack.c.bf16 %v4403, %v4401
        %v4480 = vpack.c.bf16 %v4404, %v4402
        %v4481 = vpack.c.bf16 %v4407, %v4405
        %v4482 = vpack.c.bf16 %v4408, %v4406
        %v4483 = vpack.c.bf16 %v4411, %v4409
        %v4484 = vpack.c.bf16 %v4412, %v4410
        %v4485 = vpack.c.bf16 %v4415, %v4413
        %v4486 = vpack.c.bf16 %v4416, %v4414
        %v4487 = vpack.c.bf16 %v4419, %v4417
        %v4488 = vpack.c.bf16 %v4420, %v4418
        %v4489 = vpack.c.bf16 %v4423, %v4421
        %v4490 = vpack.c.bf16 %v4424, %v4422
        %v4491 = vpack.c.bf16 %v4427, %v4425
        %v4492 = vpack.c.bf16 %v4428, %v4426
        %v4493 = vld [vmem:[#allocation8] sm:$0xf]
        %v4494 = vld [vmem:[#allocation8 + $0x4] sm:$0xf]
        %v4495 = vld [vmem:[#allocation8 + $0x8] sm:$0xf]
        %v4496 = vld [vmem:[#allocation8 + $0xc] sm:$0xf]
        %v4497 = vld [vmem:[#allocation8 + $0x10] sm:$0xf]
        %v4498 = vld [vmem:[#allocation8 + $0x14] sm:$0xf]
        %v4499 = vld [vmem:[#allocation8 + $0x18] sm:$0xf]
        %v4500 = vld [vmem:[#allocation8 + $0x1c] sm:$0xf]
        %v4501 = vld [vmem:[#allocation8 + $0x20] sm:$0xf]
        %v4502 = vld [vmem:[#allocation8 + $0x24] sm:$0xf]
        %v4503 = vld [vmem:[#allocation8 + $0x28] sm:$0xf]
        %v4504 = vld [vmem:[#allocation8 + $0x2c] sm:$0xf]
        %v4505 = vld [vmem:[#allocation8 + $0x30] sm:$0xf]
        %v4506 = vld [vmem:[#allocation8 + $0x34] sm:$0xf]
        %v4507 = vld [vmem:[#allocation8 + $0x38] sm:$0xf]
        %v4508 = vld [vmem:[#allocation8 + $0x3c] sm:$0xf]
        %v4509 = vld [vmem:[#allocation8 + $0x40] sm:$0xf]
        %v4510 = vld [vmem:[#allocation8 + $0x44] sm:$0xf]
        %v4511 = vld [vmem:[#allocation8 + $0x48] sm:$0xf]
        %v4512 = vld [vmem:[#allocation8 + $0x4c] sm:$0xf]
        %v4513 = vld [vmem:[#allocation8 + $0x50] sm:$0xf]
        %v4514 = vld [vmem:[#allocation8 + $0x54] sm:$0xf]
        %v4515 = vld [vmem:[#allocation8 + $0x58] sm:$0xf]
        %v4516 = vld [vmem:[#allocation8 + $0x5c] sm:$0xf]
        %v4517 = vld [vmem:[#allocation8 + $0x60] sm:$0xf]
        %v4518 = vld [vmem:[#allocation8 + $0x64] sm:$0xf]
        %v4519 = vld [vmem:[#allocation8 + $0x68] sm:$0xf]
        %v4520 = vld [vmem:[#allocation8 + $0x6c] sm:$0xf]
        %v4521 = vld [vmem:[#allocation8 + $0x70] sm:$0xf]
        %v4522 = vld [vmem:[#allocation8 + $0x74] sm:$0xf]
        %v4523 = vld [vmem:[#allocation8 + $0x78] sm:$0xf]
        %v4524 = vld [vmem:[#allocation8 + $0x7c] sm:$0xf]
        %v4525 = vld [vmem:[#allocation9] sm:$0xf]
        %v4526 = vld [vmem:[#allocation9 + $0x4] sm:$0xf]
        %v4527 = vld [vmem:[#allocation9 + $0x8] sm:$0xf]
        %v4528 = vld [vmem:[#allocation9 + $0xc] sm:$0xf]
        %v4529 = vld [vmem:[#allocation9 + $0x10] sm:$0xf]
        %v4530 = vld [vmem:[#allocation9 + $0x14] sm:$0xf]
        %v4531 = vld [vmem:[#allocation9 + $0x18] sm:$0xf]
        %v4532 = vld [vmem:[#allocation9 + $0x1c] sm:$0xf]
        %v4533 = vld [vmem:[#allocation9 + $0x20] sm:$0xf]
        %v4534 = vld [vmem:[#allocation9 + $0x24] sm:$0xf]
        %v4535 = vld [vmem:[#allocation9 + $0x28] sm:$0xf]
        %v4536 = vld [vmem:[#allocation9 + $0x2c] sm:$0xf]
        %v4537 = vld [vmem:[#allocation9 + $0x30] sm:$0xf]
        %v4538 = vld [vmem:[#allocation9 + $0x34] sm:$0xf]
        %v4539 = vld [vmem:[#allocation9 + $0x38] sm:$0xf]
        %v4540 = vld [vmem:[#allocation9 + $0x3c] sm:$0xf]
        %v4541 = vld [vmem:[#allocation9 + $0x40] sm:$0xf]
        %v4542 = vld [vmem:[#allocation9 + $0x44] sm:$0xf]
        %v4543 = vld [vmem:[#allocation9 + $0x48] sm:$0xf]
        %v4544 = vld [vmem:[#allocation9 + $0x4c] sm:$0xf]
        %v4545 = vld [vmem:[#allocation9 + $0x50] sm:$0xf]
        %v4546 = vld [vmem:[#allocation9 + $0x54] sm:$0xf]
        %v4547 = vld [vmem:[#allocation9 + $0x58] sm:$0xf]
        %v4548 = vld [vmem:[#allocation9 + $0x5c] sm:$0xf]
        %v4549 = vld [vmem:[#allocation9 + $0x60] sm:$0xf]
        %v4550 = vld [vmem:[#allocation9 + $0x64] sm:$0xf]
        %v4551 = vld [vmem:[#allocation9 + $0x68] sm:$0xf]
        %v4552 = vld [vmem:[#allocation9 + $0x6c] sm:$0xf]
        %v4553 = vld [vmem:[#allocation9 + $0x70] sm:$0xf]
        %v4554 = vld [vmem:[#allocation9 + $0x74] sm:$0xf]
        %v4555 = vld [vmem:[#allocation9 + $0x78] sm:$0xf]
        %v4556 = vld [vmem:[#allocation9 + $0x7c] sm:$0xf]
        %v4589 = vunpack.c.l.b16 %v4525
        %v4590 = vunpack.c.l.b16 %v4526
        %v4591 = vunpack.c.l.b16 %v4527
        %v4592 = vunpack.c.l.b16 %v4528
        %v4593 = vunpack.c.l.b16 %v4529
        %v4594 = vunpack.c.l.b16 %v4530
        %v4595 = vunpack.c.l.b16 %v4531
        %v4596 = vunpack.c.l.b16 %v4532
        %v4597 = vunpack.c.l.b16 %v4533
        %v4598 = vunpack.c.l.b16 %v4534
        %v4599 = vunpack.c.l.b16 %v4535
        %v4600 = vunpack.c.l.b16 %v4536
        %v4601 = vunpack.c.l.b16 %v4537
        %v4602 = vunpack.c.l.b16 %v4538
        %v4603 = vunpack.c.l.b16 %v4539
        %v4604 = vunpack.c.l.b16 %v4540
        %v4605 = vunpack.c.l.b16 %v4541
        %v4606 = vunpack.c.l.b16 %v4542
        %v4607 = vunpack.c.l.b16 %v4543
        %v4608 = vunpack.c.l.b16 %v4544
        %v4609 = vunpack.c.l.b16 %v4545
        %v4610 = vunpack.c.l.b16 %v4546
        %v4611 = vunpack.c.l.b16 %v4547
        %v4612 = vunpack.c.l.b16 %v4548
        %v4613 = vunpack.c.l.b16 %v4549
        %v4614 = vunpack.c.l.b16 %v4550
        %v4615 = vunpack.c.l.b16 %v4551
        %v4616 = vunpack.c.l.b16 %v4552
        %v4617 = vunpack.c.l.b16 %v4553
        %v4618 = vunpack.c.l.b16 %v4554
        %v4619 = vunpack.c.l.b16 %v4555
        %v4620 = vunpack.c.l.b16 %v4556
        %v4621 = vpack.c.b16 %v4590, %v4589
        %v4622 = vpack.c.b16 %v4592, %v4591
        %v4623 = vpack.c.b16 %v4594, %v4593
        %v4624 = vpack.c.b16 %v4596, %v4595
        %v4625 = vpack.c.b16 %v4598, %v4597
        %v4626 = vpack.c.b16 %v4600, %v4599
        %v4627 = vpack.c.b16 %v4602, %v4601
        %v4628 = vpack.c.b16 %v4604, %v4603
        %v4629 = vpack.c.b16 %v4606, %v4605
        %v4630 = vpack.c.b16 %v4608, %v4607
        %v4631 = vpack.c.b16 %v4610, %v4609
        %v4632 = vpack.c.b16 %v4612, %v4611
        %v4633 = vpack.c.b16 %v4614, %v4613
        %v4634 = vpack.c.b16 %v4616, %v4615
        %v4635 = vpack.c.b16 %v4618, %v4617
        %v4636 = vpack.c.b16 %v4620, %v4619
        %4653 = vmatprep.subr.bf16.mxu0 0
        %4654 = vmatpush1.bf16.msra.mxu0 %v4628
        %4655 = vmatprep.subr.bf16.mxu0 0
        %4656 = vmatpush1.bf16.msra.mxu0 %v4627
        %4657 = vmatprep.subr.bf16.mxu0 0
        %4658 = vmatpush1.bf16.msra.mxu0 %v4626
        %4659 = vmatprep.subr.bf16.mxu0 0
        %4660 = vmatpush1.bf16.msra.mxu0 %v4625
        %4661 = vmatprep.subr.bf16.mxu0 0
        %4662 = vmatpush1.bf16.msra.mxu0 %v4624
        %4663 = vmatprep.subr.bf16.mxu0 0
        %4664 = vmatpush1.bf16.msra.mxu0 %v4623
        %4665 = vmatprep.subr.bf16.mxu0 0
        %4666 = vmatpush1.bf16.msra.mxu0 %v4622
        %4667 = vmatprep.subr.bf16.mxu0 0
        %4668 = vmatpush1.bf16.msra.mxu0 %v4621
        %4669 = vmatprep.subr.bf16.mxu0 0
        %4670 = vmatpush2.bf16.msra.mxu0 %v4636
        %4671 = vmatprep.subr.bf16.mxu0 0
        %4672 = vmatpush2.bf16.msra.mxu0 %v4635
        %4673 = vmatprep.subr.bf16.mxu0 0
        %4674 = vmatpush2.bf16.msra.mxu0 %v4634
        %4675 = vmatprep.subr.bf16.mxu0 0
        %4676 = vmatpush2.bf16.msra.mxu0 %v4633
        %4677 = vmatprep.subr.bf16.mxu0 0
        %4678 = vmatpush2.bf16.msra.mxu0 %v4632
        %4679 = vmatprep.subr.bf16.mxu0 0
        %4680 = vmatpush2.bf16.msra.mxu0 %v4631
        %4681 = vmatprep.subr.bf16.mxu0 0
        %4682 = vmatpush2.bf16.msra.mxu0 %v4630
        %4683 = vmatprep.subr.bf16.mxu0 0
        %4684 = vmatpush2.bf16.msra.mxu0 %v4629
        %4685 = vmatprep.mubr.bf16.mxu0 %v689
        %4686 = vmatmul.mubr.bf16.gmra.mxu0 %v688
        %v4687 = vpop.f32.mrf.mxu0
        %v4688 = vadd.f32 0.0, %v4687
        %v4689 = vpop.f32.mrf.mxu0
        %v4690 = vpop.f32.mrf.mxu0
        %v4691 = vadd.f32 0.0, %v4690
        %v4692 = vpop.f32.mrf.mxu0
        %4693 = vmatprep.mubr.bf16.mxu0 %v691
        %4694 = vmatmul.mubr.bf16.gmra.mxu0 %v690
        %v4695 = vpop.f32.mrf.mxu0
        %v4696 = vadd.f32 0.0, %v4695
        %v4697 = vpop.f32.mrf.mxu0
        %v4698 = vpop.f32.mrf.mxu0
        %v4699 = vadd.f32 0.0, %v4698
        %v4700 = vpop.f32.mrf.mxu0
        %4701 = vmatprep.mubr.bf16.mxu0 %v693
        %4702 = vmatmul.mubr.bf16.gmra.mxu0 %v692
        %v4703 = vpop.f32.mrf.mxu0
        %v4704 = vadd.f32 0.0, %v4703
        %v4705 = vpop.f32.mrf.mxu0
        %v4706 = vpop.f32.mrf.mxu0
        %v4707 = vadd.f32 0.0, %v4706
        %v4708 = vpop.f32.mrf.mxu0
        %4709 = vmatprep.mubr.bf16.mxu0 %v695
        %4710 = vmatmul.mubr.bf16.gmra.mxu0 %v694
        %v4711 = vpop.f32.mrf.mxu0
        %v4712 = vadd.f32 0.0, %v4711
        %v4713 = vpop.f32.mrf.mxu0
        %v4714 = vpop.f32.mrf.mxu0
        %v4715 = vadd.f32 0.0, %v4714
        %v4716 = vpop.f32.mrf.mxu0
        %4717 = vmatprep.mubr.bf16.mxu0 %v697
        %4718 = vmatmul.mubr.bf16.gmra.mxu0 %v696
        %v4719 = vpop.f32.mrf.mxu0
        %v4720 = vadd.f32 0.0, %v4719
        %v4721 = vpop.f32.mrf.mxu0
        %v4722 = vpop.f32.mrf.mxu0
        %v4723 = vadd.f32 0.0, %v4722
        %v4724 = vpop.f32.mrf.mxu0
        %4725 = vmatprep.mubr.bf16.mxu0 %v699
        %4726 = vmatmul.mubr.bf16.gmra.mxu0 %v698
        %v4727 = vpop.f32.mrf.mxu0
        %v4728 = vadd.f32 0.0, %v4727
        %v4729 = vpop.f32.mrf.mxu0
        %v4730 = vpop.f32.mrf.mxu0
        %v4731 = vadd.f32 0.0, %v4730
        %v4732 = vpop.f32.mrf.mxu0
        %4733 = vmatprep.mubr.bf16.mxu0 %v701
        %4734 = vmatmul.mubr.bf16.gmra.mxu0 %v700
        %v4735 = vpop.f32.mrf.mxu0
        %v4736 = vadd.f32 0.0, %v4735
        %v4737 = vpop.f32.mrf.mxu0
        %v4738 = vpop.f32.mrf.mxu0
        %v4739 = vadd.f32 0.0, %v4738
        %v4740 = vpop.f32.mrf.mxu0
        %4741 = vmatprep.mubr.bf16.mxu0 %v703
        %4742 = vmatmul.mubr.bf16.gmra.mxu0 %v702
        %v4743 = vpop.f32.mrf.mxu0
        %v4744 = vadd.f32 0.0, %v4743
        %v4745 = vpop.f32.mrf.mxu0
        %v4746 = vpop.f32.mrf.mxu0
        %v4747 = vadd.f32 0.0, %v4746
        %v4748 = vpop.f32.mrf.mxu0
        %4749 = vmatprep.mubr.bf16.mxu0 %v705
        %4750 = vmatmul.mubr.bf16.gmra.mxu0 %v704
        %v4751 = vpop.f32.mrf.mxu0
        %v4752 = vadd.f32 0.0, %v4751
        %v4753 = vpop.f32.mrf.mxu0
        %v4754 = vpop.f32.mrf.mxu0
        %v4755 = vadd.f32 0.0, %v4754
        %v4756 = vpop.f32.mrf.mxu0
        %4757 = vmatprep.mubr.bf16.mxu0 %v707
        %4758 = vmatmul.mubr.bf16.gmra.mxu0 %v706
        %v4759 = vpop.f32.mrf.mxu0
        %v4760 = vadd.f32 0.0, %v4759
        %v4761 = vpop.f32.mrf.mxu0
        %v4762 = vpop.f32.mrf.mxu0
        %v4763 = vadd.f32 0.0, %v4762
        %v4764 = vpop.f32.mrf.mxu0
        %4765 = vmatprep.mubr.bf16.mxu0 %v709
        %4766 = vmatmul.mubr.bf16.gmra.mxu0 %v708
        %v4767 = vpop.f32.mrf.mxu0
        %v4768 = vadd.f32 0.0, %v4767
        %v4769 = vpop.f32.mrf.mxu0
        %v4770 = vpop.f32.mrf.mxu0
        %v4771 = vadd.f32 0.0, %v4770
        %v4772 = vpop.f32.mrf.mxu0
        %4773 = vmatprep.mubr.bf16.mxu0 %v711
        %4774 = vmatmul.mubr.bf16.gmra.mxu0 %v710
        %v4775 = vpop.f32.mrf.mxu0
        %v4776 = vadd.f32 0.0, %v4775
        %v4777 = vpop.f32.mrf.mxu0
        %v4778 = vpop.f32.mrf.mxu0
        %v4779 = vadd.f32 0.0, %v4778
        %v4780 = vpop.f32.mrf.mxu0
        %4781 = vmatprep.mubr.bf16.mxu0 %v713
        %4782 = vmatmul.mubr.bf16.gmra.mxu0 %v712
        %v4783 = vpop.f32.mrf.mxu0
        %v4784 = vadd.f32 0.0, %v4783
        %v4785 = vpop.f32.mrf.mxu0
        %v4786 = vpop.f32.mrf.mxu0
        %v4787 = vadd.f32 0.0, %v4786
        %v4788 = vpop.f32.mrf.mxu0
        %4789 = vmatprep.mubr.bf16.mxu0 %v715
        %4790 = vmatmul.mubr.bf16.gmra.mxu0 %v714
        %v4791 = vpop.f32.mrf.mxu0
        %v4792 = vadd.f32 0.0, %v4791
        %v4793 = vpop.f32.mrf.mxu0
        %v4794 = vpop.f32.mrf.mxu0
        %v4795 = vadd.f32 0.0, %v4794
        %v4796 = vpop.f32.mrf.mxu0
        %4797 = vmatprep.mubr.bf16.mxu0 %v717
        %4798 = vmatmul.mubr.bf16.gmra.mxu0 %v716
        %v4799 = vpop.f32.mrf.mxu0
        %v4800 = vadd.f32 0.0, %v4799
        %v4801 = vpop.f32.mrf.mxu0
        %v4802 = vpop.f32.mrf.mxu0
        %v4803 = vadd.f32 0.0, %v4802
        %v4804 = vpop.f32.mrf.mxu0
        %4805 = vmatprep.mubr.bf16.mxu0 %v719
        %4806 = vmatmul.mubr.bf16.gmra.mxu0 %v718
        %v4807 = vpop.f32.mrf.mxu0
        %v4808 = vadd.f32 0.0, %v4807
        %v4809 = vpop.f32.mrf.mxu0
        %v4810 = vpop.f32.mrf.mxu0
        %v4811 = vadd.f32 0.0, %v4810
        %v4812 = vpop.f32.mrf.mxu0
        %4813 = vmatprep.mubr.bf16.mxu0 %v721
        %4814 = vmatmul.mubr.bf16.gmra.mxu0 %v720
        %v4815 = vpop.f32.mrf.mxu0
        %v4816 = vadd.f32 0.0, %v4815
        %v4817 = vpop.f32.mrf.mxu0
        %v4818 = vpop.f32.mrf.mxu0
        %v4819 = vadd.f32 0.0, %v4818
        %v4820 = vpop.f32.mrf.mxu0
        %4821 = vmatprep.mubr.bf16.mxu0 %v723
        %4822 = vmatmul.mubr.bf16.gmra.mxu0 %v722
        %v4823 = vpop.f32.mrf.mxu0
        %v4824 = vadd.f32 0.0, %v4823
        %v4825 = vpop.f32.mrf.mxu0
        %v4826 = vpop.f32.mrf.mxu0
        %v4827 = vadd.f32 0.0, %v4826
        %v4828 = vpop.f32.mrf.mxu0
        %4829 = vmatprep.mubr.bf16.mxu0 %v725
        %4830 = vmatmul.mubr.bf16.gmra.mxu0 %v724
        %v4831 = vpop.f32.mrf.mxu0
        %v4832 = vadd.f32 0.0, %v4831
        %v4833 = vpop.f32.mrf.mxu0
        %v4834 = vpop.f32.mrf.mxu0
        %v4835 = vadd.f32 0.0, %v4834
        %v4836 = vpop.f32.mrf.mxu0
        %4837 = vmatprep.mubr.bf16.mxu0 %v727
        %4838 = vmatmul.mubr.bf16.gmra.mxu0 %v726
        %v4839 = vpop.f32.mrf.mxu0
        %v4840 = vadd.f32 0.0, %v4839
        %v4841 = vpop.f32.mrf.mxu0
        %v4842 = vpop.f32.mrf.mxu0
        %v4843 = vadd.f32 0.0, %v4842
        %v4844 = vpop.f32.mrf.mxu0
        %4845 = vmatprep.mubr.bf16.mxu0 %v729
        %4846 = vmatmul.mubr.bf16.gmra.mxu0 %v728
        %v4847 = vpop.f32.mrf.mxu0
        %v4848 = vadd.f32 0.0, %v4847
        %v4849 = vpop.f32.mrf.mxu0
        %v4850 = vpop.f32.mrf.mxu0
        %v4851 = vadd.f32 0.0, %v4850
        %v4852 = vpop.f32.mrf.mxu0
        %4853 = vmatprep.mubr.bf16.mxu0 %v731
        %4854 = vmatmul.mubr.bf16.gmra.mxu0 %v730
        %v4855 = vpop.f32.mrf.mxu0
        %v4856 = vadd.f32 0.0, %v4855
        %v4857 = vpop.f32.mrf.mxu0
        %v4858 = vpop.f32.mrf.mxu0
        %v4859 = vadd.f32 0.0, %v4858
        %v4860 = vpop.f32.mrf.mxu0
        %4861 = vmatprep.mubr.bf16.mxu0 %v733
        %4862 = vmatmul.mubr.bf16.gmra.mxu0 %v732
        %v4863 = vpop.f32.mrf.mxu0
        %v4864 = vadd.f32 0.0, %v4863
        %v4865 = vpop.f32.mrf.mxu0
        %v4866 = vpop.f32.mrf.mxu0
        %v4867 = vadd.f32 0.0, %v4866
        %v4868 = vpop.f32.mrf.mxu0
        %4869 = vmatprep.mubr.bf16.mxu0 %v735
        %4870 = vmatmul.mubr.bf16.gmra.mxu0 %v734
        %v4871 = vpop.f32.mrf.mxu0
        %v4872 = vadd.f32 0.0, %v4871
        %v4873 = vpop.f32.mrf.mxu0
        %v4874 = vpop.f32.mrf.mxu0
        %v4875 = vadd.f32 0.0, %v4874
        %v4876 = vpop.f32.mrf.mxu0
        %4877 = vmatprep.mubr.bf16.mxu0 %v737
        %4878 = vmatmul.mubr.bf16.gmra.mxu0 %v736
        %v4879 = vpop.f32.mrf.mxu0
        %v4880 = vadd.f32 0.0, %v4879
        %v4881 = vpop.f32.mrf.mxu0
        %v4882 = vpop.f32.mrf.mxu0
        %v4883 = vadd.f32 0.0, %v4882
        %v4884 = vpop.f32.mrf.mxu0
        %4885 = vmatprep.mubr.bf16.mxu0 %v739
        %4886 = vmatmul.mubr.bf16.gmra.mxu0 %v738
        %v4887 = vpop.f32.mrf.mxu0
        %v4888 = vadd.f32 0.0, %v4887
        %v4889 = vpop.f32.mrf.mxu0
        %v4890 = vpop.f32.mrf.mxu0
        %v4891 = vadd.f32 0.0, %v4890
        %v4892 = vpop.f32.mrf.mxu0
        %4893 = vmatprep.mubr.bf16.mxu0 %v741
        %4894 = vmatmul.mubr.bf16.gmra.mxu0 %v740
        %v4895 = vpop.f32.mrf.mxu0
        %v4896 = vadd.f32 0.0, %v4895
        %v4897 = vpop.f32.mrf.mxu0
        %v4898 = vpop.f32.mrf.mxu0
        %v4899 = vadd.f32 0.0, %v4898
        %v4900 = vpop.f32.mrf.mxu0
        %4901 = vmatprep.mubr.bf16.mxu0 %v743
        %4902 = vmatmul.mubr.bf16.gmra.mxu0 %v742
        %v4903 = vpop.f32.mrf.mxu0
        %v4904 = vadd.f32 0.0, %v4903
        %v4905 = vpop.f32.mrf.mxu0
        %v4906 = vpop.f32.mrf.mxu0
        %v4907 = vadd.f32 0.0, %v4906
        %v4908 = vpop.f32.mrf.mxu0
        %4909 = vmatprep.mubr.bf16.mxu0 %v745
        %4910 = vmatmul.mubr.bf16.gmra.mxu0 %v744
        %v4911 = vpop.f32.mrf.mxu0
        %v4912 = vadd.f32 0.0, %v4911
        %v4913 = vpop.f32.mrf.mxu0
        %v4914 = vpop.f32.mrf.mxu0
        %v4915 = vadd.f32 0.0, %v4914
        %v4916 = vpop.f32.mrf.mxu0
        %4917 = vmatprep.mubr.bf16.mxu0 %v747
        %4918 = vmatmul.mubr.bf16.gmra.mxu0 %v746
        %v4919 = vpop.f32.mrf.mxu0
        %v4920 = vadd.f32 0.0, %v4919
        %v4921 = vpop.f32.mrf.mxu0
        %v4922 = vpop.f32.mrf.mxu0
        %v4923 = vadd.f32 0.0, %v4922
        %v4924 = vpop.f32.mrf.mxu0
        %4925 = vmatprep.mubr.bf16.mxu0 %v749
        %4926 = vmatmul.mubr.bf16.gmra.mxu0 %v748
        %v4927 = vpop.f32.mrf.mxu0
        %v4928 = vadd.f32 0.0, %v4927
        %v4929 = vpop.f32.mrf.mxu0
        %v4930 = vpop.f32.mrf.mxu0
        %v4931 = vadd.f32 0.0, %v4930
        %v4932 = vpop.f32.mrf.mxu0
        %4933 = vmatprep.mubr.bf16.mxu0 %v751
        %4934 = vmatmul.mubr.bf16.gmra.mxu0 %v750
        %v4935 = vpop.f32.mrf.mxu0
        %v4936 = vadd.f32 0.0, %v4935
        %v4937 = vpop.f32.mrf.mxu0
        %v4938 = vpop.f32.mrf.mxu0
        %v4939 = vadd.f32 0.0, %v4938
        %v4940 = vpop.f32.mrf.mxu0
        %4941 = vdwg.mxu0
        %v4974 = vunpack.c.l.b16 %v4493
        %v4975 = vunpack.c.l.b16 %v4494
        %v4976 = vunpack.c.l.b16 %v4495
        %v4977 = vunpack.c.l.b16 %v4496
        %v4978 = vunpack.c.l.b16 %v4497
        %v4979 = vunpack.c.l.b16 %v4498
        %v4980 = vunpack.c.l.b16 %v4499
        %v4981 = vunpack.c.l.b16 %v4500
        %v4982 = vunpack.c.l.b16 %v4501
        %v4983 = vunpack.c.l.b16 %v4502
        %v4984 = vunpack.c.l.b16 %v4503
        %v4985 = vunpack.c.l.b16 %v4504
        %v4986 = vunpack.c.l.b16 %v4505
        %v4987 = vunpack.c.l.b16 %v4506
        %v4988 = vunpack.c.l.b16 %v4507
        %v4989 = vunpack.c.l.b16 %v4508
        %v4990 = vunpack.c.l.b16 %v4509
        %v4991 = vunpack.c.l.b16 %v4510
        %v4992 = vunpack.c.l.b16 %v4511
        %v4993 = vunpack.c.l.b16 %v4512
        %v4994 = vunpack.c.l.b16 %v4513
        %v4995 = vunpack.c.l.b16 %v4514
        %v4996 = vunpack.c.l.b16 %v4515
        %v4997 = vunpack.c.l.b16 %v4516
        %v4998 = vunpack.c.l.b16 %v4517
        %v4999 = vunpack.c.l.b16 %v4518
        %v5000 = vunpack.c.l.b16 %v4519
        %v5001 = vunpack.c.l.b16 %v4520
        %v5002 = vunpack.c.l.b16 %v4521
        %v5003 = vunpack.c.l.b16 %v4522
        %v5004 = vunpack.c.l.b16 %v4523
        %v5005 = vunpack.c.l.b16 %v4524
        %v5006 = vpack.c.b16 %v4975, %v4974
        %v5007 = vpack.c.b16 %v4977, %v4976
        %v5008 = vpack.c.b16 %v4979, %v4978
        %v5009 = vpack.c.b16 %v4981, %v4980
        %v5010 = vpack.c.b16 %v4983, %v4982
        %v5011 = vpack.c.b16 %v4985, %v4984
        %v5012 = vpack.c.b16 %v4987, %v4986
        %v5013 = vpack.c.b16 %v4989, %v4988
        %v5014 = vpack.c.b16 %v4991, %v4990
        %v5015 = vpack.c.b16 %v4993, %v4992
        %v5016 = vpack.c.b16 %v4995, %v4994
        %v5017 = vpack.c.b16 %v4997, %v4996
        %v5018 = vpack.c.b16 %v4999, %v4998
        %v5019 = vpack.c.b16 %v5001, %v5000
        %v5020 = vpack.c.b16 %v5003, %v5002
        %v5021 = vpack.c.b16 %v5005, %v5004
        %5038 = vmatprep.subr.bf16.mxu0 0
        %5039 = vmatpush1.bf16.msra.mxu0 %v5013
        %5040 = vmatprep.subr.bf16.mxu0 0
        %5041 = vmatpush1.bf16.msra.mxu0 %v5012
        %5042 = vmatprep.subr.bf16.mxu0 0
        %5043 = vmatpush1.bf16.msra.mxu0 %v5011
        %5044 = vmatprep.subr.bf16.mxu0 0
        %5045 = vmatpush1.bf16.msra.mxu0 %v5010
        %5046 = vmatprep.subr.bf16.mxu0 0
        %5047 = vmatpush1.bf16.msra.mxu0 %v5009
        %5048 = vmatprep.subr.bf16.mxu0 0
        %5049 = vmatpush1.bf16.msra.mxu0 %v5008
        %5050 = vmatprep.subr.bf16.mxu0 0
        %5051 = vmatpush1.bf16.msra.mxu0 %v5007
        %5052 = vmatprep.subr.bf16.mxu0 0
        %5053 = vmatpush1.bf16.msra.mxu0 %v5006
        %5054 = vmatprep.subr.bf16.mxu0 0
        %5055 = vmatpush2.bf16.msra.mxu0 %v5021
        %5056 = vmatprep.subr.bf16.mxu0 0
        %5057 = vmatpush2.bf16.msra.mxu0 %v5020
        %5058 = vmatprep.subr.bf16.mxu0 0
        %5059 = vmatpush2.bf16.msra.mxu0 %v5019
        %5060 = vmatprep.subr.bf16.mxu0 0
        %5061 = vmatpush2.bf16.msra.mxu0 %v5018
        %5062 = vmatprep.subr.bf16.mxu0 0
        %5063 = vmatpush2.bf16.msra.mxu0 %v5017
        %5064 = vmatprep.subr.bf16.mxu0 0
        %5065 = vmatpush2.bf16.msra.mxu0 %v5016
        %5066 = vmatprep.subr.bf16.mxu0 0
        %5067 = vmatpush2.bf16.msra.mxu0 %v5015
        %5068 = vmatprep.subr.bf16.mxu0 0
        %5069 = vmatpush2.bf16.msra.mxu0 %v5014
        %5070 = vmatprep.mubr.bf16.mxu0 %v4430
        %5071 = vmatmul.mubr.bf16.gmra.mxu0 %v4429
        %v5072 = vpop.f32.mrf.mxu0
        %v5073 = vadd.f32 %v4688, %v5072
        %v5074 = vpop.f32.mrf.mxu0
        %v5075 = vpop.f32.mrf.mxu0
        %v5076 = vadd.f32 %v4691, %v5075
        %v5077 = vpop.f32.mrf.mxu0
        %5078 = vmatprep.mubr.bf16.mxu0 %v4432
        %5079 = vmatmul.mubr.bf16.gmra.mxu0 %v4431
        %v5080 = vpop.f32.mrf.mxu0
        %v5081 = vadd.f32 %v4696, %v5080
        %v5082 = vpop.f32.mrf.mxu0
        %v5083 = vpop.f32.mrf.mxu0
        %v5084 = vadd.f32 %v4699, %v5083
        %v5085 = vpop.f32.mrf.mxu0
        %5086 = vmatprep.mubr.bf16.mxu0 %v4434
        %5087 = vmatmul.mubr.bf16.gmra.mxu0 %v4433
        %v5088 = vpop.f32.mrf.mxu0
        %v5089 = vadd.f32 %v4704, %v5088
        %v5090 = vpop.f32.mrf.mxu0
        %v5091 = vpop.f32.mrf.mxu0
        %v5092 = vadd.f32 %v4707, %v5091
        %v5093 = vpop.f32.mrf.mxu0
        %5094 = vmatprep.mubr.bf16.mxu0 %v4436
        %5095 = vmatmul.mubr.bf16.gmra.mxu0 %v4435
        %v5096 = vpop.f32.mrf.mxu0
        %v5097 = vadd.f32 %v4712, %v5096
        %v5098 = vpop.f32.mrf.mxu0
        %v5099 = vpop.f32.mrf.mxu0
        %v5100 = vadd.f32 %v4715, %v5099
        %v5101 = vpop.f32.mrf.mxu0
        %5102 = vmatprep.mubr.bf16.mxu0 %v4438
        %5103 = vmatmul.mubr.bf16.gmra.mxu0 %v4437
        %v5104 = vpop.f32.mrf.mxu0
        %v5105 = vadd.f32 %v4720, %v5104
        %v5106 = vpop.f32.mrf.mxu0
        %v5107 = vpop.f32.mrf.mxu0
        %v5108 = vadd.f32 %v4723, %v5107
        %v5109 = vpop.f32.mrf.mxu0
        %5110 = vmatprep.mubr.bf16.mxu0 %v4440
        %5111 = vmatmul.mubr.bf16.gmra.mxu0 %v4439
        %v5112 = vpop.f32.mrf.mxu0
        %v5113 = vadd.f32 %v4728, %v5112
        %v5114 = vpop.f32.mrf.mxu0
        %v5115 = vpop.f32.mrf.mxu0
        %v5116 = vadd.f32 %v4731, %v5115
        %v5117 = vpop.f32.mrf.mxu0
        %5118 = vmatprep.mubr.bf16.mxu0 %v4442
        %5119 = vmatmul.mubr.bf16.gmra.mxu0 %v4441
        %v5120 = vpop.f32.mrf.mxu0
        %v5121 = vadd.f32 %v4736, %v5120
        %v5122 = vpop.f32.mrf.mxu0
        %v5123 = vpop.f32.mrf.mxu0
        %v5124 = vadd.f32 %v4739, %v5123
        %v5125 = vpop.f32.mrf.mxu0
        %5126 = vmatprep.mubr.bf16.mxu0 %v4444
        %5127 = vmatmul.mubr.bf16.gmra.mxu0 %v4443
        %v5128 = vpop.f32.mrf.mxu0
        %v5129 = vadd.f32 %v4744, %v5128
        %v5130 = vpop.f32.mrf.mxu0
        %v5131 = vpop.f32.mrf.mxu0
        %v5132 = vadd.f32 %v4747, %v5131
        %v5133 = vpop.f32.mrf.mxu0
        %5134 = vmatprep.mubr.bf16.mxu0 %v4446
        %5135 = vmatmul.mubr.bf16.gmra.mxu0 %v4445
        %v5136 = vpop.f32.mrf.mxu0
        %v5137 = vadd.f32 %v4752, %v5136
        %v5138 = vpop.f32.mrf.mxu0
        %v5139 = vpop.f32.mrf.mxu0
        %v5140 = vadd.f32 %v4755, %v5139
        %v5141 = vpop.f32.mrf.mxu0
        %5142 = vmatprep.mubr.bf16.mxu0 %v4448
        %5143 = vmatmul.mubr.bf16.gmra.mxu0 %v4447
        %v5144 = vpop.f32.mrf.mxu0
        %v5145 = vadd.f32 %v4760, %v5144
        %v5146 = vpop.f32.mrf.mxu0
        %v5147 = vpop.f32.mrf.mxu0
        %v5148 = vadd.f32 %v4763, %v5147
        %v5149 = vpop.f32.mrf.mxu0
        %5150 = vmatprep.mubr.bf16.mxu0 %v4450
        %5151 = vmatmul.mubr.bf16.gmra.mxu0 %v4449
        %v5152 = vpop.f32.mrf.mxu0
        %v5153 = vadd.f32 %v4768, %v5152
        %v5154 = vpop.f32.mrf.mxu0
        %v5155 = vpop.f32.mrf.mxu0
        %v5156 = vadd.f32 %v4771, %v5155
        %v5157 = vpop.f32.mrf.mxu0
        %5158 = vmatprep.mubr.bf16.mxu0 %v4452
        %5159 = vmatmul.mubr.bf16.gmra.mxu0 %v4451
        %v5160 = vpop.f32.mrf.mxu0
        %v5161 = vadd.f32 %v4776, %v5160
        %v5162 = vpop.f32.mrf.mxu0
        %v5163 = vpop.f32.mrf.mxu0
        %v5164 = vadd.f32 %v4779, %v5163
        %v5165 = vpop.f32.mrf.mxu0
        %5166 = vmatprep.mubr.bf16.mxu0 %v4454
        %5167 = vmatmul.mubr.bf16.gmra.mxu0 %v4453
        %v5168 = vpop.f32.mrf.mxu0
        %v5169 = vadd.f32 %v4784, %v5168
        %v5170 = vpop.f32.mrf.mxu0
        %v5171 = vpop.f32.mrf.mxu0
        %v5172 = vadd.f32 %v4787, %v5171
        %v5173 = vpop.f32.mrf.mxu0
        %5174 = vmatprep.mubr.bf16.mxu0 %v4456
        %5175 = vmatmul.mubr.bf16.gmra.mxu0 %v4455
        %v5176 = vpop.f32.mrf.mxu0
        %v5177 = vadd.f32 %v4792, %v5176
        %v5178 = vpop.f32.mrf.mxu0
        %v5179 = vpop.f32.mrf.mxu0
        %v5180 = vadd.f32 %v4795, %v5179
        %v5181 = vpop.f32.mrf.mxu0
        %5182 = vmatprep.mubr.bf16.mxu0 %v4458
        %5183 = vmatmul.mubr.bf16.gmra.mxu0 %v4457
        %v5184 = vpop.f32.mrf.mxu0
        %v5185 = vadd.f32 %v4800, %v5184
        %v5186 = vpop.f32.mrf.mxu0
        %v5187 = vpop.f32.mrf.mxu0
        %v5188 = vadd.f32 %v4803, %v5187
        %v5189 = vpop.f32.mrf.mxu0
        %5190 = vmatprep.mubr.bf16.mxu0 %v4460
        %5191 = vmatmul.mubr.bf16.gmra.mxu0 %v4459
        %v5192 = vpop.f32.mrf.mxu0
        %v5193 = vadd.f32 %v4808, %v5192
        %v5194 = vpop.f32.mrf.mxu0
        %v5195 = vpop.f32.mrf.mxu0
        %v5196 = vadd.f32 %v4811, %v5195
        %v5197 = vpop.f32.mrf.mxu0
        %5198 = vmatprep.mubr.bf16.mxu0 %v4462
        %5199 = vmatmul.mubr.bf16.gmra.mxu0 %v4461
        %v5200 = vpop.f32.mrf.mxu0
        %v5201 = vadd.f32 %v4816, %v5200
        %v5202 = vpop.f32.mrf.mxu0
        %v5203 = vpop.f32.mrf.mxu0
        %v5204 = vadd.f32 %v4819, %v5203
        %v5205 = vpop.f32.mrf.mxu0
        %5206 = vmatprep.mubr.bf16.mxu0 %v4464
        %5207 = vmatmul.mubr.bf16.gmra.mxu0 %v4463
        %v5208 = vpop.f32.mrf.mxu0
        %v5209 = vadd.f32 %v4824, %v5208
        %v5210 = vpop.f32.mrf.mxu0
        %v5211 = vpop.f32.mrf.mxu0
        %v5212 = vadd.f32 %v4827, %v5211
        %v5213 = vpop.f32.mrf.mxu0
        %5214 = vmatprep.mubr.bf16.mxu0 %v4466
        %5215 = vmatmul.mubr.bf16.gmra.mxu0 %v4465
        %v5216 = vpop.f32.mrf.mxu0
        %v5217 = vadd.f32 %v4832, %v5216
        %v5218 = vpop.f32.mrf.mxu0
        %v5219 = vpop.f32.mrf.mxu0
        %v5220 = vadd.f32 %v4835, %v5219
        %v5221 = vpop.f32.mrf.mxu0
        %5222 = vmatprep.mubr.bf16.mxu0 %v4468
        %5223 = vmatmul.mubr.bf16.gmra.mxu0 %v4467
        %v5224 = vpop.f32.mrf.mxu0
        %v5225 = vadd.f32 %v4840, %v5224
        %v5226 = vpop.f32.mrf.mxu0
        %v5227 = vpop.f32.mrf.mxu0
        %v5228 = vadd.f32 %v4843, %v5227
        %v5229 = vpop.f32.mrf.mxu0
        %5230 = vmatprep.mubr.bf16.mxu0 %v4470
        %5231 = vmatmul.mubr.bf16.gmra.mxu0 %v4469
        %v5232 = vpop.f32.mrf.mxu0
        %v5233 = vadd.f32 %v4848, %v5232
        %v5234 = vpop.f32.mrf.mxu0
        %v5235 = vpop.f32.mrf.mxu0
        %v5236 = vadd.f32 %v4851, %v5235
        %v5237 = vpop.f32.mrf.mxu0
        %5238 = vmatprep.mubr.bf16.mxu0 %v4472
        %5239 = vmatmul.mubr.bf16.gmra.mxu0 %v4471
        %v5240 = vpop.f32.mrf.mxu0
        %v5241 = vadd.f32 %v4856, %v5240
        %v5242 = vpop.f32.mrf.mxu0
        %v5243 = vpop.f32.mrf.mxu0
        %v5244 = vadd.f32 %v4859, %v5243
        %v5245 = vpop.f32.mrf.mxu0
        %5246 = vmatprep.mubr.bf16.mxu0 %v4474
        %5247 = vmatmul.mubr.bf16.gmra.mxu0 %v4473
        %v5248 = vpop.f32.mrf.mxu0
        %v5249 = vadd.f32 %v4864, %v5248
        %v5250 = vpop.f32.mrf.mxu0
        %v5251 = vpop.f32.mrf.mxu0
        %v5252 = vadd.f32 %v4867, %v5251
        %v5253 = vpop.f32.mrf.mxu0
        %5254 = vmatprep.mubr.bf16.mxu0 %v4476
        %5255 = vmatmul.mubr.bf16.gmra.mxu0 %v4475
        %v5256 = vpop.f32.mrf.mxu0
        %v5257 = vadd.f32 %v4872, %v5256
        %v5258 = vpop.f32.mrf.mxu0
        %v5259 = vpop.f32.mrf.mxu0
        %v5260 = vadd.f32 %v4875, %v5259
        %v5261 = vpop.f32.mrf.mxu0
        %5262 = vmatprep.mubr.bf16.mxu0 %v4478
        %5263 = vmatmul.mubr.bf16.gmra.mxu0 %v4477
        %v5264 = vpop.f32.mrf.mxu0
        %v5265 = vadd.f32 %v4880, %v5264
        %v5266 = vpop.f32.mrf.mxu0
        %v5267 = vpop.f32.mrf.mxu0
        %v5268 = vadd.f32 %v4883, %v5267
        %v5269 = vpop.f32.mrf.mxu0
        %5270 = vmatprep.mubr.bf16.mxu0 %v4480
        %5271 = vmatmul.mubr.bf16.gmra.mxu0 %v4479
        %v5272 = vpop.f32.mrf.mxu0
        %v5273 = vadd.f32 %v4888, %v5272
        %v5274 = vpop.f32.mrf.mxu0
        %v5275 = vpop.f32.mrf.mxu0
        %v5276 = vadd.f32 %v4891, %v5275
        %v5277 = vpop.f32.mrf.mxu0
        %5278 = vmatprep.mubr.bf16.mxu0 %v4482
        %5279 = vmatmul.mubr.bf16.gmra.mxu0 %v4481
        %v5280 = vpop.f32.mrf.mxu0
        %v5281 = vadd.f32 %v4896, %v5280
        %v5282 = vpop.f32.mrf.mxu0
        %v5283 = vpop.f32.mrf.mxu0
        %v5284 = vadd.f32 %v4899, %v5283
        %v5285 = vpop.f32.mrf.mxu0
        %5286 = vmatprep.mubr.bf16.mxu0 %v4484
        %5287 = vmatmul.mubr.bf16.gmra.mxu0 %v4483
        %v5288 = vpop.f32.mrf.mxu0
        %v5289 = vadd.f32 %v4904, %v5288
        %v5290 = vpop.f32.mrf.mxu0
        %v5291 = vpop.f32.mrf.mxu0
        %v5292 = vadd.f32 %v4907, %v5291
        %v5293 = vpop.f32.mrf.mxu0
        %5294 = vmatprep.mubr.bf16.mxu0 %v4486
        %5295 = vmatmul.mubr.bf16.gmra.mxu0 %v4485
        %v5296 = vpop.f32.mrf.mxu0
        %v5297 = vadd.f32 %v4912, %v5296
        %v5298 = vpop.f32.mrf.mxu0
        %v5299 = vpop.f32.mrf.mxu0
        %v5300 = vadd.f32 %v4915, %v5299
        %v5301 = vpop.f32.mrf.mxu0
        %5302 = vmatprep.mubr.bf16.mxu0 %v4488
        %5303 = vmatmul.mubr.bf16.gmra.mxu0 %v4487
        %v5304 = vpop.f32.mrf.mxu0
        %v5305 = vadd.f32 %v4920, %v5304
        %v5306 = vpop.f32.mrf.mxu0
        %v5307 = vpop.f32.mrf.mxu0
        %v5308 = vadd.f32 %v4923, %v5307
        %v5309 = vpop.f32.mrf.mxu0
        %5310 = vmatprep.mubr.bf16.mxu0 %v4490
        %5311 = vmatmul.mubr.bf16.gmra.mxu0 %v4489
        %v5312 = vpop.f32.mrf.mxu0
        %v5313 = vadd.f32 %v4928, %v5312
        %v5314 = vpop.f32.mrf.mxu0
        %v5315 = vpop.f32.mrf.mxu0
        %v5316 = vadd.f32 %v4931, %v5315
        %v5317 = vpop.f32.mrf.mxu0
        %5318 = vmatprep.mubr.bf16.mxu0 %v4492
        %5319 = vmatmul.mubr.bf16.gmra.mxu0 %v4491
        %v5320 = vpop.f32.mrf.mxu0
        %v5321 = vadd.f32 %v4936, %v5320
        %v5322 = vpop.f32.mrf.mxu0
        %v5323 = vpop.f32.mrf.mxu0
        %v5324 = vadd.f32 %v4939, %v5323
        %v5325 = vpop.f32.mrf.mxu0
        %5326 = vdwg.mxu0
        %v5327 = vld [vmem:[%s6] sm:$0x1]
        %v5329 = vlaneseq
        %v5330 = vshrl.u32 %v5329, 7
        %v5331 = vsub.s32 0, %v5330
        %v5332 = vrot.slane %v5327, %v5331
        %v5334 = vadd.f32 %v5073, %v5332
        %v5335 = vadd.f32 %v5076, %v5332
        %v5336 = vadd.f32 %v5081, %v5332
        %v5337 = vadd.f32 %v5084, %v5332
        %v5338 = vadd.f32 %v5089, %v5332
        %v5339 = vadd.f32 %v5092, %v5332
        %v5340 = vadd.f32 %v5097, %v5332
        %v5341 = vadd.f32 %v5100, %v5332
        %v5342 = vadd.f32 %v5105, %v5332
        %v5343 = vadd.f32 %v5108, %v5332
        %v5344 = vadd.f32 %v5113, %v5332
        %v5345 = vadd.f32 %v5116, %v5332
        %v5346 = vadd.f32 %v5121, %v5332
        %v5347 = vadd.f32 %v5124, %v5332
        %v5348 = vadd.f32 %v5129, %v5332
        %v5349 = vadd.f32 %v5132, %v5332
        %v5350 = vadd.f32 %v5137, %v5332
        %v5351 = vadd.f32 %v5140, %v5332
        %v5352 = vadd.f32 %v5145, %v5332
        %v5353 = vadd.f32 %v5148, %v5332
        %v5354 = vadd.f32 %v5153, %v5332
        %v5355 = vadd.f32 %v5156, %v5332
        %v5356 = vadd.f32 %v5161, %v5332
        %v5357 = vadd.f32 %v5164, %v5332
        %v5358 = vadd.f32 %v5169, %v5332
        %v5359 = vadd.f32 %v5172, %v5332
        %v5360 = vadd.f32 %v5177, %v5332
        %v5361 = vadd.f32 %v5180, %v5332
        %v5362 = vadd.f32 %v5185, %v5332
        %v5363 = vadd.f32 %v5188, %v5332
        %v5364 = vadd.f32 %v5193, %v5332
        %v5365 = vadd.f32 %v5196, %v5332
        %v5366 = vadd.f32 %v5201, %v5332
        %v5367 = vadd.f32 %v5204, %v5332
        %v5368 = vadd.f32 %v5209, %v5332
        %v5369 = vadd.f32 %v5212, %v5332
        %v5370 = vadd.f32 %v5217, %v5332
        %v5371 = vadd.f32 %v5220, %v5332
        %v5372 = vadd.f32 %v5225, %v5332
        %v5373 = vadd.f32 %v5228, %v5332
        %v5374 = vadd.f32 %v5233, %v5332
        %v5375 = vadd.f32 %v5236, %v5332
        %v5376 = vadd.f32 %v5241, %v5332
        %v5377 = vadd.f32 %v5244, %v5332
        %v5378 = vadd.f32 %v5249, %v5332
        %v5379 = vadd.f32 %v5252, %v5332
        %v5380 = vadd.f32 %v5257, %v5332
        %v5381 = vadd.f32 %v5260, %v5332
        %v5382 = vadd.f32 %v5265, %v5332
        %v5383 = vadd.f32 %v5268, %v5332
        %v5384 = vadd.f32 %v5273, %v5332
        %v5385 = vadd.f32 %v5276, %v5332
        %v5386 = vadd.f32 %v5281, %v5332
        %v5387 = vadd.f32 %v5284, %v5332
        %v5388 = vadd.f32 %v5289, %v5332
        %v5389 = vadd.f32 %v5292, %v5332
        %v5390 = vadd.f32 %v5297, %v5332
        %v5391 = vadd.f32 %v5300, %v5332
        %v5392 = vadd.f32 %v5305, %v5332
        %v5393 = vadd.f32 %v5308, %v5332
        %v5394 = vadd.f32 %v5313, %v5332
        %v5395 = vadd.f32 %v5316, %v5332
        %v5396 = vadd.f32 %v5321, %v5332
        %v5397 = vadd.f32 %v5324, %v5332
        %v5398 = vmax.f32 %v5334, 0.0
        %v5399 = vmax.f32 %v5335, 0.0
        %v5400 = vmax.f32 %v5336, 0.0
        %v5401 = vmax.f32 %v5337, 0.0
        %v5402 = vmax.f32 %v5338, 0.0
        %v5403 = vmax.f32 %v5339, 0.0
        %v5404 = vmax.f32 %v5340, 0.0
        %v5405 = vmax.f32 %v5341, 0.0
        %v5406 = vmax.f32 %v5342, 0.0
        %v5407 = vmax.f32 %v5343, 0.0
        %v5408 = vmax.f32 %v5344, 0.0
        %v5409 = vmax.f32 %v5345, 0.0
        %v5410 = vmax.f32 %v5346, 0.0
        %v5411 = vmax.f32 %v5347, 0.0
        %v5412 = vmax.f32 %v5348, 0.0
        %v5413 = vmax.f32 %v5349, 0.0
        %v5414 = vmax.f32 %v5350, 0.0
        %v5415 = vmax.f32 %v5351, 0.0
        %v5416 = vmax.f32 %v5352, 0.0
        %v5417 = vmax.f32 %v5353, 0.0
        %v5418 = vmax.f32 %v5354, 0.0
        %v5419 = vmax.f32 %v5355, 0.0
        %v5420 = vmax.f32 %v5356, 0.0
        %v5421 = vmax.f32 %v5357, 0.0
        %v5422 = vmax.f32 %v5358, 0.0
        %v5423 = vmax.f32 %v5359, 0.0
        %v5424 = vmax.f32 %v5360, 0.0
        %v5425 = vmax.f32 %v5361, 0.0
        %v5426 = vmax.f32 %v5362, 0.0
        %v5427 = vmax.f32 %v5363, 0.0
        %v5428 = vmax.f32 %v5364, 0.0
        %v5429 = vmax.f32 %v5365, 0.0
        %v5430 = vmax.f32 %v5366, 0.0
        %v5431 = vmax.f32 %v5367, 0.0
        %v5432 = vmax.f32 %v5368, 0.0
        %v5433 = vmax.f32 %v5369, 0.0
        %v5434 = vmax.f32 %v5370, 0.0
        %v5435 = vmax.f32 %v5371, 0.0
        %v5436 = vmax.f32 %v5372, 0.0
        %v5437 = vmax.f32 %v5373, 0.0
        %v5438 = vmax.f32 %v5374, 0.0
        %v5439 = vmax.f32 %v5375, 0.0
        %v5440 = vmax.f32 %v5376, 0.0
        %v5441 = vmax.f32 %v5377, 0.0
        %v5442 = vmax.f32 %v5378, 0.0
        %v5443 = vmax.f32 %v5379, 0.0
        %v5444 = vmax.f32 %v5380, 0.0
        %v5445 = vmax.f32 %v5381, 0.0
        %v5446 = vmax.f32 %v5382, 0.0
        %v5447 = vmax.f32 %v5383, 0.0
        %v5448 = vmax.f32 %v5384, 0.0
        %v5449 = vmax.f32 %v5385, 0.0
        %v5450 = vmax.f32 %v5386, 0.0
        %v5451 = vmax.f32 %v5387, 0.0
        %v5452 = vmax.f32 %v5388, 0.0
        %v5453 = vmax.f32 %v5389, 0.0
        %v5454 = vmax.f32 %v5390, 0.0
        %v5455 = vmax.f32 %v5391, 0.0
        %v5456 = vmax.f32 %v5392, 0.0
        %v5457 = vmax.f32 %v5393, 0.0
        %v5458 = vmax.f32 %v5394, 0.0
        %v5459 = vmax.f32 %v5395, 0.0
        %v5460 = vmax.f32 %v5396, 0.0
        %v5461 = vmax.f32 %v5397, 0.0
        %v5462 = vadd.f32 %v5398, %v5399
        %v5463 = vadd.f32 %v5462, %v5400
        %v5464 = vadd.f32 %v5463, %v5401
        %v5465 = vadd.f32 %v5464, %v5402
        %v5466 = vadd.f32 %v5465, %v5403
        %v5467 = vadd.f32 %v5466, %v5404
        %v5468 = vadd.f32 %v5467, %v5405
        %v5469 = vrot.slane %v5468, 4
        %v5470 = vadd.f32 %v5468, %v5469
        %v5471 = vrot.slane %v5470, 2
        %v5472 = vadd.f32 %v5470, %v5471
        %v5473 = vrot.slane %v5472, 1
        %v5474 = vadd.f32 %v5472, %v5473
        %v5475 = vadd.f32 %v5406, %v5407
        %v5476 = vadd.f32 %v5475, %v5408
        %v5477 = vadd.f32 %v5476, %v5409
        %v5478 = vadd.f32 %v5477, %v5410
        %v5479 = vadd.f32 %v5478, %v5411
        %v5480 = vadd.f32 %v5479, %v5412
        %v5481 = vadd.f32 %v5480, %v5413
        %v5482 = vrot.slane %v5481, 4
        %v5483 = vadd.f32 %v5481, %v5482
        %v5484 = vrot.slane %v5483, 2
        %v5485 = vadd.f32 %v5483, %v5484
        %v5486 = vrot.slane %v5485, 1
        %v5487 = vadd.f32 %v5485, %v5486
        %v5488 = vadd.f32 %v5414, %v5415
        %v5489 = vadd.f32 %v5488, %v5416
        %v5490 = vadd.f32 %v5489, %v5417
        %v5491 = vadd.f32 %v5490, %v5418
        %v5492 = vadd.f32 %v5491, %v5419
        %v5493 = vadd.f32 %v5492, %v5420
        %v5494 = vadd.f32 %v5493, %v5421
        %v5495 = vrot.slane %v5494, 4
        %v5496 = vadd.f32 %v5494, %v5495
        %v5497 = vrot.slane %v5496, 2
        %v5498 = vadd.f32 %v5496, %v5497
        %v5499 = vrot.slane %v5498, 1
        %v5500 = vadd.f32 %v5498, %v5499
        %v5501 = vadd.f32 %v5422, %v5423
        %v5502 = vadd.f32 %v5501, %v5424
        %v5503 = vadd.f32 %v5502, %v5425
        %v5504 = vadd.f32 %v5503, %v5426
        %v5505 = vadd.f32 %v5504, %v5427
        %v5506 = vadd.f32 %v5505, %v5428
        %v5507 = vadd.f32 %v5506, %v5429
        %v5508 = vrot.slane %v5507, 4
        %v5509 = vadd.f32 %v5507, %v5508
        %v5510 = vrot.slane %v5509, 2
        %v5511 = vadd.f32 %v5509, %v5510
        %v5512 = vrot.slane %v5511, 1
        %v5513 = vadd.f32 %v5511, %v5512
        %v5514 = vadd.f32 %v5430, %v5431
        %v5515 = vadd.f32 %v5514, %v5432
        %v5516 = vadd.f32 %v5515, %v5433
        %v5517 = vadd.f32 %v5516, %v5434
        %v5518 = vadd.f32 %v5517, %v5435
        %v5519 = vadd.f32 %v5518, %v5436
        %v5520 = vadd.f32 %v5519, %v5437
        %v5521 = vrot.slane %v5520, 4
        %v5522 = vadd.f32 %v5520, %v5521
        %v5523 = vrot.slane %v5522, 2
        %v5524 = vadd.f32 %v5522, %v5523
        %v5525 = vrot.slane %v5524, 1
        %v5526 = vadd.f32 %v5524, %v5525
        %v5527 = vadd.f32 %v5438, %v5439
        %v5528 = vadd.f32 %v5527, %v5440
        %v5529 = vadd.f32 %v5528, %v5441
        %v5530 = vadd.f32 %v5529, %v5442
        %v5531 = vadd.f32 %v5530, %v5443
        %v5532 = vadd.f32 %v5531, %v5444
        %v5533 = vadd.f32 %v5532, %v5445
        %v5534 = vrot.slane %v5533, 4
        %v5535 = vadd.f32 %v5533, %v5534
        %v5536 = vrot.slane %v5535, 2
        %v5537 = vadd.f32 %v5535, %v5536
        %v5538 = vrot.slane %v5537, 1
        %v5539 = vadd.f32 %v5537, %v5538
        %v5540 = vadd.f32 %v5446, %v5447
        %v5541 = vadd.f32 %v5540, %v5448
        %v5542 = vadd.f32 %v5541, %v5449
        %v5543 = vadd.f32 %v5542, %v5450
        %v5544 = vadd.f32 %v5543, %v5451
        %v5545 = vadd.f32 %v5544, %v5452
        %v5546 = vadd.f32 %v5545, %v5453
        %v5547 = vrot.slane %v5546, 4
        %v5548 = vadd.f32 %v5546, %v5547
        %v5549 = vrot.slane %v5548, 2
        %v5550 = vadd.f32 %v5548, %v5549
        %v5551 = vrot.slane %v5550, 1
        %v5552 = vadd.f32 %v5550, %v5551
        %v5553 = vadd.f32 %v5454, %v5455
        %v5554 = vadd.f32 %v5553, %v5456
        %v5555 = vadd.f32 %v5554, %v5457
        %v5556 = vadd.f32 %v5555, %v5458
        %v5557 = vadd.f32 %v5556, %v5459
        %v5558 = vadd.f32 %v5557, %v5460
        %v5559 = vadd.f32 %v5558, %v5461
        %v5560 = vrot.slane %v5559, 4
        %v5561 = vadd.f32 %v5559, %v5560
        %v5562 = vrot.slane %v5561, 2
        %v5563 = vadd.f32 %v5561, %v5562
        %v5564 = vrot.slane %v5563, 1
        %v5565 = vadd.f32 %v5563, %v5564
        %v5566 = vmul.f32 %v5474, 0.015625
        %v5567 = vmul.f32 %v5487, 0.015625
        %v5568 = vmul.f32 %v5500, 0.015625
        %v5569 = vmul.f32 %v5513, 0.015625
        %v5570 = vmul.f32 %v5526, 0.015625
        %v5571 = vmul.f32 %v5539, 0.015625
        %v5572 = vmul.f32 %v5552, 0.015625
        %v5573 = vmul.f32 %v5565, 0.015625
        %vm5582 = vcmask 1041409
        %v5583 = vsel %vm5582, %v5567, %v5566
        %vm5584 = vcmask 1042434
        %v5585 = vsel %vm5584, %v5568, %v5583
        %vm5586 = vcmask 1043459
        %v5587 = vsel %vm5586, %v5569, %v5585
        %vm5588 = vcmask 1044484
        %v5589 = vsel %vm5588, %v5570, %v5587
        %vm5590 = vcmask 1045509
        %v5591 = vsel %vm5590, %v5571, %v5589
        %vm5592 = vcmask 1046534
        %v5593 = vsel %vm5592, %v5572, %v5591
        %vm5594 = vcmask 1047559
        %v5595 = vsel %vm5594, %v5573, %v5593
        %5597 = vst [vmem:[%s343] sm:$0xff] %v5595
        %s5598 = sand.u32 %s188, 1
        %s5599 = scalar_lea.sflag [#allocation5], %s5598
        %s5600 = sand.u32 %s188, 1
        %s5601 = smul.addr %s5600, 8
        %s5602 = scalar_lea.vmem [#allocation11], %s5601
        // Predicated region
        $region65: #{tpu_custom_call.1} parent=47 // pred_check
          %p5603 = pneg %p198
        $region66: #{tpu_custom_call.1} parent=47 // pred_check_branch
          %5605 = sbr.rel (%p5603) target = $region68
        $region67: #{tpu_custom_call.1} parent=47 // pred_region
          %s5607 = ssub.s32 128, 128
          %5608 = vsyncadd %s5599, %s5607
          %s5609 = smul.addr %s28, 128
          %s5610 = scalar_lea.hbm %s7, %s5609
          %s5612 = sshll.u32 %s5602, 4
          %s5613 = int_to_ptr.vmem [resolvable:$true] %s5612
          %5615 = dma.vmem_to_hbm [thread:$0]  %s5613, 128, %s5610, %s5599
        $region68: #{tpu_custom_call.1} parent=47 // pred_fallthru
          _
      $region48: #{tpu_custom_call.1} parent=5 // pred_fallthru
        _
      %p5616 = scmp.le.s32.totalorder 2, %s23
      // Predicated region
      $region69: #{tpu_custom_call.1} parent=5 // pred_check
        %p5617 = pneg %p5616
      $region70: #{tpu_custom_call.1} parent=5 // pred_check_branch
        %5619 = sbr.rel (%p5617) target = $region72
      $region71: #{tpu_custom_call.1} parent=5 // pred_region
        %s5620 = ssub.s32 %s23, 2
        // Predicated region
        $region73: #{tpu_custom_call.1} parent=71 // pred_check
          %p5621 = pneg %p204
        $region74: #{tpu_custom_call.1} parent=71 // pred_check_branch
          %5623 = sbr.rel (%p5621) target = $region76
        $region75: #{tpu_custom_call.1} parent=71 // pred_region
          %s5624 = sand.u32 %s189, 1
          %s5625 = scalar_lea.sflag [#allocation5], %s5624
          %s5626 = sand.u32 %s189, 1
          %s5627 = smul.addr %s5626, 8
          %s5628 = scalar_lea.vmem [#allocation11], %s5627
          %5629 = dma.done %s5625, 128
        $region76: #{tpu_custom_call.1} parent=71 // pred_fallthru
          _
      $region72: #{tpu_custom_call.1} parent=5 // pred_fallthru
        _
    $region6: #{tpu_custom_call.1} parent=1 // loop_footer
      %s27 = sadd.s32 1, %s23
    $region7: #{tpu_custom_call.1} parent=1 // loop_footer_branch
      %22 = sbr.rel target = $region3
    $region8: #{tpu_custom_call.1} parent=1 // loop_exit
      _
    %5630 = vsyncpa [#allocation4], 1
    %s5631 = scalar_lea.sflag [#allocation4], 1
    %5632 = vsyncpa %s5631, 1
    %5633 = vsyncpa [#allocation7], 1
    %5634 = vsyncpa [#allocation10], 1
    %5635 = vsyncpa [#allocation5], 1
    %s5636 = scalar_lea.sflag [#allocation5], 1
    %5637 = vsyncpa %s5636, 1

</llo_original>
